<compile_context>
chip_gen: v7x
topology: tpu7x:2x2x1
jax: 0.10.0
libtpu: 0.0.40
codegen_flags: <defaults>
</compile_context>

<pallas_src>
import functools

import jax
import jax.numpy as jnp
from jax.experimental import pallas as pl
from jax.experimental.pallas import tpu as pltpu


def _round_up(x, m):
    return (x + m - 1) // m * m


# ---------------------------------------------------------------------------
# Fused BasicBlock kernel.  One grid step == one batch image.
# ---------------------------------------------------------------------------
def _basic_block_kernel(x_ref, w1_ref, b1_ref, w2_ref, b2_ref, ws_ref, bs_ref,
                        o_ref, mid_ref, *, ho, wo, stride, cin, cpad):
    rows = ho * wo

    # ---- conv1 (3x3, stride) + bn1 (scale folded into w1) + relu -----------
    acc1 = jnp.zeros((rows, cpad), jnp.float32)
    for kh in range(3):
        for kw in range(3):
            p = (kh % stride) * stride + (kw % stride)      # polyphase plane
            oh, ow = kh // stride, kw // stride             # offset in plane
            win = x_ref[p, oh:oh + ho, ow:ow + wo, :]       # (ho, wo, cin) bf16
            acc1 += jnp.dot(win.reshape(rows, cin), w1_ref[kh * 3 + kw],
                            preferred_element_type=jnp.float32)
    out1 = jnp.maximum(acc1 + b1_ref[...], 0.0)             # (rows, cpad) f32

    # ---- stage conv1 output, spatially padded, in VMEM (no HBM round trip) -
    mid_ref[...] = jnp.zeros_like(mid_ref)
    mid_ref[1:1 + ho, 1:1 + wo, :] = out1.reshape(ho, wo, cpad)

    # ---- conv2 (3x3, stride 1) + bn2 (scale folded into w2) ----------------
    acc2 = jnp.zeros((rows, cpad), jnp.float32)
    for kh in range(3):
        for kw in range(3):
            win = mid_ref[kh:kh + ho, kw:kw + wo, :]        # (ho, wo, cpad) f32
            acc2 += jnp.dot(win.reshape(rows, cpad).astype(jnp.bfloat16),
                            w2_ref[kh * 3 + kw],
                            preferred_element_type=jnp.float32)
    acc2 = acc2 + b2_ref[...]

    # ---- fused shortcut (identity or 1x1 projection + bn), add, relu -------
    sp = 1 % stride                        # polyphase plane holding x[s*i, s*j]
    so = (1 - sp) // stride
    xs = x_ref[sp * stride + sp, so:so + ho, so:so + wo, :].reshape(rows, cin)
    sc = jnp.dot(xs, ws_ref[...], preferred_element_type=jnp.float32) + bs_ref[...]

    o_ref[0] = jnp.maximum(acc2 + sc, 0.0).astype(o_ref.dtype)


# ---------------------------------------------------------------------------
# Wrapper-side parameter preparation (one-time, cheap).
# ---------------------------------------------------------------------------
def _fold_bn(bn, eps=1e-5):
    scale = bn["gamma"] / jnp.sqrt(bn["var"] + eps)
    bias = bn["beta"] - bn["mean"] * scale
    return scale, bias


def _conv3x3_to_mat(w, scale, cin_pad, cout_pad):
    """(Cout, Cin, 3, 3) -> (9, cin_pad, cout_pad) bf16 with BN scale folded."""
    cout, cin = w.shape[0], w.shape[1]
    m = jnp.transpose(w, (2, 3, 1, 0)).reshape(9, cin, cout) * scale
    return jnp.pad(m, ((0, 0), (0, cin_pad - cin),
                       (0, cout_pad - cout))).astype(jnp.bfloat16)


def _pad_bias(b, cpad):
    return jnp.pad(b, (0, cpad - b.shape[0])).reshape(1, cpad).astype(jnp.float32)


def _polyphase(x_nhwc, stride, ho, wo):
    """Spatially pad by 1 and split into stride*stride phase planes, each padded
    to (ho+2, wo+2), so every conv tap becomes a contiguous static slice."""
    n, _, _, c = x_nhwc.shape
    xp = jnp.pad(x_nhwc, ((0, 0), (1, 1), (1, 1), (0, 0)))
    phases = []
    for ph in range(stride):
        for pw in range(stride):
            p = xp[:, ph::stride, pw::stride, :]
            p = jnp.pad(p, ((0, 0), (0, ho + 2 - p.shape[1]),
                            (0, wo + 2 - p.shape[2]), (0, 0)))
            phases.append(p)
    s2 = stride * stride
    return jnp.stack(phases, axis=1).reshape(n * s2, ho + 2, wo + 2, c)


def basic_block_forward(x_nchw, params, stride=1, option="B"):
    """Pallas implementation of BasicBlock.forward (eval-mode BN, option 'B')."""
    if option != "B":
        raise NotImplementedError("only option 'B' / identity shortcut")

    x = jnp.transpose(x_nchw, (0, 2, 3, 1)).astype(jnp.bfloat16)   # NCHW -> NHWC
    n, h, w, cin = x.shape
    planes = params["w1"].shape[0]
    ho = (h - 1) // stride + 1
    wo = (w - 1) // stride + 1
    rows = ho * wo
    cpad = _round_up(planes, 128)          # lane-dense output channels
    s2 = stride * stride

    # Fold eval-mode BN into the conv weights / per-channel biases.
    sc1, bi1 = _fold_bn(params["bn1"])
    sc2, bi2 = _fold_bn(params["bn2"])
    w1 = _conv3x3_to_mat(params["w1"], sc1, cin, cpad)       # (9, cin,  cpad)
    w2 = _conv3x3_to_mat(params["w2"], sc2, cpad, cpad)      # (9, cpad, cpad)
    b1p, b2p = _pad_bias(bi1, cpad), _pad_bias(bi2, cpad)

    if stride != 1 or cin != planes:       # option 'B': 1x1 projection + BN
        scs, bis = _fold_bn(params["bns"])
        ws = params["ws"].reshape(planes, cin).T * scs       # (cin, planes)
    else:                                   # identity shortcut as a 1x1 "conv"
        ws = jnp.eye(cin, dtype=jnp.float32)
        bis = jnp.zeros((planes,), jnp.float32)
    wsp = jnp.pad(ws, ((0, 0), (0, cpad - planes))).astype(jnp.bfloat16)
    bsp = _pad_bias(bis, cpad)

    xph = _polyphase(x, stride, ho, wo)     # (n*s2, ho+2, wo+2, cin) bf16

    kern = functools.partial(_basic_block_kernel, ho=ho, wo=wo, stride=stride,
                             cin=cin, cpad=cpad)
    flops = 2 * n * rows * (9 * cin + 9 * cpad + cin) * cpad
    bytes_accessed = (xph.size * 2 + (w1.size + w2.size + wsp.size) * 2
                      + (b1p.size + b2p.size + bsp.size) * 4
                      + n * rows * cpad * 4)

    out = pl.pallas_call(
        kern,
        out_shape=jax.ShapeDtypeStruct((n, rows, cpad), jnp.float32),
        grid=(n,),
        in_specs=[
            pl.BlockSpec((s2, ho + 2, wo + 2, cin), lambda i: (i, 0, 0, 0)),
            pl.BlockSpec((9, cin, cpad), lambda i: (0, 0, 0)),
            pl.BlockSpec((1, cpad), lambda i: (0, 0)),
            pl.BlockSpec((9, cpad, cpad), lambda i: (0, 0, 0)),
            pl.BlockSpec((1, cpad), lambda i: (0, 0)),
            pl.BlockSpec((cin, cpad), lambda i: (0, 0)),
            pl.BlockSpec((1, cpad), lambda i: (0, 0)),
        ],
        out_specs=pl.BlockSpec((1, rows, cpad), lambda i: (i, 0, 0)),
        scratch_shapes=[pltpu.VMEM((ho + 2, wo + 2, cpad), jnp.float32)],
        compiler_params=pltpu.CompilerParams(
            dimension_semantics=("parallel",)),
        cost_estimate=pl.CostEstimate(flops=int(flops), transcendentals=0,
                                      bytes_accessed=int(bytes_accessed)),
    )(xph, w1, b1p, w2, b2p, wsp, bsp)

    out = out[:, :, :planes].reshape(n, ho, wo, planes)
    return jnp.transpose(out, (0, 3, 1, 2)).astype(x_nchw.dtype)   # -> NCHW


# ---------------------------------------------------------------------------
# Pure-JAX reference (lax.conv) for correctness check
# ---------------------------------------------------------------------------
def _ref_bn(x, bn, eps=1e-5):
    g, b, m, v = bn["gamma"], bn["beta"], bn["mean"], bn["var"]
    return ((x - m[None, :, None, None]) / jnp.sqrt(v[None, :, None, None] + eps)
            * g[None, :, None, None] + b[None, :, None, None])


def _ref_conv(x, w, stride, pad):
    return jax.lax.conv_general_dilated(
        x, w, window_strides=(stride, stride),
        padding=((pad, pad), (pad, pad)),
        dimension_numbers=("NCHW", "OIHW", "NCHW"))


def ref_forward(x, params, stride):
    in_planes = x.shape[1]
    planes = params["w1"].shape[0]
    out = jax.nn.relu(_ref_bn(_ref_conv(x, params["w1"], stride, 1), params["bn1"]))
    out = _ref_bn(_ref_conv(out, params["w2"], 1, 1), params["bn2"])
    if stride != 1 or in_planes != planes:
        sc = _ref_bn(_ref_conv(x, params["ws"], stride, 0), params["bns"])
    else:
        sc = x
    return jax.nn.relu(out + sc)


# ---------------------------------------------------------------------------
if __name__ == "__main__":
    in_planes, planes, stride = 4, 8, 2   # triggers option 'B' projection shortcut
    N, H, W = 2, 16, 16

    key = jax.random.PRNGKey(0)
    ks = jax.random.split(key, 16)

    def bn_params(k):
        k1, k2, k3, k4 = jax.random.split(k, 4)
        return {
            "gamma": 1.0 + 0.1 * jax.random.normal(k1, (planes,), jnp.float32),
            "beta": 0.1 * jax.random.normal(k2, (planes,), jnp.float32),
            "mean": 0.1 * jax.random.normal(k3, (planes,), jnp.float32),
            "var": 1.0 + 0.1 * jnp.abs(jax.random.normal(k4, (planes,), jnp.float32)),
        }

    params = {
        "w1": 0.1 * jax.random.normal(ks[0], (planes, in_planes, 3, 3), jnp.float32),
        "w2": 0.1 * jax.random.normal(ks[1], (planes, planes, 3, 3), jnp.float32),
        "ws": 0.1 * jax.random.normal(ks[2], (planes, in_planes, 1, 1), jnp.float32),
        "bn1": bn_params(ks[3]),
        "bn2": bn_params(ks[4]),
        "bns": bn_params(ks[5]),
    }

    x = jax.random.normal(ks[6], (N, in_planes, H, W), jnp.float32)

    out = basic_block_forward(x, params, stride=stride, option="B")
    out = jax.block_until_ready(out)

    ref = jax.block_until_ready(ref_forward(x, params, stride))
    assert out.shape == ref.shape, (out.shape, ref.shape)
    err = float(jnp.max(jnp.abs(out - ref)))
    # bf16 MXU matmuls with f32 accumulation vs. f32 reference -> bf16-level tol.
    assert jnp.allclose(out, ref, atol=5e-2, rtol=5e-2), err

    print("KERNEL_OK")
</pallas_src>

<mosaic_0001>
module attributes {stable_mosaic.version = 11 : i64} {
  func.func @_basic_block_kernel(%arg0: i32, %arg1: memref<4x10x10x4xbf16, #tpu.memory_space<vmem>>, %arg2: memref<9x4x128xbf16, #tpu.memory_space<vmem>>, %arg3: memref<1x128xf32, #tpu.memory_space<vmem>>, %arg4: memref<9x128x128xbf16, #tpu.memory_space<vmem>>, %arg5: memref<1x128xf32, #tpu.memory_space<vmem>>, %arg6: memref<4x128xbf16, #tpu.memory_space<vmem>>, %arg7: memref<1x128xf32, #tpu.memory_space<vmem>>, %arg8: memref<1x64x128xf32, #tpu.memory_space<vmem>>, %arg9: memref<10x10x128xf32, #tpu.memory_space<vmem>>) attributes {dimension_semantics = [#tpu.dimension_semantics<parallel>], iteration_bounds = array<i64: 2>, scalar_prefetch = 0 : i64, scratch_operands = 1 : i64, tpu.core_type = #tpu.core_type<tc>, window_params = [{transform_indices = @transform_0, window_bounds = array<i64: 4, 10, 10, 4>}, {pipeline_mode = #tpu.pipeline_mode<synchronous>, transform_indices = @transform_1, window_bounds = array<i64: 9, 4, 128>}, {pipeline_mode = #tpu.pipeline_mode<synchronous>, transform_indices = @transform_2, window_bounds = array<i64: 1, 128>}, {pipeline_mode = #tpu.pipeline_mode<synchronous>, transform_indices = @transform_3, window_bounds = array<i64: 9, 128, 128>}, {pipeline_mode = #tpu.pipeline_mode<synchronous>, transform_indices = @transform_4, window_bounds = array<i64: 1, 128>}, {pipeline_mode = #tpu.pipeline_mode<synchronous>, transform_indices = @transform_5, window_bounds = array<i64: 4, 128>}, {pipeline_mode = #tpu.pipeline_mode<synchronous>, transform_indices = @transform_6, window_bounds = array<i64: 1, 128>}, {transform_indices = @transform_7, window_bounds = array<i64: 1, 64, 128>}]} {
    %cst = arith.constant 0.000000e+00 : f32
    %0 = vector.broadcast %cst : f32 to vector<64x128xf32>
    %c0 = arith.constant 0 : index
    %c0_0 = arith.constant 0 : index
    %c0_1 = arith.constant 0 : index
    %c0_2 = arith.constant 0 : index
    %1 = vector.load %arg1[%c0, %c0_0, %c0_1, %c0_2] : memref<4x10x10x4xbf16, #tpu.memory_space<vmem>>, vector<1x8x8x4xbf16>
    %2 = vector.shape_cast %1 : vector<1x8x8x4xbf16> to vector<8x8x4xbf16>
    %3 = vector.shape_cast %2 : vector<8x8x4xbf16> to vector<64x4xbf16>
    %c0_3 = arith.constant 0 : index
    %c0_4 = arith.constant 0 : index
    %c0_5 = arith.constant 0 : index
    %4 = vector.load %arg2[%c0_3, %c0_4, %c0_5] : memref<9x4x128xbf16, #tpu.memory_space<vmem>>, vector<1x4x128xbf16>
    %5 = vector.shape_cast %4 : vector<1x4x128xbf16> to vector<4x128xbf16>
    %cst_6 = arith.constant dense<0.000000e+00> : vector<64x128xf32>
    %6 = tpu.matmul %3, %5, %cst_6 {dimension_numbers = #tpu.dot_dimension_numbers<[1], [0], [0], [1], [0, 0, 1, 1], [], []>} : vector<64x4xbf16>, vector<4x128xbf16>, vector<64x128xf32> -> vector<64x128xf32>
    %7 = arith.addf %0, %6 : vector<64x128xf32>
    %c1 = arith.constant 1 : index
    %c0_7 = arith.constant 0 : index
    %c0_8 = arith.constant 0 : index
    %c0_9 = arith.constant 0 : index
    %8 = vector.load %arg1[%c1, %c0_7, %c0_8, %c0_9] : memref<4x10x10x4xbf16, #tpu.memory_space<vmem>>, vector<1x8x8x4xbf16>
    %9 = vector.shape_cast %8 : vector<1x8x8x4xbf16> to vector<8x8x4xbf16>
    %10 = vector.shape_cast %9 : vector<8x8x4xbf16> to vector<64x4xbf16>
    %c1_10 = arith.constant 1 : index
    %c0_11 = arith.constant 0 : index
    %c0_12 = arith.constant 0 : index
    %11 = vector.load %arg2[%c1_10, %c0_11, %c0_12] : memref<9x4x128xbf16, #tpu.memory_space<vmem>>, vector<1x4x128xbf16>
    %12 = vector.shape_cast %11 : vector<1x4x128xbf16> to vector<4x128xbf16>
    %cst_13 = arith.constant dense<0.000000e+00> : vector<64x128xf32>
    %13 = tpu.matmul %10, %12, %cst_13 {dimension_numbers = #tpu.dot_dimension_numbers<[1], [0], [0], [1], [0, 0, 1, 1], [], []>} : vector<64x4xbf16>, vector<4x128xbf16>, vector<64x128xf32> -> vector<64x128xf32>
    %14 = arith.addf %7, %13 : vector<64x128xf32>
    %c0_14 = arith.constant 0 : index
    %c0_15 = arith.constant 0 : index
    %c1_16 = arith.constant 1 : index
    %c0_17 = arith.constant 0 : index
    %15 = vector.load %arg1[%c0_14, %c0_15, %c1_16, %c0_17] : memref<4x10x10x4xbf16, #tpu.memory_space<vmem>>, vector<1x8x8x4xbf16>
    %16 = vector.shape_cast %15 : vector<1x8x8x4xbf16> to vector<8x8x4xbf16>
    %17 = vector.shape_cast %16 : vector<8x8x4xbf16> to vector<64x4xbf16>
    %c2 = arith.constant 2 : index
    %c0_18 = arith.constant 0 : index
    %c0_19 = arith.constant 0 : index
    %18 = vector.load %arg2[%c2, %c0_18, %c0_19] : memref<9x4x128xbf16, #tpu.memory_space<vmem>>, vector<1x4x128xbf16>
    %19 = vector.shape_cast %18 : vector<1x4x128xbf16> to vector<4x128xbf16>
    %cst_20 = arith.constant dense<0.000000e+00> : vector<64x128xf32>
    %20 = tpu.matmul %17, %19, %cst_20 {dimension_numbers = #tpu.dot_dimension_numbers<[1], [0], [0], [1], [0, 0, 1, 1], [], []>} : vector<64x4xbf16>, vector<4x128xbf16>, vector<64x128xf32> -> vector<64x128xf32>
    %21 = arith.addf %14, %20 : vector<64x128xf32>
    %c2_21 = arith.constant 2 : index
    %c0_22 = arith.constant 0 : index
    %c0_23 = arith.constant 0 : index
    %c0_24 = arith.constant 0 : index
    %22 = vector.load %arg1[%c2_21, %c0_22, %c0_23, %c0_24] : memref<4x10x10x4xbf16, #tpu.memory_space<vmem>>, vector<1x8x8x4xbf16>
    %23 = vector.shape_cast %22 : vector<1x8x8x4xbf16> to vector<8x8x4xbf16>
    %24 = vector.shape_cast %23 : vector<8x8x4xbf16> to vector<64x4xbf16>
    %c3 = arith.constant 3 : index
    %c0_25 = arith.constant 0 : index
    %c0_26 = arith.constant 0 : index
    %25 = vector.load %arg2[%c3, %c0_25, %c0_26] : memref<9x4x128xbf16, #tpu.memory_space<vmem>>, vector<1x4x128xbf16>
    %26 = vector.shape_cast %25 : vector<1x4x128xbf16> to vector<4x128xbf16>
    %cst_27 = arith.constant dense<0.000000e+00> : vector<64x128xf32>
    %27 = tpu.matmul %24, %26, %cst_27 {dimension_numbers = #tpu.dot_dimension_numbers<[1], [0], [0], [1], [0, 0, 1, 1], [], []>} : vector<64x4xbf16>, vector<4x128xbf16>, vector<64x128xf32> -> vector<64x128xf32>
    %28 = arith.addf %21, %27 : vector<64x128xf32>
    %c3_28 = arith.constant 3 : index
    %c0_29 = arith.constant 0 : index
    %c0_30 = arith.constant 0 : index
    %c0_31 = arith.constant 0 : index
    %29 = vector.load %arg1[%c3_28, %c0_29, %c0_30, %c0_31] : memref<4x10x10x4xbf16, #tpu.memory_space<vmem>>, vector<1x8x8x4xbf16>
    %30 = vector.shape_cast %29 : vector<1x8x8x4xbf16> to vector<8x8x4xbf16>
    %31 = vector.shape_cast %30 : vector<8x8x4xbf16> to vector<64x4xbf16>
    %c4 = arith.constant 4 : index
    %c0_32 = arith.constant 0 : index
    %c0_33 = arith.constant 0 : index
    %32 = vector.load %arg2[%c4, %c0_32, %c0_33] : memref<9x4x128xbf16, #tpu.memory_space<vmem>>, vector<1x4x128xbf16>
    %33 = vector.shape_cast %32 : vector<1x4x128xbf16> to vector<4x128xbf16>
    %cst_34 = arith.constant dense<0.000000e+00> : vector<64x128xf32>
    %34 = tpu.matmul %31, %33, %cst_34 {dimension_numbers = #tpu.dot_dimension_numbers<[1], [0], [0], [1], [0, 0, 1, 1], [], []>} : vector<64x4xbf16>, vector<4x128xbf16>, vector<64x128xf32> -> vector<64x128xf32>
    %35 = arith.addf %28, %34 : vector<64x128xf32>
    %c2_35 = arith.constant 2 : index
    %c0_36 = arith.constant 0 : index
    %c1_37 = arith.constant 1 : index
    %c0_38 = arith.constant 0 : index
    %36 = vector.load %arg1[%c2_35, %c0_36, %c1_37, %c0_38] : memref<4x10x10x4xbf16, #tpu.memory_space<vmem>>, vector<1x8x8x4xbf16>
    %37 = vector.shape_cast %36 : vector<1x8x8x4xbf16> to vector<8x8x4xbf16>
    %38 = vector.shape_cast %37 : vector<8x8x4xbf16> to vector<64x4xbf16>
    %c5 = arith.constant 5 : index
    %c0_39 = arith.constant 0 : index
    %c0_40 = arith.constant 0 : index
    %39 = vector.load %arg2[%c5, %c0_39, %c0_40] : memref<9x4x128xbf16, #tpu.memory_space<vmem>>, vector<1x4x128xbf16>
    %40 = vector.shape_cast %39 : vector<1x4x128xbf16> to vector<4x128xbf16>
    %cst_41 = arith.constant dense<0.000000e+00> : vector<64x128xf32>
    %41 = tpu.matmul %38, %40, %cst_41 {dimension_numbers = #tpu.dot_dimension_numbers<[1], [0], [0], [1], [0, 0, 1, 1], [], []>} : vector<64x4xbf16>, vector<4x128xbf16>, vector<64x128xf32> -> vector<64x128xf32>
    %42 = arith.addf %35, %41 : vector<64x128xf32>
    %c0_42 = arith.constant 0 : index
    %c1_43 = arith.constant 1 : index
    %c0_44 = arith.constant 0 : index
    %c0_45 = arith.constant 0 : index
    %43 = vector.load %arg1[%c0_42, %c1_43, %c0_44, %c0_45] : memref<4x10x10x4xbf16, #tpu.memory_space<vmem>>, vector<1x8x8x4xbf16>
    %44 = vector.shape_cast %43 : vector<1x8x8x4xbf16> to vector<8x8x4xbf16>
    %45 = vector.shape_cast %44 : vector<8x8x4xbf16> to vector<64x4xbf16>
    %c6 = arith.constant 6 : index
    %c0_46 = arith.constant 0 : index
    %c0_47 = arith.constant 0 : index
    %46 = vector.load %arg2[%c6, %c0_46, %c0_47] : memref<9x4x128xbf16, #tpu.memory_space<vmem>>, vector<1x4x128xbf16>
    %47 = vector.shape_cast %46 : vector<1x4x128xbf16> to vector<4x128xbf16>
    %cst_48 = arith.constant dense<0.000000e+00> : vector<64x128xf32>
    %48 = tpu.matmul %45, %47, %cst_48 {dimension_numbers = #tpu.dot_dimension_numbers<[1], [0], [0], [1], [0, 0, 1, 1], [], []>} : vector<64x4xbf16>, vector<4x128xbf16>, vector<64x128xf32> -> vector<64x128xf32>
    %49 = arith.addf %42, %48 : vector<64x128xf32>
    %c1_49 = arith.constant 1 : index
    %c1_50 = arith.constant 1 : index
    %c0_51 = arith.constant 0 : index
    %c0_52 = arith.constant 0 : index
    %50 = vector.load %arg1[%c1_49, %c1_50, %c0_51, %c0_52] : memref<4x10x10x4xbf16, #tpu.memory_space<vmem>>, vector<1x8x8x4xbf16>
    %51 = vector.shape_cast %50 : vector<1x8x8x4xbf16> to vector<8x8x4xbf16>
    %52 = vector.shape_cast %51 : vector<8x8x4xbf16> to vector<64x4xbf16>
    %c7 = arith.constant 7 : index
    %c0_53 = arith.constant 0 : index
    %c0_54 = arith.constant 0 : index
    %53 = vector.load %arg2[%c7, %c0_53, %c0_54] : memref<9x4x128xbf16, #tpu.memory_space<vmem>>, vector<1x4x128xbf16>
    %54 = vector.shape_cast %53 : vector<1x4x128xbf16> to vector<4x128xbf16>
    %cst_55 = arith.constant dense<0.000000e+00> : vector<64x128xf32>
    %55 = tpu.matmul %52, %54, %cst_55 {dimension_numbers = #tpu.dot_dimension_numbers<[1], [0], [0], [1], [0, 0, 1, 1], [], []>} : vector<64x4xbf16>, vector<4x128xbf16>, vector<64x128xf32> -> vector<64x128xf32>
    %56 = arith.addf %49, %55 : vector<64x128xf32>
    %c0_56 = arith.constant 0 : index
    %c1_57 = arith.constant 1 : index
    %c1_58 = arith.constant 1 : index
    %c0_59 = arith.constant 0 : index
    %57 = vector.load %arg1[%c0_56, %c1_57, %c1_58, %c0_59] : memref<4x10x10x4xbf16, #tpu.memory_space<vmem>>, vector<1x8x8x4xbf16>
    %58 = vector.shape_cast %57 : vector<1x8x8x4xbf16> to vector<8x8x4xbf16>
    %59 = vector.shape_cast %58 : vector<8x8x4xbf16> to vector<64x4xbf16>
    %c8 = arith.constant 8 : index
    %c0_60 = arith.constant 0 : index
    %c0_61 = arith.constant 0 : index
    %60 = vector.load %arg2[%c8, %c0_60, %c0_61] : memref<9x4x128xbf16, #tpu.memory_space<vmem>>, vector<1x4x128xbf16>
    %61 = vector.shape_cast %60 : vector<1x4x128xbf16> to vector<4x128xbf16>
    %cst_62 = arith.constant dense<0.000000e+00> : vector<64x128xf32>
    %62 = tpu.matmul %59, %61, %cst_62 {dimension_numbers = #tpu.dot_dimension_numbers<[1], [0], [0], [1], [0, 0, 1, 1], [], []>} : vector<64x4xbf16>, vector<4x128xbf16>, vector<64x128xf32> -> vector<64x128xf32>
    %63 = arith.addf %56, %62 : vector<64x128xf32>
    %c0_63 = arith.constant 0 : index
    %c0_64 = arith.constant 0 : index
    %64 = vector.load %arg3[%c0_63, %c0_64] : memref<1x128xf32, #tpu.memory_space<vmem>>, vector<1x128xf32>
    %65 = vector.broadcast %64 : vector<1x128xf32> to vector<64x128xf32>
    %66 = arith.addf %63, %65 : vector<64x128xf32>
    %cst_65 = arith.constant 0.000000e+00 : f32
    %67 = vector.broadcast %cst_65 : f32 to vector<64x128xf32>
    %68 = arith.maximumf %66, %67 : vector<64x128xf32>
    %cst_66 = arith.constant 0.000000e+00 : f32
    %69 = vector.broadcast %cst_66 : f32 to vector<10x10x128xf32>
    %c0_67 = arith.constant 0 : index
    %c0_68 = arith.constant 0 : index
    %c0_69 = arith.constant 0 : index
    %70 = vector.load %arg9[%c0_67, %c0_68, %c0_69] : memref<10x10x128xf32, #tpu.memory_space<vmem>>, vector<10x10x128xf32>
    tpu.vector_store %arg9[%c0_67, %c0_68, %c0_69], %69 {strides = array<i32>} : memref<10x10x128xf32, #tpu.memory_space<vmem>>, vector<10x10x128xf32>,
    %71 = vector.shape_cast %68 : vector<64x128xf32> to vector<8x8x128xf32>
    %c1_70 = arith.constant 1 : index
    %c1_71 = arith.constant 1 : index
    %c0_72 = arith.constant 0 : index
    %72 = vector.load %arg9[%c1_70, %c1_71, %c0_72] : memref<10x10x128xf32, #tpu.memory_space<vmem>>, vector<8x8x128xf32>
    tpu.vector_store %arg9[%c1_70, %c1_71, %c0_72], %71 {strides = array<i32>} : memref<10x10x128xf32, #tpu.memory_space<vmem>>, vector<8x8x128xf32>,
    %cst_73 = arith.constant 0.000000e+00 : f32
    %73 = vector.broadcast %cst_73 : f32 to vector<64x128xf32>
    %c0_74 = arith.constant 0 : index
    %c0_75 = arith.constant 0 : index
    %c0_76 = arith.constant 0 : index
    %74 = vector.load %arg9[%c0_74, %c0_75, %c0_76] : memref<10x10x128xf32, #tpu.memory_space<vmem>>, vector<8x8x128xf32>
    %75 = vector.shape_cast %74 : vector<8x8x128xf32> to vector<64x128xf32>
    %76 = arith.truncf %75 : vector<64x128xf32> to vector<64x128xbf16>
    %c0_77 = arith.constant 0 : index
    %c0_78 = arith.constant 0 : index
    %c0_79 = arith.constant 0 : index
    %77 = vector.load %arg4[%c0_77, %c0_78, %c0_79] : memref<9x128x128xbf16, #tpu.memory_space<vmem>>, vector<1x128x128xbf16>
    %78 = vector.shape_cast %77 : vector<1x128x128xbf16> to vector<128x128xbf16>
    %cst_80 = arith.constant dense<0.000000e+00> : vector<64x128xf32>
    %79 = tpu.matmul %76, %78, %cst_80 {dimension_numbers = #tpu.dot_dimension_numbers<[1], [0], [0], [1], [0, 0, 1, 1], [], []>} : vector<64x128xbf16>, vector<128x128xbf16>, vector<64x128xf32> -> vector<64x128xf32>
    %80 = arith.addf %73, %79 : vector<64x128xf32>
    %c0_81 = arith.constant 0 : index
    %c1_82 = arith.constant 1 : index
    %c0_83 = arith.constant 0 : index
    %81 = vector.load %arg9[%c0_81, %c1_82, %c0_83] : memref<10x10x128xf32, #tpu.memory_space<vmem>>, vector<8x8x128xf32>
    %82 = vector.shape_cast %81 : vector<8x8x128xf32> to vector<64x128xf32>
    %83 = arith.truncf %82 : vector<64x128xf32> to vector<64x128xbf16>
    %c1_84 = arith.constant 1 : index
    %c0_85 = arith.constant 0 : index
    %c0_86 = arith.constant 0 : index
    %84 = vector.load %arg4[%c1_84, %c0_85, %c0_86] : memref<9x128x128xbf16, #tpu.memory_space<vmem>>, vector<1x128x128xbf16>
    %85 = vector.shape_cast %84 : vector<1x128x128xbf16> to vector<128x128xbf16>
    %cst_87 = arith.constant dense<0.000000e+00> : vector<64x128xf32>
    %86 = tpu.matmul %83, %85, %cst_87 {dimension_numbers = #tpu.dot_dimension_numbers<[1], [0], [0], [1], [0, 0, 1, 1], [], []>} : vector<64x128xbf16>, vector<128x128xbf16>, vector<64x128xf32> -> vector<64x128xf32>
    %87 = arith.addf %80, %86 : vector<64x128xf32>
    %c0_88 = arith.constant 0 : index
    %c2_89 = arith.constant 2 : index
    %c0_90 = arith.constant 0 : index
    %88 = vector.load %arg9[%c0_88, %c2_89, %c0_90] : memref<10x10x128xf32, #tpu.memory_space<vmem>>, vector<8x8x128xf32>
    %89 = vector.shape_cast %88 : vector<8x8x128xf32> to vector<64x128xf32>
    %90 = arith.truncf %89 : vector<64x128xf32> to vector<64x128xbf16>
    %c2_91 = arith.constant 2 : index
    %c0_92 = arith.constant 0 : index
    %c0_93 = arith.constant 0 : index
    %91 = vector.load %arg4[%c2_91, %c0_92, %c0_93] : memref<9x128x128xbf16, #tpu.memory_space<vmem>>, vector<1x128x128xbf16>
    %92 = vector.shape_cast %91 : vector<1x128x128xbf16> to vector<128x128xbf16>
    %cst_94 = arith.constant dense<0.000000e+00> : vector<64x128xf32>
    %93 = tpu.matmul %90, %92, %cst_94 {dimension_numbers = #tpu.dot_dimension_numbers<[1], [0], [0], [1], [0, 0, 1, 1], [], []>} : vector<64x128xbf16>, vector<128x128xbf16>, vector<64x128xf32> -> vector<64x128xf32>
    %94 = arith.addf %87, %93 : vector<64x128xf32>
    %c1_95 = arith.constant 1 : index
    %c0_96 = arith.constant 0 : index
    %c0_97 = arith.constant 0 : index
    %95 = vector.load %arg9[%c1_95, %c0_96, %c0_97] : memref<10x10x128xf32, #tpu.memory_space<vmem>>, vector<8x8x128xf32>
    %96 = vector.shape_cast %95 : vector<8x8x128xf32> to vector<64x128xf32>
    %97 = arith.truncf %96 : vector<64x128xf32> to vector<64x128xbf16>
    %c3_98 = arith.constant 3 : index
    %c0_99 = arith.constant 0 : index
    %c0_100 = arith.constant 0 : index
    %98 = vector.load %arg4[%c3_98, %c0_99, %c0_100] : memref<9x128x128xbf16, #tpu.memory_space<vmem>>, vector<1x128x128xbf16>
    %99 = vector.shape_cast %98 : vector<1x128x128xbf16> to vector<128x128xbf16>
    %cst_101 = arith.constant dense<0.000000e+00> : vector<64x128xf32>
    %100 = tpu.matmul %97, %99, %cst_101 {dimension_numbers = #tpu.dot_dimension_numbers<[1], [0], [0], [1], [0, 0, 1, 1], [], []>} : vector<64x128xbf16>, vector<128x128xbf16>, vector<64x128xf32> -> vector<64x128xf32>
    %101 = arith.addf %94, %100 : vector<64x128xf32>
    %c1_102 = arith.constant 1 : index
    %c1_103 = arith.constant 1 : index
    %c0_104 = arith.constant 0 : index
    %102 = vector.load %arg9[%c1_102, %c1_103, %c0_104] : memref<10x10x128xf32, #tpu.memory_space<vmem>>, vector<8x8x128xf32>
    %103 = vector.shape_cast %102 : vector<8x8x128xf32> to vector<64x128xf32>
    %104 = arith.truncf %103 : vector<64x128xf32> to vector<64x128xbf16>
    %c4_105 = arith.constant 4 : index
    %c0_106 = arith.constant 0 : index
    %c0_107 = arith.constant 0 : index
    %105 = vector.load %arg4[%c4_105, %c0_106, %c0_107] : memref<9x128x128xbf16, #tpu.memory_space<vmem>>, vector<1x128x128xbf16>
    %106 = vector.shape_cast %105 : vector<1x128x128xbf16> to vector<128x128xbf16>
    %cst_108 = arith.constant dense<0.000000e+00> : vector<64x128xf32>
    %107 = tpu.matmul %104, %106, %cst_108 {dimension_numbers = #tpu.dot_dimension_numbers<[1], [0], [0], [1], [0, 0, 1, 1], [], []>} : vector<64x128xbf16>, vector<128x128xbf16>, vector<64x128xf32> -> vector<64x128xf32>
    %108 = arith.addf %101, %107 : vector<64x128xf32>
    %c1_109 = arith.constant 1 : index
    %c2_110 = arith.constant 2 : index
    %c0_111 = arith.constant 0 : index
    %109 = vector.load %arg9[%c1_109, %c2_110, %c0_111] : memref<10x10x128xf32, #tpu.memory_space<vmem>>, vector<8x8x128xf32>
    %110 = vector.shape_cast %109 : vector<8x8x128xf32> to vector<64x128xf32>
    %111 = arith.truncf %110 : vector<64x128xf32> to vector<64x128xbf16>
    %c5_112 = arith.constant 5 : index
    %c0_113 = arith.constant 0 : index
    %c0_114 = arith.constant 0 : index
    %112 = vector.load %arg4[%c5_112, %c0_113, %c0_114] : memref<9x128x128xbf16, #tpu.memory_space<vmem>>, vector<1x128x128xbf16>
    %113 = vector.shape_cast %112 : vector<1x128x128xbf16> to vector<128x128xbf16>
    %cst_115 = arith.constant dense<0.000000e+00> : vector<64x128xf32>
    %114 = tpu.matmul %111, %113, %cst_115 {dimension_numbers = #tpu.dot_dimension_numbers<[1], [0], [0], [1], [0, 0, 1, 1], [], []>} : vector<64x128xbf16>, vector<128x128xbf16>, vector<64x128xf32> -> vector<64x128xf32>
    %115 = arith.addf %108, %114 : vector<64x128xf32>
    %c2_116 = arith.constant 2 : index
    %c0_117 = arith.constant 0 : index
    %c0_118 = arith.constant 0 : index
    %116 = vector.load %arg9[%c2_116, %c0_117, %c0_118] : memref<10x10x128xf32, #tpu.memory_space<vmem>>, vector<8x8x128xf32>
    %117 = vector.shape_cast %116 : vector<8x8x128xf32> to vector<64x128xf32>
    %118 = arith.truncf %117 : vector<64x128xf32> to vector<64x128xbf16>
    %c6_119 = arith.constant 6 : index
    %c0_120 = arith.constant 0 : index
    %c0_121 = arith.constant 0 : index
    %119 = vector.load %arg4[%c6_119, %c0_120, %c0_121] : memref<9x128x128xbf16, #tpu.memory_space<vmem>>, vector<1x128x128xbf16>
    %120 = vector.shape_cast %119 : vector<1x128x128xbf16> to vector<128x128xbf16>
    %cst_122 = arith.constant dense<0.000000e+00> : vector<64x128xf32>
    %121 = tpu.matmul %118, %120, %cst_122 {dimension_numbers = #tpu.dot_dimension_numbers<[1], [0], [0], [1], [0, 0, 1, 1], [], []>} : vector<64x128xbf16>, vector<128x128xbf16>, vector<64x128xf32> -> vector<64x128xf32>
    %122 = arith.addf %115, %121 : vector<64x128xf32>
    %c2_123 = arith.constant 2 : index
    %c1_124 = arith.constant 1 : index
    %c0_125 = arith.constant 0 : index
    %123 = vector.load %arg9[%c2_123, %c1_124, %c0_125] : memref<10x10x128xf32, #tpu.memory_space<vmem>>, vector<8x8x128xf32>
    %124 = vector.shape_cast %123 : vector<8x8x128xf32> to vector<64x128xf32>
    %125 = arith.truncf %124 : vector<64x128xf32> to vector<64x128xbf16>
    %c7_126 = arith.constant 7 : index
    %c0_127 = arith.constant 0 : index
    %c0_128 = arith.constant 0 : index
    %126 = vector.load %arg4[%c7_126, %c0_127, %c0_128] : memref<9x128x128xbf16, #tpu.memory_space<vmem>>, vector<1x128x128xbf16>
    %127 = vector.shape_cast %126 : vector<1x128x128xbf16> to vector<128x128xbf16>
    %cst_129 = arith.constant dense<0.000000e+00> : vector<64x128xf32>
    %128 = tpu.matmul %125, %127, %cst_129 {dimension_numbers = #tpu.dot_dimension_numbers<[1], [0], [0], [1], [0, 0, 1, 1], [], []>} : vector<64x128xbf16>, vector<128x128xbf16>, vector<64x128xf32> -> vector<64x128xf32>
    %129 = arith.addf %122, %128 : vector<64x128xf32>
    %c2_130 = arith.constant 2 : index
    %c2_131 = arith.constant 2 : index
    %c0_132 = arith.constant 0 : index
    %130 = vector.load %arg9[%c2_130, %c2_131, %c0_132] : memref<10x10x128xf32, #tpu.memory_space<vmem>>, vector<8x8x128xf32>
    %131 = vector.shape_cast %130 : vector<8x8x128xf32> to vector<64x128xf32>
    %132 = arith.truncf %131 : vector<64x128xf32> to vector<64x128xbf16>
    %c8_133 = arith.constant 8 : index
    %c0_134 = arith.constant 0 : index
    %c0_135 = arith.constant 0 : index
    %133 = vector.load %arg4[%c8_133, %c0_134, %c0_135] : memref<9x128x128xbf16, #tpu.memory_space<vmem>>, vector<1x128x128xbf16>
    %134 = vector.shape_cast %133 : vector<1x128x128xbf16> to vector<128x128xbf16>
    %cst_136 = arith.constant dense<0.000000e+00> : vector<64x128xf32>
    %135 = tpu.matmul %132, %134, %cst_136 {dimension_numbers = #tpu.dot_dimension_numbers<[1], [0], [0], [1], [0, 0, 1, 1], [], []>} : vector<64x128xbf16>, vector<128x128xbf16>, vector<64x128xf32> -> vector<64x128xf32>
    %136 = arith.addf %129, %135 : vector<64x128xf32>
    %c0_137 = arith.constant 0 : index
    %c0_138 = arith.constant 0 : index
    %137 = vector.load %arg5[%c0_137, %c0_138] : memref<1x128xf32, #tpu.memory_space<vmem>>, vector<1x128xf32>
    %138 = vector.broadcast %137 : vector<1x128xf32> to vector<64x128xf32>
    %139 = arith.addf %136, %138 : vector<64x128xf32>
    %c3_139 = arith.constant 3 : index
    %c0_140 = arith.constant 0 : index
    %c0_141 = arith.constant 0 : index
    %c0_142 = arith.constant 0 : index
    %140 = vector.load %arg1[%c3_139, %c0_140, %c0_141, %c0_142] : memref<4x10x10x4xbf16, #tpu.memory_space<vmem>>, vector<1x8x8x4xbf16>
    %141 = vector.shape_cast %140 : vector<1x8x8x4xbf16> to vector<8x8x4xbf16>
    %142 = vector.shape_cast %141 : vector<8x8x4xbf16> to vector<64x4xbf16>
    %c0_143 = arith.constant 0 : index
    %c0_144 = arith.constant 0 : index
    %143 = vector.load %arg6[%c0_143, %c0_144] : memref<4x128xbf16, #tpu.memory_space<vmem>>, vector<4x128xbf16>
    %cst_145 = arith.constant dense<0.000000e+00> : vector<64x128xf32>
    %144 = tpu.matmul %142, %143, %cst_145 {dimension_numbers = #tpu.dot_dimension_numbers<[1], [0], [0], [1], [0, 0, 1, 1], [], []>} : vector<64x4xbf16>, vector<4x128xbf16>, vector<64x128xf32> -> vector<64x128xf32>
    %c0_146 = arith.constant 0 : index
    %c0_147 = arith.constant 0 : index
    %145 = vector.load %arg7[%c0_146, %c0_147] : memref<1x128xf32, #tpu.memory_space<vmem>>, vector<1x128xf32>
    %146 = vector.broadcast %145 : vector<1x128xf32> to vector<64x128xf32>
    %147 = arith.addf %144, %146 : vector<64x128xf32>
    %148 = arith.addf %139, %147 : vector<64x128xf32>
    %cst_148 = arith.constant 0.000000e+00 : f32
    %149 = vector.broadcast %cst_148 : f32 to vector<64x128xf32>
    %150 = arith.maximumf %148, %149 : vector<64x128xf32>
    %c0_149 = arith.constant 0 : index
    %c0_150 = arith.constant 0 : index
    %c0_151 = arith.constant 0 : index
    %151 = vector.load %arg8[%c0_149, %c0_150, %c0_151] : memref<1x64x128xf32, #tpu.memory_space<vmem>>, vector<1x64x128xf32>
    %152 = vector.shape_cast %151 : vector<1x64x128xf32> to vector<64x128xf32>
    %153 = vector.shape_cast %150 : vector<64x128xf32> to vector<1x64x128xf32>
    tpu.vector_store %arg8[%c0_149, %c0_150, %c0_151], %153 {strides = array<i32>} : memref<1x64x128xf32, #tpu.memory_space<vmem>>, vector<1x64x128xf32>,
    return
  }
  func.func @transform_0(%arg0: i32) -> (i32, i32, i32, i32) {
    %c0_i32 = arith.constant 0 : i32
    %c0_i32_0 = arith.constant 0 : i32
    %c0_i32_1 = arith.constant 0 : i32
    %c0_i32_2 = arith.constant 0 : i32
    return %arg0, %c0_i32, %c0_i32_0, %c0_i32_1 : i32, i32, i32, i32
  }
  func.func @transform_1(%arg0: i32) -> (i32, i32, i32) {
    %c0_i32 = arith.constant 0 : i32
    %c0_i32_0 = arith.constant 0 : i32
    %c0_i32_1 = arith.constant 0 : i32
    %c0_i32_2 = arith.constant 0 : i32
    return %c0_i32, %c0_i32_0, %c0_i32_1 : i32, i32, i32
  }
  func.func @transform_2(%arg0: i32) -> (i32, i32) {
    %c0_i32 = arith.constant 0 : i32
    %c0_i32_0 = arith.constant 0 : i32
    %c0_i32_1 = arith.constant 0 : i32
    return %c0_i32, %c0_i32_0 : i32, i32
  }
  func.func @transform_3(%arg0: i32) -> (i32, i32, i32) {
    %c0_i32 = arith.constant 0 : i32
    %c0_i32_0 = arith.constant 0 : i32
    %c0_i32_1 = arith.constant 0 : i32
    %c0_i32_2 = arith.constant 0 : i32
    return %c0_i32, %c0_i32_0, %c0_i32_1 : i32, i32, i32
  }
  func.func @transform_4(%arg0: i32) -> (i32, i32) {
    %c0_i32 = arith.constant 0 : i32
    %c0_i32_0 = arith.constant 0 : i32
    %c0_i32_1 = arith.constant 0 : i32
    return %c0_i32, %c0_i32_0 : i32, i32
  }
  func.func @transform_5(%arg0: i32) -> (i32, i32) {
    %c0_i32 = arith.constant 0 : i32
    %c0_i32_0 = arith.constant 0 : i32
    %c0_i32_1 = arith.constant 0 : i32
    return %c0_i32, %c0_i32_0 : i32, i32
  }
  func.func @transform_6(%arg0: i32) -> (i32, i32) {
    %c0_i32 = arith.constant 0 : i32
    %c0_i32_0 = arith.constant 0 : i32
    %c0_i32_1 = arith.constant 0 : i32
    return %c0_i32, %c0_i32_0 : i32, i32
  }
  func.func @transform_7(%arg0: i32) -> (i32, i32, i32) {
    %c0_i32 = arith.constant 0 : i32
    %c0_i32_0 = arith.constant 0 : i32
    %c0_i32_1 = arith.constant 0 : i32
    return %arg0, %c0_i32, %c0_i32_0 : i32, i32, i32
  }
}

</mosaic_0001>

<llo_original>
// kernel: tpu_custom_call.1
$region0: #{tpu_custom_call.1}
  #allocation0 [shape = 'u32[]', space=smem, size = 0x4, offset = 0x4, fixed_abs, tag = 'smem constant byte address 0x4 - core index']
  #allocation1 [shape = 'u32[144,128]{1,0:T(1,128)}', space=vmem, size = 0x12000, scoped, tag = 'internal scratch']
  #allocation2 [shape = 'f32[10,10,128]{2,1,0:T(8,128)}', space=vmem, size = 0x14000, scoped, tag = 'scratch operand']
  %s0 = inlined_call_operand.vmem [shape: bf16[8,10,10,4], index: 0, kind: input, shape index: {}]
  %s1 = inlined_call_operand.vmem [shape: bf16[9,4,128], index: 1, kind: input, shape index: {}]
  %s2 = inlined_call_operand.vmem [shape: f32[1,128], index: 2, kind: input, shape index: {}]
  %s3 = inlined_call_operand.vmem [shape: bf16[9,128,128], index: 3, kind: input, shape index: {}]
  %s4 = inlined_call_operand.vmem [shape: f32[1,128], index: 4, kind: input, shape index: {}]
  %s5 = inlined_call_operand.vmem [shape: bf16[4,128], index: 5, kind: input, shape index: {}]
  %s6 = inlined_call_operand.vmem [shape: f32[1,128], index: 6, kind: input, shape index: {}]
  %s7 = inlined_call_operand.hbm [shape: f32[2,64,128], index: 7, kind: output, shape index: {}]
  %s8 = sld [smem:[#allocation0]]
  $region61: #{tpu_custom_call.1} parent=0
    _
  %s10 = ssub.s32 1, %s8
  %s11 = scalar_select 0, %s10, %s8
  $region1: #{tpu_custom_call.1} parent=0
    #allocation3 [shape = 'u8[65536]{0}', space=vmem, size = 0x10000, scoped, tag = 'output window, operand 0']
    #allocation4 [shape = 's32[2]{0}', space=sflag, size = 0x8, scoped, tag = 'scoped memory for tpu_custom_call.1']
    %12 = vsyncpa [#allocation4], 0
    %s13 = scalar_lea.sflag [#allocation4], 1
    %14 = vsyncpa %s13, 0
    loop: start=0, step=1, limit=4
    $region2: #{tpu_custom_call.1} parent=1 // loop_pre_header
      _
    $region3: #{tpu_custom_call.1} parent=1 // loop_header
      %s16 = sphi 0, %s20
      %p17 = scmp.ge.s32.totalorder %s16, 4
      %s26 = sphi 0, %s28
      %s29 = sphi 0, %s26
      %s30 = sphi 0, %s29
      %s46 = sphi 0, %s30
      %s50 = sphi 0, %s50
      %s52 = sphi 0, %s50
      %s53 = sphi 0, %s52
      %s67 = sphi 0, %s53
      %s71 = sphi 0, %s71
      %s73 = sphi 0, %s71
      %s74 = sphi 0, %s73
      %s88 = sphi 0, %s74
      %s92 = sphi 0, %s92
      %s94 = sphi 0, %s92
      %s95 = sphi 0, %s94
      %s109 = sphi 0, %s95
      %s113 = sphi 0, %s113
      %s115 = sphi 0, %s113
      %s116 = sphi 0, %s115
      %s130 = sphi 0, %s116
      %s134 = sphi 0, %s134
      %s136 = sphi 0, %s134
      %s137 = sphi 0, %s136
      %s151 = sphi 0, %s137
      %s155 = sphi 0, %s155
      %s157 = sphi 0, %s155
      %s158 = sphi 0, %s157
      %s172 = sphi 0, %s158
      %s178 = sphi 0, %s180
      %s181 = sphi 0, %s178
      %s182 = sphi 0, %s181
      %s198 = sphi 0, %s182
    $region4: #{tpu_custom_call.1} parent=1 // loop_header_branch
      %19 = sbr.rel (%p17) target = $region8
    $region5: #{tpu_custom_call.1} parent=1 // loop_body
      %s21 = ssub.s32 %s16, 1
      %s22 = ssub.s32 %s16, 2
      %s23 = sadd.s32 %s16, 1
      %s24 = ssub.s32 %s16, %s23
      %p25 = scmp.eq.s32.totalorder %s24, 0
      %s27 = sadd.s32 %s26, 1
      %s28 = scalar_select %p25, %s26, %s27
      %p31 = pneg %p25
      %p32 = scmp.eq.s32.totalorder %s16, 1
      %p33 = por %p31, %p32
      %p34 = scmp.ne.s32.totalorder %s26, %s29
      %p35 = scmp.eq.s32.totalorder %s16, 0
      %p36 = por %p34, %p35
      %p37 = scmp.ne.s32.totalorder %s26, %s29
      %p38 = scmp.eq.s32.totalorder %s21, 1
      %p39 = por %p37, %p38
      %p40 = scmp.ne.s32.totalorder %s29, %s30
      %p41 = scmp.eq.s32.totalorder %s21, 0
      %p42 = por %p40, %p41
      %p43 = scmp.ne.s32.totalorder %s29, %s30
      %p44 = scmp.eq.s32.totalorder %s22, 1
      %p45 = por %p43, %p44
      %p47 = scmp.ne.s32.totalorder %s30, %s46
      %p48 = scmp.eq.s32.totalorder %s22, 0
      %p49 = por %p47, %p48
      %s51 = sadd.s32 %s50, 1
      %p54 = scmp.eq.s32.totalorder %s16, 1
      %p55 = scmp.ne.s32.totalorder %s50, %s52
      %p56 = scmp.eq.s32.totalorder %s16, 0
      %p57 = por %p55, %p56
      %p58 = scmp.ne.s32.totalorder %s50, %s52
      %p59 = scmp.eq.s32.totalorder %s21, 1
      %p60 = por %p58, %p59
      %p61 = scmp.ne.s32.totalorder %s52, %s53
      %p62 = scmp.eq.s32.totalorder %s21, 0
      %p63 = por %p61, %p62
      %p64 = scmp.ne.s32.totalorder %s52, %s53
      %p65 = scmp.eq.s32.totalorder %s22, 1
      %p66 = por %p64, %p65
      %p68 = scmp.ne.s32.totalorder %s53, %s67
      %p69 = scmp.eq.s32.totalorder %s22, 0
      %p70 = por %p68, %p69
      %s72 = sadd.s32 %s71, 1
      %p75 = scmp.eq.s32.totalorder %s16, 1
      %p76 = scmp.ne.s32.totalorder %s71, %s73
      %p77 = scmp.eq.s32.totalorder %s16, 0
      %p78 = por %p76, %p77
      %p79 = scmp.ne.s32.totalorder %s71, %s73
      %p80 = scmp.eq.s32.totalorder %s21, 1
      %p81 = por %p79, %p80
      %p82 = scmp.ne.s32.totalorder %s73, %s74
      %p83 = scmp.eq.s32.totalorder %s21, 0
      %p84 = por %p82, %p83
      %p85 = scmp.ne.s32.totalorder %s73, %s74
      %p86 = scmp.eq.s32.totalorder %s22, 1
      %p87 = por %p85, %p86
      %p89 = scmp.ne.s32.totalorder %s74, %s88
      %p90 = scmp.eq.s32.totalorder %s22, 0
      %p91 = por %p89, %p90
      %s93 = sadd.s32 %s92, 1
      %p96 = scmp.eq.s32.totalorder %s16, 1
      %p97 = scmp.ne.s32.totalorder %s92, %s94
      %p98 = scmp.eq.s32.totalorder %s16, 0
      %p99 = por %p97, %p98
      %p100 = scmp.ne.s32.totalorder %s92, %s94
      %p101 = scmp.eq.s32.totalorder %s21, 1
      %p102 = por %p100, %p101
      %p103 = scmp.ne.s32.totalorder %s94, %s95
      %p104 = scmp.eq.s32.totalorder %s21, 0
      %p105 = por %p103, %p104
      %p106 = scmp.ne.s32.totalorder %s94, %s95
      %p107 = scmp.eq.s32.totalorder %s22, 1
      %p108 = por %p106, %p107
      %p110 = scmp.ne.s32.totalorder %s95, %s109
      %p111 = scmp.eq.s32.totalorder %s22, 0
      %p112 = por %p110, %p111
      %s114 = sadd.s32 %s113, 1
      %p117 = scmp.eq.s32.totalorder %s16, 1
      %p118 = scmp.ne.s32.totalorder %s113, %s115
      %p119 = scmp.eq.s32.totalorder %s16, 0
      %p120 = por %p118, %p119
      %p121 = scmp.ne.s32.totalorder %s113, %s115
      %p122 = scmp.eq.s32.totalorder %s21, 1
      %p123 = por %p121, %p122
      %p124 = scmp.ne.s32.totalorder %s115, %s116
      %p125 = scmp.eq.s32.totalorder %s21, 0
      %p126 = por %p124, %p125
      %p127 = scmp.ne.s32.totalorder %s115, %s116
      %p128 = scmp.eq.s32.totalorder %s22, 1
      %p129 = por %p127, %p128
      %p131 = scmp.ne.s32.totalorder %s116, %s130
      %p132 = scmp.eq.s32.totalorder %s22, 0
      %p133 = por %p131, %p132
      %s135 = sadd.s32 %s134, 1
      %p138 = scmp.eq.s32.totalorder %s16, 1
      %p139 = scmp.ne.s32.totalorder %s134, %s136
      %p140 = scmp.eq.s32.totalorder %s16, 0
      %p141 = por %p139, %p140
      %p142 = scmp.ne.s32.totalorder %s134, %s136
      %p143 = scmp.eq.s32.totalorder %s21, 1
      %p144 = por %p142, %p143
      %p145 = scmp.ne.s32.totalorder %s136, %s137
      %p146 = scmp.eq.s32.totalorder %s21, 0
      %p147 = por %p145, %p146
      %p148 = scmp.ne.s32.totalorder %s136, %s137
      %p149 = scmp.eq.s32.totalorder %s22, 1
      %p150 = por %p148, %p149
      %p152 = scmp.ne.s32.totalorder %s137, %s151
      %p153 = scmp.eq.s32.totalorder %s22, 0
      %p154 = por %p152, %p153
      %s156 = sadd.s32 %s155, 1
      %p159 = scmp.eq.s32.totalorder %s16, 1
      %p160 = scmp.ne.s32.totalorder %s155, %s157
      %p161 = scmp.eq.s32.totalorder %s16, 0
      %p162 = por %p160, %p161
      %p163 = scmp.ne.s32.totalorder %s155, %s157
      %p164 = scmp.eq.s32.totalorder %s21, 1
      %p165 = por %p163, %p164
      %p166 = scmp.ne.s32.totalorder %s157, %s158
      %p167 = scmp.eq.s32.totalorder %s21, 0
      %p168 = por %p166, %p167
      %p169 = scmp.ne.s32.totalorder %s157, %s158
      %p170 = scmp.eq.s32.totalorder %s22, 1
      %p171 = por %p169, %p170
      %p173 = scmp.ne.s32.totalorder %s158, %s172
      %p174 = scmp.eq.s32.totalorder %s22, 0
      %p175 = por %p173, %p174
      %s176 = ssub.s32 %s16, %s23
      %p177 = scmp.eq.s32.totalorder %s176, 0
      %s179 = sadd.s32 %s178, 1
      %s180 = scalar_select %p177, %s178, %s179
      %p183 = pneg %p177
      %p184 = scmp.eq.s32.totalorder %s16, 1
      %p185 = por %p183, %p184
      %p186 = scmp.ne.s32.totalorder %s178, %s181
      %p187 = scmp.eq.s32.totalorder %s16, 0
      %p188 = por %p186, %p187
      %p189 = scmp.ne.s32.totalorder %s178, %s181
      %p190 = scmp.eq.s32.totalorder %s21, 1
      %p191 = por %p189, %p190
      %p192 = scmp.ne.s32.totalorder %s181, %s182
      %p193 = scmp.eq.s32.totalorder %s21, 0
      %p194 = por %p192, %p193
      %p195 = scmp.ne.s32.totalorder %s181, %s182
      %p196 = scmp.eq.s32.totalorder %s22, 1
      %p197 = por %p195, %p196
      %p199 = scmp.ne.s32.totalorder %s182, %s198
      %p200 = scmp.eq.s32.totalorder %s22, 0
      %p201 = por %p199, %p200
      %p202 = scmp.le.s32.totalorder 1, %s16
      %p203 = scmp.lt.s32.totalorder %s16, 3
      %p204 = pnand %p202, %p203
      %p205 = pneg %p204
      // Predicated region
      $region9: #{tpu_custom_call.1} parent=5 // pred_check
        _
      $region10: #{tpu_custom_call.1} parent=5 // pred_check_branch
        %207 = sbr.rel (%p204) target = $region12
      $region11: #{tpu_custom_call.1} parent=5 // pred_region
        %s208 = ssub.s32 %s16, 1
        // Predicated region
        $region13: #{tpu_custom_call.1} parent=11 // pred_check
          %p209 = pneg %p63
        $region14: #{tpu_custom_call.1} parent=11 // pred_check_branch
          %211 = sbr.rel (%p209) target = $region16
        $region15: #{tpu_custom_call.1} parent=11 // pred_region
          _
        $region16: #{tpu_custom_call.1} parent=11 // pred_fallthru
          _
        // Predicated region
        $region17: #{tpu_custom_call.1} parent=11 // pred_check
          %p212 = pneg %p84
        $region18: #{tpu_custom_call.1} parent=11 // pred_check_branch
          %214 = sbr.rel (%p212) target = $region20
        $region19: #{tpu_custom_call.1} parent=11 // pred_region
          _
        $region20: #{tpu_custom_call.1} parent=11 // pred_fallthru
          _
        // Predicated region
        $region21: #{tpu_custom_call.1} parent=11 // pred_check
          %p215 = pneg %p105
        $region22: #{tpu_custom_call.1} parent=11 // pred_check_branch
          %217 = sbr.rel (%p215) target = $region24
        $region23: #{tpu_custom_call.1} parent=11 // pred_region
          _
        $region24: #{tpu_custom_call.1} parent=11 // pred_fallthru
          _
        // Predicated region
        $region25: #{tpu_custom_call.1} parent=11 // pred_check
          %p218 = pneg %p126
        $region26: #{tpu_custom_call.1} parent=11 // pred_check_branch
          %220 = sbr.rel (%p218) target = $region28
        $region27: #{tpu_custom_call.1} parent=11 // pred_region
          _
        $region28: #{tpu_custom_call.1} parent=11 // pred_fallthru
          _
        // Predicated region
        $region29: #{tpu_custom_call.1} parent=11 // pred_check
          %p221 = pneg %p147
        $region30: #{tpu_custom_call.1} parent=11 // pred_check_branch
          %223 = sbr.rel (%p221) target = $region32
        $region31: #{tpu_custom_call.1} parent=11 // pred_region
          _
        $region32: #{tpu_custom_call.1} parent=11 // pred_fallthru
          _
        // Predicated region
        $region33: #{tpu_custom_call.1} parent=11 // pred_check
          %p224 = pneg %p168
        $region34: #{tpu_custom_call.1} parent=11 // pred_check_branch
          %226 = sbr.rel (%p224) target = $region36
        $region35: #{tpu_custom_call.1} parent=11 // pred_region
          _
        $region36: #{tpu_custom_call.1} parent=11 // pred_fallthru
          _
      $region12: #{tpu_custom_call.1} parent=5 // pred_fallthru
        _
      %p227 = scmp.lt.s32.totalorder %s16, 2
      // Predicated region
      $region37: #{tpu_custom_call.1} parent=5 // pred_check
        %p228 = pneg %p227
      $region38: #{tpu_custom_call.1} parent=5 // pred_check_branch
        %230 = sbr.rel (%p228) target = $region40
      $region39: #{tpu_custom_call.1} parent=5 // pred_region
        // Predicated region
        $region41: #{tpu_custom_call.1} parent=39 // pred_check
          %p231 = pneg %p36
        $region42: #{tpu_custom_call.1} parent=39 // pred_check_branch
          %233 = sbr.rel (%p231) target = $region44
        $region43: #{tpu_custom_call.1} parent=39 // pred_region
          %s234 = smul.u32 4, %s16
          %p235 = scmp.lt.s32.totalorder %s234, 7
          %s236 = scalar_select %p235, %s234, 7
          %s237 = smul.addr %s236, 20
          %s238 = smul.addr %s237, 4
          %s239 = scalar_lea.vmem %s0, %s238
          %s240 = smul.u32 4, %s16
        $region44: #{tpu_custom_call.1} parent=39 // pred_fallthru
          _
      $region40: #{tpu_custom_call.1} parent=5 // pred_fallthru
        _
      %p241 = scmp.le.s32.totalorder 1, %s16
      %p242 = scmp.lt.s32.totalorder %s16, 3
      %p243 = pnand %p241, %p242
      %p244 = pneg %p243
      // Predicated region
      $region45: #{tpu_custom_call.1} parent=5 // pred_check
        _
      $region46: #{tpu_custom_call.1} parent=5 // pred_check_branch
        %246 = sbr.rel (%p243) target = $region48
      $region47: #{tpu_custom_call.1} parent=5 // pred_region
        %s247 = ssub.s32 %s16, 1
        %s248 = smul.u32 4, %s21
        %p249 = scmp.lt.s32.totalorder %s248, 7
        %s250 = scalar_select %p249, %s248, 7
        %s251 = smul.addr %s250, 20
        %s252 = smul.addr %s251, 4
        %s253 = scalar_lea.vmem %s0, %s252
        %p254 = pneg %p42
        %p255 = pneg %p39
        %p256 = pneg %p63
        %p257 = pneg %p60
        %p258 = pneg %p84
        %p259 = pneg %p81
        %p260 = pneg %p105
        %p261 = pneg %p102
        %p262 = pneg %p126
        %p263 = pneg %p123
        %p264 = pneg %p147
        %p265 = pneg %p144
        %p266 = pneg %p168
        %p267 = pneg %p165
        %p268 = pneg %p194
        %p269 = pneg %p191
        %s270 = sand.u32 %s181, 1
        %s271 = scalar_lea.sflag [#allocation4], %s270
        %s272 = sand.u32 %s181, 1
        %s273 = smul.addr %s272, 64
        %s274 = scalar_lea.vmem [#allocation3], %s273
        %s275 = smul.u32 4, %s21
        %p276 = scmp.lt.s32.totalorder %s275, 7
        %s277 = scalar_select %p276, %s275, 7
        %s278 = smul.addr %s277, 20
        %s279 = smul.addr %s278, 4
        %s280 = scalar_lea.vmem %s0, %s279
        %s281 = smul.u32 4, %s21
        %v283 = vld [vmem:[%s280] sm:$0xf]
        %v284 = vld [vmem:[%s280 + $0x8] sm:$0xf]
        %v285 = vld [vmem:[%s280 + $0x10] sm:$0xf]
        %v286 = vld [vmem:[%s280 + $0x18] sm:$0xf]
        %v287 = vld [vmem:[%s280 + $0x20] sm:$0xf]
        %v288 = vld [vmem:[%s280 + $0x28] sm:$0xf]
        %v289 = vld [vmem:[%s280 + $0x30] sm:$0xf]
        %v290 = vld [vmem:[%s280 + $0x38] sm:$0xf]
        %v291 = vld [vmem:[%s1] sm:$0x3]
        %s292 = scalar_lea.vmem %s280, 80
        %v293 = vld [vmem:[%s292] sm:$0xf]
        %v294 = vld [vmem:[%s292 + $0x8] sm:$0xf]
        %v295 = vld [vmem:[%s292 + $0x10] sm:$0xf]
        %v296 = vld [vmem:[%s292 + $0x18] sm:$0xf]
        %v297 = vld [vmem:[%s292 + $0x20] sm:$0xf]
        %v298 = vld [vmem:[%s292 + $0x28] sm:$0xf]
        %v299 = vld [vmem:[%s292 + $0x30] sm:$0xf]
        %v300 = vld [vmem:[%s292 + $0x38] sm:$0xf]
        %s301 = scalar_lea.vmem %s1, 2
        %v302 = vld [vmem:[%s301] sm:$0x3]
        %v311 = vunpack.c.l.b16 %v293
        %v312 = vunpack.c.l.b16 %v294
        %v313 = vunpack.c.l.b16 %v295
        %v314 = vunpack.c.l.b16 %v296
        %v315 = vunpack.c.l.b16 %v297
        %v316 = vunpack.c.l.b16 %v298
        %v317 = vunpack.c.l.b16 %v299
        %v318 = vunpack.c.l.b16 %v300
        %v319 = vpack.c.b16 %v312, %v311
        %v320 = vpack.c.b16 %v314, %v313
        %v321 = vpack.c.b16 %v316, %v315
        %v322 = vpack.c.b16 %v318, %v317
        %vm323 = vcmask 31744
        %v325 = vsel %vm323, %v319, 0
        %v328 = vsel %vm323, %v320, 0
        %v331 = vsel %vm323, %v321, 0
        %v334 = vsel %vm323, %v322, 0
        %vm336 = vcmask 1041408
        %v338 = vsel %vm336, %v302, 0
        %340 = vmatprep.subr.bf16.mxu0 0
        %341 = vmatpush1.bf16.msra.mxu0 %v338
        %342 = vmatprep.subr.bf16.mxu0 0
        %343 = vmatpush1.bf16.msra.mxu0 0
        %344 = vmatprep.subr.bf16.mxu0 0
        %345 = vmatpush1.bf16.msra.mxu0 0
        %346 = vmatprep.subr.bf16.mxu0 0
        %347 = vmatpush1.bf16.msra.mxu0 0
        %348 = vmatprep.subr.bf16.mxu0 0
        %349 = vmatpush1.bf16.msra.mxu0 0
        %350 = vmatprep.subr.bf16.mxu0 0
        %351 = vmatpush1.bf16.msra.mxu0 0
        %352 = vmatprep.subr.bf16.mxu0 0
        %353 = vmatpush1.bf16.msra.mxu0 0
        %354 = vmatprep.subr.bf16.mxu0 0
        %355 = vmatpush1.bf16.msra.mxu0 0
        %356 = vmatprep.subr.bf16.mxu0 0
        %357 = vmatpush1.bf16.msra.mxu0 0
        %358 = vmatprep.subr.bf16.mxu0 0
        %359 = vmatpush1.bf16.msra.mxu0 0
        %360 = vmatprep.subr.bf16.mxu0 0
        %361 = vmatpush1.bf16.msra.mxu0 0
        %362 = vmatprep.subr.bf16.mxu0 0
        %363 = vmatpush1.bf16.msra.mxu0 0
        %364 = vmatprep.subr.bf16.mxu0 0
        %365 = vmatpush1.bf16.msra.mxu0 0
        %366 = vmatprep.subr.bf16.mxu0 0
        %367 = vmatpush1.bf16.msra.mxu0 0
        %368 = vmatprep.subr.bf16.mxu0 0
        %369 = vmatpush1.bf16.msra.mxu0 0
        %370 = vmatprep.subr.bf16.mxu0 0
        %371 = vmatpush1.bf16.msra.mxu0 0
        %372 = vmatprep.mubr.bf16.mxu0 0
        %373 = vmatmul.mubr.bf16.gmra.mrb[0].mxu0 %v325
        %v374 = vpop.f32.mrb[0].mxu0
        %v375 = vadd.f32 0.0, %v374
        %v376 = vpop.f32.mrb[0].mxu0
        %v377 = vpop.f32.mrb[0].mxu0
        %v378 = vadd.f32 0.0, %v377
        %v379 = vpop.f32.mrb[0].mxu0
        %380 = vmatprep.mubr.bf16.mxu0 0
        %381 = vmatmul.mubr.bf16.gmra.mrb[0].mxu0 %v328
        %v382 = vpop.f32.mrb[0].mxu0
        %v383 = vadd.f32 0.0, %v382
        %v384 = vpop.f32.mrb[0].mxu0
        %v385 = vpop.f32.mrb[0].mxu0
        %v386 = vadd.f32 0.0, %v385
        %v387 = vpop.f32.mrb[0].mxu0
        %388 = vmatprep.mubr.bf16.mxu0 0
        %389 = vmatmul.mubr.bf16.gmra.mrb[0].mxu0 %v331
        %v390 = vpop.f32.mrb[0].mxu0
        %v391 = vadd.f32 0.0, %v390
        %v392 = vpop.f32.mrb[0].mxu0
        %v393 = vpop.f32.mrb[0].mxu0
        %v394 = vadd.f32 0.0, %v393
        %v395 = vpop.f32.mrb[0].mxu0
        %396 = vmatprep.mubr.bf16.mxu0 0
        %397 = vmatmul.mubr.bf16.gmra.mrb[0].mxu0 %v334
        %v398 = vpop.f32.mrb[0].mxu0
        %v399 = vadd.f32 0.0, %v398
        %v400 = vpop.f32.mrb[0].mxu0
        %v401 = vpop.f32.mrb[0].mxu0
        %v402 = vadd.f32 0.0, %v401
        %v403 = vpop.f32.mrb[0].mxu0
        %404 = vdwg.mxu0
        %v413 = vunpack.c.l.b16 %v283
        %v414 = vunpack.c.l.b16 %v284
        %v415 = vunpack.c.l.b16 %v285
        %v416 = vunpack.c.l.b16 %v286
        %v417 = vunpack.c.l.b16 %v287
        %v418 = vunpack.c.l.b16 %v288
        %v419 = vunpack.c.l.b16 %v289
        %v420 = vunpack.c.l.b16 %v290
        %v421 = vpack.c.b16 %v414, %v413
        %v422 = vpack.c.b16 %v416, %v415
        %v423 = vpack.c.b16 %v418, %v417
        %v424 = vpack.c.b16 %v420, %v419
        %v426 = vsel %vm323, %v421, 0
        %v429 = vsel %vm323, %v422, 0
        %v432 = vsel %vm323, %v423, 0
        %v435 = vsel %vm323, %v424, 0
        %v438 = vsel %vm336, %v291, 0
        %440 = vmatprep.subr.bf16.mxu0 0
        %441 = vmatpush1.bf16.msra.mxu0 %v438
        %442 = vmatprep.subr.bf16.mxu0 0
        %443 = vmatpush1.bf16.msra.mxu0 0
        %444 = vmatprep.subr.bf16.mxu0 0
        %445 = vmatpush1.bf16.msra.mxu0 0
        %446 = vmatprep.subr.bf16.mxu0 0
        %447 = vmatpush1.bf16.msra.mxu0 0
        %448 = vmatprep.subr.bf16.mxu0 0
        %449 = vmatpush1.bf16.msra.mxu0 0
        %450 = vmatprep.subr.bf16.mxu0 0
        %451 = vmatpush1.bf16.msra.mxu0 0
        %452 = vmatprep.subr.bf16.mxu0 0
        %453 = vmatpush1.bf16.msra.mxu0 0
        %454 = vmatprep.subr.bf16.mxu0 0
        %455 = vmatpush1.bf16.msra.mxu0 0
        %456 = vmatprep.subr.bf16.mxu0 0
        %457 = vmatpush1.bf16.msra.mxu0 0
        %458 = vmatprep.subr.bf16.mxu0 0
        %459 = vmatpush1.bf16.msra.mxu0 0
        %460 = vmatprep.subr.bf16.mxu0 0
        %461 = vmatpush1.bf16.msra.mxu0 0
        %462 = vmatprep.subr.bf16.mxu0 0
        %463 = vmatpush1.bf16.msra.mxu0 0
        %464 = vmatprep.subr.bf16.mxu0 0
        %465 = vmatpush1.bf16.msra.mxu0 0
        %466 = vmatprep.subr.bf16.mxu0 0
        %467 = vmatpush1.bf16.msra.mxu0 0
        %468 = vmatprep.subr.bf16.mxu0 0
        %469 = vmatpush1.bf16.msra.mxu0 0
        %470 = vmatprep.subr.bf16.mxu0 0
        %471 = vmatpush1.bf16.msra.mxu0 0
        %472 = vmatprep.mubr.bf16.mxu0 0
        %473 = vmatmul.mubr.bf16.gmra.mrb[0].mxu0 %v426
        %v474 = vpop.f32.mrb[0].mxu0
        %v475 = vadd.f32 %v375, %v474
        %v476 = vpop.f32.mrb[0].mxu0
        %v477 = vpop.f32.mrb[0].mxu0
        %v478 = vadd.f32 %v378, %v477
        %v479 = vpop.f32.mrb[0].mxu0
        %480 = vmatprep.mubr.bf16.mxu0 0
        %481 = vmatmul.mubr.bf16.gmra.mrb[0].mxu0 %v429
        %v482 = vpop.f32.mrb[0].mxu0
        %v483 = vadd.f32 %v383, %v482
        %v484 = vpop.f32.mrb[0].mxu0
        %v485 = vpop.f32.mrb[0].mxu0
        %v486 = vadd.f32 %v386, %v485
        %v487 = vpop.f32.mrb[0].mxu0
        %488 = vmatprep.mubr.bf16.mxu0 0
        %489 = vmatmul.mubr.bf16.gmra.mrb[0].mxu0 %v432
        %v490 = vpop.f32.mrb[0].mxu0
        %v491 = vadd.f32 %v391, %v490
        %v492 = vpop.f32.mrb[0].mxu0
        %v493 = vpop.f32.mrb[0].mxu0
        %v494 = vadd.f32 %v394, %v493
        %v495 = vpop.f32.mrb[0].mxu0
        %496 = vmatprep.mubr.bf16.mxu0 0
        %497 = vmatmul.mubr.bf16.gmra.mrb[0].mxu0 %v435
        %v498 = vpop.f32.mrb[0].mxu0
        %v499 = vadd.f32 %v399, %v498
        %v500 = vpop.f32.mrb[0].mxu0
        %v501 = vpop.f32.mrb[0].mxu0
        %v502 = vadd.f32 %v402, %v501
        %v503 = vpop.f32.mrb[0].mxu0
        %504 = vdwg.mxu0
        %v505 = vld [vmem:[%s280] sm:$0xf]
        %v506 = vld [vmem:[%s280 + $0x4] sm:$0x1]
        %v507 = vld [vmem:[%s280 + $0x8] sm:$0xf]
        %v508 = vld [vmem:[%s280 + $0xc] sm:$0x1]
        %v509 = vld [vmem:[%s280 + $0x10] sm:$0xf]
        %v510 = vld [vmem:[%s280 + $0x14] sm:$0x1]
        %v511 = vld [vmem:[%s280 + $0x18] sm:$0xf]
        %v512 = vld [vmem:[%s280 + $0x1c] sm:$0x1]
        %v513 = vld [vmem:[%s280 + $0x20] sm:$0xf]
        %v514 = vld [vmem:[%s280 + $0x24] sm:$0x1]
        %v515 = vld [vmem:[%s280 + $0x28] sm:$0xf]
        %v516 = vld [vmem:[%s280 + $0x2c] sm:$0x1]
        %v517 = vld [vmem:[%s280 + $0x30] sm:$0xf]
        %v518 = vld [vmem:[%s280 + $0x34] sm:$0x1]
        %v519 = vld [vmem:[%s280 + $0x38] sm:$0xf]
        %v520 = vld [vmem:[%s280 + $0x3c] sm:$0x1]
        %vm521 = vsmask.f32 3328
        %vm522 = vsmask.f32 7440
        %vm523 = vmor %vm521, %vm522
        %v525 = vshrl.u32 %v505, 16
        %v527 = vrot.slane %v525, 4
        %v528 = vshll.u32 %v505, 16
        %v530 = vrot.slane %v528, 5
        %v531 = vor.u32 %v527, %v530
        %v532 = vrot.slane %v531, 4
        %v534 = vshll.u32 %v506, 16
        %v536 = vrot.slane %v534, 5
        %v537 = vsel %vm523, %v532, %v536
        %v539 = vshrl.u32 %v507, 16
        %v541 = vrot.slane %v539, 4
        %v542 = vshll.u32 %v507, 16
        %v544 = vrot.slane %v542, 5
        %v545 = vor.u32 %v541, %v544
        %v546 = vrot.slane %v545, 4
        %v548 = vshll.u32 %v508, 16
        %v550 = vrot.slane %v548, 5
        %v551 = vsel %vm523, %v546, %v550
        %v553 = vshrl.u32 %v509, 16
        %v555 = vrot.slane %v553, 4
        %v556 = vshll.u32 %v509, 16
        %v558 = vrot.slane %v556, 5
        %v559 = vor.u32 %v555, %v558
        %v560 = vrot.slane %v559, 4
        %v562 = vshll.u32 %v510, 16
        %v564 = vrot.slane %v562, 5
        %v565 = vsel %vm523, %v560, %v564
        %v567 = vshrl.u32 %v511, 16
        %v569 = vrot.slane %v567, 4
        %v570 = vshll.u32 %v511, 16
        %v572 = vrot.slane %v570, 5
        %v573 = vor.u32 %v569, %v572
        %v574 = vrot.slane %v573, 4
        %v576 = vshll.u32 %v512, 16
        %v578 = vrot.slane %v576, 5
        %v579 = vsel %vm523, %v574, %v578
        %v581 = vshrl.u32 %v513, 16
        %v583 = vrot.slane %v581, 4
        %v584 = vshll.u32 %v513, 16
        %v586 = vrot.slane %v584, 5
        %v587 = vor.u32 %v583, %v586
        %v588 = vrot.slane %v587, 4
        %v590 = vshll.u32 %v514, 16
        %v592 = vrot.slane %v590, 5
        %v593 = vsel %vm523, %v588, %v592
        %v595 = vshrl.u32 %v515, 16
        %v597 = vrot.slane %v595, 4
        %v598 = vshll.u32 %v515, 16
        %v600 = vrot.slane %v598, 5
        %v601 = vor.u32 %v597, %v600
        %v602 = vrot.slane %v601, 4
        %v604 = vshll.u32 %v516, 16
        %v606 = vrot.slane %v604, 5
        %v607 = vsel %vm523, %v602, %v606
        %v609 = vshrl.u32 %v517, 16
        %v611 = vrot.slane %v609, 4
        %v612 = vshll.u32 %v517, 16
        %v614 = vrot.slane %v612, 5
        %v615 = vor.u32 %v611, %v614
        %v616 = vrot.slane %v615, 4
        %v618 = vshll.u32 %v518, 16
        %v620 = vrot.slane %v618, 5
        %v621 = vsel %vm523, %v616, %v620
        %v623 = vshrl.u32 %v519, 16
        %v625 = vrot.slane %v623, 4
        %v626 = vshll.u32 %v519, 16
        %v628 = vrot.slane %v626, 5
        %v629 = vor.u32 %v625, %v628
        %v630 = vrot.slane %v629, 4
        %v632 = vshll.u32 %v520, 16
        %v634 = vrot.slane %v632, 5
        %v635 = vsel %vm523, %v630, %v634
        %s636 = scalar_lea.vmem %s1, 4
        %v637 = vld [vmem:[%s636] sm:$0x3]
        %v638 = vunpack.c.l.b16 %v537
        %v639 = vunpack.c.l.b16 %v551
        %v640 = vunpack.c.l.b16 %v565
        %v641 = vunpack.c.l.b16 %v579
        %v642 = vunpack.c.l.b16 %v593
        %v643 = vunpack.c.l.b16 %v607
        %v644 = vunpack.c.l.b16 %v621
        %v645 = vunpack.c.l.b16 %v635
        %v646 = vpack.c.b16 %v639, %v638
        %v647 = vpack.c.b16 %v641, %v640
        %v648 = vpack.c.b16 %v643, %v642
        %v649 = vpack.c.b16 %v645, %v644
        %v651 = vsel %vm323, %v646, 0
        %v654 = vsel %vm323, %v647, 0
        %v657 = vsel %vm323, %v648, 0
        %v660 = vsel %vm323, %v649, 0
        %v663 = vsel %vm336, %v637, 0
        %665 = vmatprep.subr.bf16.mxu0 0
        %666 = vmatpush1.bf16.msra.mxu0 %v663
        %667 = vmatprep.subr.bf16.mxu0 0
        %668 = vmatpush1.bf16.msra.mxu0 0
        %669 = vmatprep.subr.bf16.mxu0 0
        %670 = vmatpush1.bf16.msra.mxu0 0
        %671 = vmatprep.subr.bf16.mxu0 0
        %672 = vmatpush1.bf16.msra.mxu0 0
        %673 = vmatprep.subr.bf16.mxu0 0
        %674 = vmatpush1.bf16.msra.mxu0 0
        %675 = vmatprep.subr.bf16.mxu0 0
        %676 = vmatpush1.bf16.msra.mxu0 0
        %677 = vmatprep.subr.bf16.mxu0 0
        %678 = vmatpush1.bf16.msra.mxu0 0
        %679 = vmatprep.subr.bf16.mxu0 0
        %680 = vmatpush1.bf16.msra.mxu0 0
        %681 = vmatprep.subr.bf16.mxu0 0
        %682 = vmatpush1.bf16.msra.mxu0 0
        %683 = vmatprep.subr.bf16.mxu0 0
        %684 = vmatpush1.bf16.msra.mxu0 0
        %685 = vmatprep.subr.bf16.mxu0 0
        %686 = vmatpush1.bf16.msra.mxu0 0
        %687 = vmatprep.subr.bf16.mxu0 0
        %688 = vmatpush1.bf16.msra.mxu0 0
        %689 = vmatprep.subr.bf16.mxu0 0
        %690 = vmatpush1.bf16.msra.mxu0 0
        %691 = vmatprep.subr.bf16.mxu0 0
        %692 = vmatpush1.bf16.msra.mxu0 0
        %693 = vmatprep.subr.bf16.mxu0 0
        %694 = vmatpush1.bf16.msra.mxu0 0
        %695 = vmatprep.subr.bf16.mxu0 0
        %696 = vmatpush1.bf16.msra.mxu0 0
        %697 = vmatprep.mubr.bf16.mxu0 0
        %698 = vmatmul.mubr.bf16.gmra.mrb[0].mxu0 %v651
        %v699 = vpop.f32.mrb[0].mxu0
        %v700 = vadd.f32 0.0, %v699
        %v701 = vpop.f32.mrb[0].mxu0
        %v702 = vpop.f32.mrb[0].mxu0
        %v703 = vadd.f32 0.0, %v702
        %v704 = vpop.f32.mrb[0].mxu0
        %705 = vmatprep.mubr.bf16.mxu0 0
        %706 = vmatmul.mubr.bf16.gmra.mrb[0].mxu0 %v654
        %v707 = vpop.f32.mrb[0].mxu0
        %v708 = vadd.f32 0.0, %v707
        %v709 = vpop.f32.mrb[0].mxu0
        %v710 = vpop.f32.mrb[0].mxu0
        %v711 = vadd.f32 0.0, %v710
        %v712 = vpop.f32.mrb[0].mxu0
        %713 = vmatprep.mubr.bf16.mxu0 0
        %714 = vmatmul.mubr.bf16.gmra.mrb[0].mxu0 %v657
        %v715 = vpop.f32.mrb[0].mxu0
        %v716 = vadd.f32 0.0, %v715
        %v717 = vpop.f32.mrb[0].mxu0
        %v718 = vpop.f32.mrb[0].mxu0
        %v719 = vadd.f32 0.0, %v718
        %v720 = vpop.f32.mrb[0].mxu0
        %721 = vmatprep.mubr.bf16.mxu0 0
        %722 = vmatmul.mubr.bf16.gmra.mrb[0].mxu0 %v660
        %v723 = vpop.f32.mrb[0].mxu0
        %v724 = vadd.f32 0.0, %v723
        %v725 = vpop.f32.mrb[0].mxu0
        %v726 = vpop.f32.mrb[0].mxu0
        %v727 = vadd.f32 0.0, %v726
        %v728 = vpop.f32.mrb[0].mxu0
        %729 = vdwg.mxu0
        %v730 = vadd.f32 %v475, %v700
        %v731 = vadd.f32 %v478, %v703
        %v732 = vadd.f32 %v483, %v708
        %v733 = vadd.f32 %v486, %v711
        %v734 = vadd.f32 %v491, %v716
        %v735 = vadd.f32 %v494, %v719
        %v736 = vadd.f32 %v499, %v724
        %v737 = vadd.f32 %v502, %v727
        %s738 = scalar_lea.vmem %s280, 160
        %v739 = vld [vmem:[%s738] sm:$0xf]
        %v740 = vld [vmem:[%s738 + $0x8] sm:$0xf]
        %v741 = vld [vmem:[%s738 + $0x10] sm:$0xf]
        %v742 = vld [vmem:[%s738 + $0x18] sm:$0xf]
        %v743 = vld [vmem:[%s738 + $0x20] sm:$0xf]
        %v744 = vld [vmem:[%s738 + $0x28] sm:$0xf]
        %v745 = vld [vmem:[%s738 + $0x30] sm:$0xf]
        %v746 = vld [vmem:[%s738 + $0x38] sm:$0xf]
        %s747 = scalar_lea.vmem %s1, 6
        %v748 = vld [vmem:[%s747] sm:$0x3]
        %v757 = vunpack.c.l.b16 %v739
        %v758 = vunpack.c.l.b16 %v740
        %v759 = vunpack.c.l.b16 %v741
        %v760 = vunpack.c.l.b16 %v742
        %v761 = vunpack.c.l.b16 %v743
        %v762 = vunpack.c.l.b16 %v744
        %v763 = vunpack.c.l.b16 %v745
        %v764 = vunpack.c.l.b16 %v746
        %v765 = vpack.c.b16 %v758, %v757
        %v766 = vpack.c.b16 %v760, %v759
        %v767 = vpack.c.b16 %v762, %v761
        %v768 = vpack.c.b16 %v764, %v763
        %v770 = vsel %vm323, %v765, 0
        %v773 = vsel %vm323, %v766, 0
        %v776 = vsel %vm323, %v767, 0
        %v779 = vsel %vm323, %v768, 0
        %v782 = vsel %vm336, %v748, 0
        %784 = vmatprep.subr.bf16.mxu0 0
        %785 = vmatpush1.bf16.msra.mxu0 %v782
        %786 = vmatprep.subr.bf16.mxu0 0
        %787 = vmatpush1.bf16.msra.mxu0 0
        %788 = vmatprep.subr.bf16.mxu0 0
        %789 = vmatpush1.bf16.msra.mxu0 0
        %790 = vmatprep.subr.bf16.mxu0 0
        %791 = vmatpush1.bf16.msra.mxu0 0
        %792 = vmatprep.subr.bf16.mxu0 0
        %793 = vmatpush1.bf16.msra.mxu0 0
        %794 = vmatprep.subr.bf16.mxu0 0
        %795 = vmatpush1.bf16.msra.mxu0 0
        %796 = vmatprep.subr.bf16.mxu0 0
        %797 = vmatpush1.bf16.msra.mxu0 0
        %798 = vmatprep.subr.bf16.mxu0 0
        %799 = vmatpush1.bf16.msra.mxu0 0
        %800 = vmatprep.subr.bf16.mxu0 0
        %801 = vmatpush1.bf16.msra.mxu0 0
        %802 = vmatprep.subr.bf16.mxu0 0
        %803 = vmatpush1.bf16.msra.mxu0 0
        %804 = vmatprep.subr.bf16.mxu0 0
        %805 = vmatpush1.bf16.msra.mxu0 0
        %806 = vmatprep.subr.bf16.mxu0 0
        %807 = vmatpush1.bf16.msra.mxu0 0
        %808 = vmatprep.subr.bf16.mxu0 0
        %809 = vmatpush1.bf16.msra.mxu0 0
        %810 = vmatprep.subr.bf16.mxu0 0
        %811 = vmatpush1.bf16.msra.mxu0 0
        %812 = vmatprep.subr.bf16.mxu0 0
        %813 = vmatpush1.bf16.msra.mxu0 0
        %814 = vmatprep.subr.bf16.mxu0 0
        %815 = vmatpush1.bf16.msra.mxu0 0
        %816 = vmatprep.mubr.bf16.mxu0 0
        %817 = vmatmul.mubr.bf16.gmra.mrb[0].mxu0 %v770
        %v818 = vpop.f32.mrb[0].mxu0
        %v819 = vadd.f32 0.0, %v818
        %v820 = vpop.f32.mrb[0].mxu0
        %v821 = vpop.f32.mrb[0].mxu0
        %v822 = vadd.f32 0.0, %v821
        %v823 = vpop.f32.mrb[0].mxu0
        %824 = vmatprep.mubr.bf16.mxu0 0
        %825 = vmatmul.mubr.bf16.gmra.mrb[0].mxu0 %v773
        %v826 = vpop.f32.mrb[0].mxu0
        %v827 = vadd.f32 0.0, %v826
        %v828 = vpop.f32.mrb[0].mxu0
        %v829 = vpop.f32.mrb[0].mxu0
        %v830 = vadd.f32 0.0, %v829
        %v831 = vpop.f32.mrb[0].mxu0
        %832 = vmatprep.mubr.bf16.mxu0 0
        %833 = vmatmul.mubr.bf16.gmra.mrb[0].mxu0 %v776
        %v834 = vpop.f32.mrb[0].mxu0
        %v835 = vadd.f32 0.0, %v834
        %v836 = vpop.f32.mrb[0].mxu0
        %v837 = vpop.f32.mrb[0].mxu0
        %v838 = vadd.f32 0.0, %v837
        %v839 = vpop.f32.mrb[0].mxu0
        %840 = vmatprep.mubr.bf16.mxu0 0
        %841 = vmatmul.mubr.bf16.gmra.mrb[0].mxu0 %v779
        %v842 = vpop.f32.mrb[0].mxu0
        %v843 = vadd.f32 0.0, %v842
        %v844 = vpop.f32.mrb[0].mxu0
        %v845 = vpop.f32.mrb[0].mxu0
        %v846 = vadd.f32 0.0, %v845
        %v847 = vpop.f32.mrb[0].mxu0
        %848 = vdwg.mxu0
        %v849 = vadd.f32 %v730, %v819
        %v850 = vadd.f32 %v731, %v822
        %v851 = vadd.f32 %v732, %v827
        %v852 = vadd.f32 %v733, %v830
        %v853 = vadd.f32 %v734, %v835
        %v854 = vadd.f32 %v735, %v838
        %v855 = vadd.f32 %v736, %v843
        %v856 = vadd.f32 %v737, %v846
        %s857 = scalar_lea.vmem %s280, 240
        %v858 = vld [vmem:[%s857] sm:$0xf]
        %v859 = vld [vmem:[%s857 + $0x8] sm:$0xf]
        %v860 = vld [vmem:[%s857 + $0x10] sm:$0xf]
        %v861 = vld [vmem:[%s857 + $0x18] sm:$0xf]
        %v862 = vld [vmem:[%s857 + $0x20] sm:$0xf]
        %v863 = vld [vmem:[%s857 + $0x28] sm:$0xf]
        %v864 = vld [vmem:[%s857 + $0x30] sm:$0xf]
        %v865 = vld [vmem:[%s857 + $0x38] sm:$0xf]
        %s866 = scalar_lea.vmem %s1, 8
        %v867 = vld [vmem:[%s866] sm:$0x3]
        %v876 = vunpack.c.l.b16 %v858
        %v877 = vunpack.c.l.b16 %v859
        %v878 = vunpack.c.l.b16 %v860
        %v879 = vunpack.c.l.b16 %v861
        %v880 = vunpack.c.l.b16 %v862
        %v881 = vunpack.c.l.b16 %v863
        %v882 = vunpack.c.l.b16 %v864
        %v883 = vunpack.c.l.b16 %v865
        %v884 = vpack.c.b16 %v877, %v876
        %v885 = vpack.c.b16 %v879, %v878
        %v886 = vpack.c.b16 %v881, %v880
        %v887 = vpack.c.b16 %v883, %v882
        %v889 = vsel %vm323, %v884, 0
        %v892 = vsel %vm323, %v885, 0
        %v895 = vsel %vm323, %v886, 0
        %v898 = vsel %vm323, %v887, 0
        %v901 = vsel %vm336, %v867, 0
        %903 = vmatprep.subr.bf16.mxu0 0
        %904 = vmatpush1.bf16.msra.mxu0 %v901
        %905 = vmatprep.subr.bf16.mxu0 0
        %906 = vmatpush1.bf16.msra.mxu0 0
        %907 = vmatprep.subr.bf16.mxu0 0
        %908 = vmatpush1.bf16.msra.mxu0 0
        %909 = vmatprep.subr.bf16.mxu0 0
        %910 = vmatpush1.bf16.msra.mxu0 0
        %911 = vmatprep.subr.bf16.mxu0 0
        %912 = vmatpush1.bf16.msra.mxu0 0
        %913 = vmatprep.subr.bf16.mxu0 0
        %914 = vmatpush1.bf16.msra.mxu0 0
        %915 = vmatprep.subr.bf16.mxu0 0
        %916 = vmatpush1.bf16.msra.mxu0 0
        %917 = vmatprep.subr.bf16.mxu0 0
        %918 = vmatpush1.bf16.msra.mxu0 0
        %919 = vmatprep.subr.bf16.mxu0 0
        %920 = vmatpush1.bf16.msra.mxu0 0
        %921 = vmatprep.subr.bf16.mxu0 0
        %922 = vmatpush1.bf16.msra.mxu0 0
        %923 = vmatprep.subr.bf16.mxu0 0
        %924 = vmatpush1.bf16.msra.mxu0 0
        %925 = vmatprep.subr.bf16.mxu0 0
        %926 = vmatpush1.bf16.msra.mxu0 0
        %927 = vmatprep.subr.bf16.mxu0 0
        %928 = vmatpush1.bf16.msra.mxu0 0
        %929 = vmatprep.subr.bf16.mxu0 0
        %930 = vmatpush1.bf16.msra.mxu0 0
        %931 = vmatprep.subr.bf16.mxu0 0
        %932 = vmatpush1.bf16.msra.mxu0 0
        %933 = vmatprep.subr.bf16.mxu0 0
        %934 = vmatpush1.bf16.msra.mxu0 0
        %935 = vmatprep.mubr.bf16.mxu0 0
        %936 = vmatmul.mubr.bf16.gmra.mrb[0].mxu0 %v889
        %v937 = vpop.f32.mrb[0].mxu0
        %v938 = vadd.f32 0.0, %v937
        %v939 = vpop.f32.mrb[0].mxu0
        %v940 = vpop.f32.mrb[0].mxu0
        %v941 = vadd.f32 0.0, %v940
        %v942 = vpop.f32.mrb[0].mxu0
        %943 = vmatprep.mubr.bf16.mxu0 0
        %944 = vmatmul.mubr.bf16.gmra.mrb[0].mxu0 %v892
        %v945 = vpop.f32.mrb[0].mxu0
        %v946 = vadd.f32 0.0, %v945
        %v947 = vpop.f32.mrb[0].mxu0
        %v948 = vpop.f32.mrb[0].mxu0
        %v949 = vadd.f32 0.0, %v948
        %v950 = vpop.f32.mrb[0].mxu0
        %951 = vmatprep.mubr.bf16.mxu0 0
        %952 = vmatmul.mubr.bf16.gmra.mrb[0].mxu0 %v895
        %v953 = vpop.f32.mrb[0].mxu0
        %v954 = vadd.f32 0.0, %v953
        %v955 = vpop.f32.mrb[0].mxu0
        %v956 = vpop.f32.mrb[0].mxu0
        %v957 = vadd.f32 0.0, %v956
        %v958 = vpop.f32.mrb[0].mxu0
        %959 = vmatprep.mubr.bf16.mxu0 0
        %960 = vmatmul.mubr.bf16.gmra.mrb[0].mxu0 %v898
        %v961 = vpop.f32.mrb[0].mxu0
        %v962 = vadd.f32 0.0, %v961
        %v963 = vpop.f32.mrb[0].mxu0
        %v964 = vpop.f32.mrb[0].mxu0
        %v965 = vadd.f32 0.0, %v964
        %v966 = vpop.f32.mrb[0].mxu0
        %967 = vdwg.mxu0
        %v968 = vadd.f32 %v849, %v938
        %v969 = vadd.f32 %v850, %v941
        %v970 = vadd.f32 %v851, %v946
        %v971 = vadd.f32 %v852, %v949
        %v972 = vadd.f32 %v853, %v954
        %v973 = vadd.f32 %v854, %v957
        %v974 = vadd.f32 %v855, %v962
        %v975 = vadd.f32 %v856, %v965
        %v976 = vld [vmem:[%s738] sm:$0xf]
        %v977 = vld [vmem:[%s738 + $0x4] sm:$0x1]
        %v978 = vld [vmem:[%s738 + $0x8] sm:$0xf]
        %v979 = vld [vmem:[%s738 + $0xc] sm:$0x1]
        %v980 = vld [vmem:[%s738 + $0x10] sm:$0xf]
        %v981 = vld [vmem:[%s738 + $0x14] sm:$0x1]
        %v982 = vld [vmem:[%s738 + $0x18] sm:$0xf]
        %v983 = vld [vmem:[%s738 + $0x1c] sm:$0x1]
        %v984 = vld [vmem:[%s738 + $0x20] sm:$0xf]
        %v985 = vld [vmem:[%s738 + $0x24] sm:$0x1]
        %v986 = vld [vmem:[%s738 + $0x28] sm:$0xf]
        %v987 = vld [vmem:[%s738 + $0x2c] sm:$0x1]
        %v988 = vld [vmem:[%s738 + $0x30] sm:$0xf]
        %v989 = vld [vmem:[%s738 + $0x34] sm:$0x1]
        %v990 = vld [vmem:[%s738 + $0x38] sm:$0xf]
        %v991 = vld [vmem:[%s738 + $0x3c] sm:$0x1]
        %v993 = vshrl.u32 %v976, 16
        %v995 = vrot.slane %v993, 4
        %v996 = vshll.u32 %v976, 16
        %v998 = vrot.slane %v996, 5
        %v999 = vor.u32 %v995, %v998
        %v1000 = vrot.slane %v999, 4
        %v1002 = vshll.u32 %v977, 16
        %v1004 = vrot.slane %v1002, 5
        %v1005 = vsel %vm523, %v1000, %v1004
        %v1007 = vshrl.u32 %v978, 16
        %v1009 = vrot.slane %v1007, 4
        %v1010 = vshll.u32 %v978, 16
        %v1012 = vrot.slane %v1010, 5
        %v1013 = vor.u32 %v1009, %v1012
        %v1014 = vrot.slane %v1013, 4
        %v1016 = vshll.u32 %v979, 16
        %v1018 = vrot.slane %v1016, 5
        %v1019 = vsel %vm523, %v1014, %v1018
        %v1021 = vshrl.u32 %v980, 16
        %v1023 = vrot.slane %v1021, 4
        %v1024 = vshll.u32 %v980, 16
        %v1026 = vrot.slane %v1024, 5
        %v1027 = vor.u32 %v1023, %v1026
        %v1028 = vrot.slane %v1027, 4
        %v1030 = vshll.u32 %v981, 16
        %v1032 = vrot.slane %v1030, 5
        %v1033 = vsel %vm523, %v1028, %v1032
        %v1035 = vshrl.u32 %v982, 16
        %v1037 = vrot.slane %v1035, 4
        %v1038 = vshll.u32 %v982, 16
        %v1040 = vrot.slane %v1038, 5
        %v1041 = vor.u32 %v1037, %v1040
        %v1042 = vrot.slane %v1041, 4
        %v1044 = vshll.u32 %v983, 16
        %v1046 = vrot.slane %v1044, 5
        %v1047 = vsel %vm523, %v1042, %v1046
        %v1049 = vshrl.u32 %v984, 16
        %v1051 = vrot.slane %v1049, 4
        %v1052 = vshll.u32 %v984, 16
        %v1054 = vrot.slane %v1052, 5
        %v1055 = vor.u32 %v1051, %v1054
        %v1056 = vrot.slane %v1055, 4
        %v1058 = vshll.u32 %v985, 16
        %v1060 = vrot.slane %v1058, 5
        %v1061 = vsel %vm523, %v1056, %v1060
        %v1063 = vshrl.u32 %v986, 16
        %v1065 = vrot.slane %v1063, 4
        %v1066 = vshll.u32 %v986, 16
        %v1068 = vrot.slane %v1066, 5
        %v1069 = vor.u32 %v1065, %v1068
        %v1070 = vrot.slane %v1069, 4
        %v1072 = vshll.u32 %v987, 16
        %v1074 = vrot.slane %v1072, 5
        %v1075 = vsel %vm523, %v1070, %v1074
        %v1077 = vshrl.u32 %v988, 16
        %v1079 = vrot.slane %v1077, 4
        %v1080 = vshll.u32 %v988, 16
        %v1082 = vrot.slane %v1080, 5
        %v1083 = vor.u32 %v1079, %v1082
        %v1084 = vrot.slane %v1083, 4
        %v1086 = vshll.u32 %v989, 16
        %v1088 = vrot.slane %v1086, 5
        %v1089 = vsel %vm523, %v1084, %v1088
        %v1091 = vshrl.u32 %v990, 16
        %v1093 = vrot.slane %v1091, 4
        %v1094 = vshll.u32 %v990, 16
        %v1096 = vrot.slane %v1094, 5
        %v1097 = vor.u32 %v1093, %v1096
        %v1098 = vrot.slane %v1097, 4
        %v1100 = vshll.u32 %v991, 16
        %v1102 = vrot.slane %v1100, 5
        %v1103 = vsel %vm523, %v1098, %v1102
        %s1104 = scalar_lea.vmem %s1, 10
        %v1105 = vld [vmem:[%s1104] sm:$0x3]
        %v1106 = vunpack.c.l.b16 %v1005
        %v1107 = vunpack.c.l.b16 %v1019
        %v1108 = vunpack.c.l.b16 %v1033
        %v1109 = vunpack.c.l.b16 %v1047
        %v1110 = vunpack.c.l.b16 %v1061
        %v1111 = vunpack.c.l.b16 %v1075
        %v1112 = vunpack.c.l.b16 %v1089
        %v1113 = vunpack.c.l.b16 %v1103
        %v1114 = vpack.c.b16 %v1107, %v1106
        %v1115 = vpack.c.b16 %v1109, %v1108
        %v1116 = vpack.c.b16 %v1111, %v1110
        %v1117 = vpack.c.b16 %v1113, %v1112
        %v1119 = vsel %vm323, %v1114, 0
        %v1122 = vsel %vm323, %v1115, 0
        %v1125 = vsel %vm323, %v1116, 0
        %v1128 = vsel %vm323, %v1117, 0
        %v1131 = vsel %vm336, %v1105, 0
        %1133 = vmatprep.subr.bf16.mxu0 0
        %1134 = vmatpush1.bf16.msra.mxu0 %v1131
        %1135 = vmatprep.subr.bf16.mxu0 0
        %1136 = vmatpush1.bf16.msra.mxu0 0
        %1137 = vmatprep.subr.bf16.mxu0 0
        %1138 = vmatpush1.bf16.msra.mxu0 0
        %1139 = vmatprep.subr.bf16.mxu0 0
        %1140 = vmatpush1.bf16.msra.mxu0 0
        %1141 = vmatprep.subr.bf16.mxu0 0
        %1142 = vmatpush1.bf16.msra.mxu0 0
        %1143 = vmatprep.subr.bf16.mxu0 0
        %1144 = vmatpush1.bf16.msra.mxu0 0
        %1145 = vmatprep.subr.bf16.mxu0 0
        %1146 = vmatpush1.bf16.msra.mxu0 0
        %1147 = vmatprep.subr.bf16.mxu0 0
        %1148 = vmatpush1.bf16.msra.mxu0 0
        %1149 = vmatprep.subr.bf16.mxu0 0
        %1150 = vmatpush1.bf16.msra.mxu0 0
        %1151 = vmatprep.subr.bf16.mxu0 0
        %1152 = vmatpush1.bf16.msra.mxu0 0
        %1153 = vmatprep.subr.bf16.mxu0 0
        %1154 = vmatpush1.bf16.msra.mxu0 0
        %1155 = vmatprep.subr.bf16.mxu0 0
        %1156 = vmatpush1.bf16.msra.mxu0 0
        %1157 = vmatprep.subr.bf16.mxu0 0
        %1158 = vmatpush1.bf16.msra.mxu0 0
        %1159 = vmatprep.subr.bf16.mxu0 0
        %1160 = vmatpush1.bf16.msra.mxu0 0
        %1161 = vmatprep.subr.bf16.mxu0 0
        %1162 = vmatpush1.bf16.msra.mxu0 0
        %1163 = vmatprep.subr.bf16.mxu0 0
        %1164 = vmatpush1.bf16.msra.mxu0 0
        %1165 = vmatprep.mubr.bf16.mxu0 0
        %1166 = vmatmul.mubr.bf16.gmra.mrb[0].mxu0 %v1119
        %v1167 = vpop.f32.mrb[0].mxu0
        %v1168 = vadd.f32 0.0, %v1167
        %v1169 = vpop.f32.mrb[0].mxu0
        %v1170 = vpop.f32.mrb[0].mxu0
        %v1171 = vadd.f32 0.0, %v1170
        %v1172 = vpop.f32.mrb[0].mxu0
        %1173 = vmatprep.mubr.bf16.mxu0 0
        %1174 = vmatmul.mubr.bf16.gmra.mrb[0].mxu0 %v1122
        %v1175 = vpop.f32.mrb[0].mxu0
        %v1176 = vadd.f32 0.0, %v1175
        %v1177 = vpop.f32.mrb[0].mxu0
        %v1178 = vpop.f32.mrb[0].mxu0
        %v1179 = vadd.f32 0.0, %v1178
        %v1180 = vpop.f32.mrb[0].mxu0
        %1181 = vmatprep.mubr.bf16.mxu0 0
        %1182 = vmatmul.mubr.bf16.gmra.mrb[0].mxu0 %v1125
        %v1183 = vpop.f32.mrb[0].mxu0
        %v1184 = vadd.f32 0.0, %v1183
        %v1185 = vpop.f32.mrb[0].mxu0
        %v1186 = vpop.f32.mrb[0].mxu0
        %v1187 = vadd.f32 0.0, %v1186
        %v1188 = vpop.f32.mrb[0].mxu0
        %1189 = vmatprep.mubr.bf16.mxu0 0
        %1190 = vmatmul.mubr.bf16.gmra.mrb[0].mxu0 %v1128
        %v1191 = vpop.f32.mrb[0].mxu0
        %v1192 = vadd.f32 0.0, %v1191
        %v1193 = vpop.f32.mrb[0].mxu0
        %v1194 = vpop.f32.mrb[0].mxu0
        %v1195 = vadd.f32 0.0, %v1194
        %v1196 = vpop.f32.mrb[0].mxu0
        %1197 = vdwg.mxu0
        %v1198 = vadd.f32 %v968, %v1168
        %v1199 = vadd.f32 %v969, %v1171
        %v1200 = vadd.f32 %v970, %v1176
        %v1201 = vadd.f32 %v971, %v1179
        %v1202 = vadd.f32 %v972, %v1184
        %v1203 = vadd.f32 %v973, %v1187
        %v1204 = vadd.f32 %v974, %v1192
        %v1205 = vadd.f32 %v975, %v1195
        %s1206 = scalar_lea.vmem %s280, 8
        %v1207 = vld [vmem:[%s1206] sm:$0xf]
        %v1208 = vld [vmem:[%s1206 + $0x8] sm:$0xf]
        %v1209 = vld [vmem:[%s1206 + $0x10] sm:$0xf]
        %v1210 = vld [vmem:[%s1206 + $0x18] sm:$0xf]
        %v1211 = vld [vmem:[%s1206 + $0x20] sm:$0xf]
        %v1212 = vld [vmem:[%s1206 + $0x28] sm:$0xf]
        %v1213 = vld [vmem:[%s1206 + $0x30] sm:$0xf]
        %v1214 = vld [vmem:[%s1206 + $0x38] sm:$0xf]
        %s1215 = scalar_lea.vmem %s1, 12
        %v1216 = vld [vmem:[%s1215] sm:$0x3]
        %v1225 = vunpack.c.l.b16 %v1207
        %v1226 = vunpack.c.l.b16 %v1208
        %v1227 = vunpack.c.l.b16 %v1209
        %v1228 = vunpack.c.l.b16 %v1210
        %v1229 = vunpack.c.l.b16 %v1211
        %v1230 = vunpack.c.l.b16 %v1212
        %v1231 = vunpack.c.l.b16 %v1213
        %v1232 = vunpack.c.l.b16 %v1214
        %v1233 = vpack.c.b16 %v1226, %v1225
        %v1234 = vpack.c.b16 %v1228, %v1227
        %v1235 = vpack.c.b16 %v1230, %v1229
        %v1236 = vpack.c.b16 %v1232, %v1231
        %v1238 = vsel %vm323, %v1233, 0
        %v1241 = vsel %vm323, %v1234, 0
        %v1244 = vsel %vm323, %v1235, 0
        %v1247 = vsel %vm323, %v1236, 0
        %v1250 = vsel %vm336, %v1216, 0
        %1252 = vmatprep.subr.bf16.mxu0 0
        %1253 = vmatpush1.bf16.msra.mxu0 %v1250
        %1254 = vmatprep.subr.bf16.mxu0 0
        %1255 = vmatpush1.bf16.msra.mxu0 0
        %1256 = vmatprep.subr.bf16.mxu0 0
        %1257 = vmatpush1.bf16.msra.mxu0 0
        %1258 = vmatprep.subr.bf16.mxu0 0
        %1259 = vmatpush1.bf16.msra.mxu0 0
        %1260 = vmatprep.subr.bf16.mxu0 0
        %1261 = vmatpush1.bf16.msra.mxu0 0
        %1262 = vmatprep.subr.bf16.mxu0 0
        %1263 = vmatpush1.bf16.msra.mxu0 0
        %1264 = vmatprep.subr.bf16.mxu0 0
        %1265 = vmatpush1.bf16.msra.mxu0 0
        %1266 = vmatprep.subr.bf16.mxu0 0
        %1267 = vmatpush1.bf16.msra.mxu0 0
        %1268 = vmatprep.subr.bf16.mxu0 0
        %1269 = vmatpush1.bf16.msra.mxu0 0
        %1270 = vmatprep.subr.bf16.mxu0 0
        %1271 = vmatpush1.bf16.msra.mxu0 0
        %1272 = vmatprep.subr.bf16.mxu0 0
        %1273 = vmatpush1.bf16.msra.mxu0 0
        %1274 = vmatprep.subr.bf16.mxu0 0
        %1275 = vmatpush1.bf16.msra.mxu0 0
        %1276 = vmatprep.subr.bf16.mxu0 0
        %1277 = vmatpush1.bf16.msra.mxu0 0
        %1278 = vmatprep.subr.bf16.mxu0 0
        %1279 = vmatpush1.bf16.msra.mxu0 0
        %1280 = vmatprep.subr.bf16.mxu0 0
        %1281 = vmatpush1.bf16.msra.mxu0 0
        %1282 = vmatprep.subr.bf16.mxu0 0
        %1283 = vmatpush1.bf16.msra.mxu0 0
        %1284 = vmatprep.mubr.bf16.mxu0 0
        %1285 = vmatmul.mubr.bf16.gmra.mrb[0].mxu0 %v1238
        %v1286 = vpop.f32.mrb[0].mxu0
        %v1287 = vadd.f32 0.0, %v1286
        %v1288 = vpop.f32.mrb[0].mxu0
        %v1289 = vpop.f32.mrb[0].mxu0
        %v1290 = vadd.f32 0.0, %v1289
        %v1291 = vpop.f32.mrb[0].mxu0
        %1292 = vmatprep.mubr.bf16.mxu0 0
        %1293 = vmatmul.mubr.bf16.gmra.mrb[0].mxu0 %v1241
        %v1294 = vpop.f32.mrb[0].mxu0
        %v1295 = vadd.f32 0.0, %v1294
        %v1296 = vpop.f32.mrb[0].mxu0
        %v1297 = vpop.f32.mrb[0].mxu0
        %v1298 = vadd.f32 0.0, %v1297
        %v1299 = vpop.f32.mrb[0].mxu0
        %1300 = vmatprep.mubr.bf16.mxu0 0
        %1301 = vmatmul.mubr.bf16.gmra.mrb[0].mxu0 %v1244
        %v1302 = vpop.f32.mrb[0].mxu0
        %v1303 = vadd.f32 0.0, %v1302
        %v1304 = vpop.f32.mrb[0].mxu0
        %v1305 = vpop.f32.mrb[0].mxu0
        %v1306 = vadd.f32 0.0, %v1305
        %v1307 = vpop.f32.mrb[0].mxu0
        %1308 = vmatprep.mubr.bf16.mxu0 0
        %1309 = vmatmul.mubr.bf16.gmra.mrb[0].mxu0 %v1247
        %v1310 = vpop.f32.mrb[0].mxu0
        %v1311 = vadd.f32 0.0, %v1310
        %v1312 = vpop.f32.mrb[0].mxu0
        %v1313 = vpop.f32.mrb[0].mxu0
        %v1314 = vadd.f32 0.0, %v1313
        %v1315 = vpop.f32.mrb[0].mxu0
        %1316 = vdwg.mxu0
        %v1317 = vadd.f32 %v1198, %v1287
        %v1318 = vadd.f32 %v1199, %v1290
        %v1319 = vadd.f32 %v1200, %v1295
        %v1320 = vadd.f32 %v1201, %v1298
        %v1321 = vadd.f32 %v1202, %v1303
        %v1322 = vadd.f32 %v1203, %v1306
        %v1323 = vadd.f32 %v1204, %v1311
        %v1324 = vadd.f32 %v1205, %v1314
        %s1325 = scalar_lea.vmem %s280, 88
        %v1326 = vld [vmem:[%s1325] sm:$0xf]
        %v1327 = vld [vmem:[%s1325 + $0x8] sm:$0xf]
        %v1328 = vld [vmem:[%s1325 + $0x10] sm:$0xf]
        %v1329 = vld [vmem:[%s1325 + $0x18] sm:$0xf]
        %v1330 = vld [vmem:[%s1325 + $0x20] sm:$0xf]
        %v1331 = vld [vmem:[%s1325 + $0x28] sm:$0xf]
        %v1332 = vld [vmem:[%s1325 + $0x30] sm:$0xf]
        %v1333 = vld [vmem:[%s1325 + $0x38] sm:$0xf]
        %s1334 = scalar_lea.vmem %s1, 14
        %v1335 = vld [vmem:[%s1334] sm:$0x3]
        %v1344 = vunpack.c.l.b16 %v1326
        %v1345 = vunpack.c.l.b16 %v1327
        %v1346 = vunpack.c.l.b16 %v1328
        %v1347 = vunpack.c.l.b16 %v1329
        %v1348 = vunpack.c.l.b16 %v1330
        %v1349 = vunpack.c.l.b16 %v1331
        %v1350 = vunpack.c.l.b16 %v1332
        %v1351 = vunpack.c.l.b16 %v1333
        %v1352 = vpack.c.b16 %v1345, %v1344
        %v1353 = vpack.c.b16 %v1347, %v1346
        %v1354 = vpack.c.b16 %v1349, %v1348
        %v1355 = vpack.c.b16 %v1351, %v1350
        %v1357 = vsel %vm323, %v1352, 0
        %v1360 = vsel %vm323, %v1353, 0
        %v1363 = vsel %vm323, %v1354, 0
        %v1366 = vsel %vm323, %v1355, 0
        %v1369 = vsel %vm336, %v1335, 0
        %1371 = vmatprep.subr.bf16.mxu0 0
        %1372 = vmatpush1.bf16.msra.mxu0 %v1369
        %1373 = vmatprep.subr.bf16.mxu0 0
        %1374 = vmatpush1.bf16.msra.mxu0 0
        %1375 = vmatprep.subr.bf16.mxu0 0
        %1376 = vmatpush1.bf16.msra.mxu0 0
        %1377 = vmatprep.subr.bf16.mxu0 0
        %1378 = vmatpush1.bf16.msra.mxu0 0
        %1379 = vmatprep.subr.bf16.mxu0 0
        %1380 = vmatpush1.bf16.msra.mxu0 0
        %1381 = vmatprep.subr.bf16.mxu0 0
        %1382 = vmatpush1.bf16.msra.mxu0 0
        %1383 = vmatprep.subr.bf16.mxu0 0
        %1384 = vmatpush1.bf16.msra.mxu0 0
        %1385 = vmatprep.subr.bf16.mxu0 0
        %1386 = vmatpush1.bf16.msra.mxu0 0
        %1387 = vmatprep.subr.bf16.mxu0 0
        %1388 = vmatpush1.bf16.msra.mxu0 0
        %1389 = vmatprep.subr.bf16.mxu0 0
        %1390 = vmatpush1.bf16.msra.mxu0 0
        %1391 = vmatprep.subr.bf16.mxu0 0
        %1392 = vmatpush1.bf16.msra.mxu0 0
        %1393 = vmatprep.subr.bf16.mxu0 0
        %1394 = vmatpush1.bf16.msra.mxu0 0
        %1395 = vmatprep.subr.bf16.mxu0 0
        %1396 = vmatpush1.bf16.msra.mxu0 0
        %1397 = vmatprep.subr.bf16.mxu0 0
        %1398 = vmatpush1.bf16.msra.mxu0 0
        %1399 = vmatprep.subr.bf16.mxu0 0
        %1400 = vmatpush1.bf16.msra.mxu0 0
        %1401 = vmatprep.subr.bf16.mxu0 0
        %1402 = vmatpush1.bf16.msra.mxu0 0
        %1403 = vmatprep.mubr.bf16.mxu0 0
        %1404 = vmatmul.mubr.bf16.gmra.mrb[0].mxu0 %v1357
        %v1405 = vpop.f32.mrb[0].mxu0
        %v1406 = vadd.f32 0.0, %v1405
        %v1407 = vpop.f32.mrb[0].mxu0
        %v1408 = vpop.f32.mrb[0].mxu0
        %v1409 = vadd.f32 0.0, %v1408
        %v1410 = vpop.f32.mrb[0].mxu0
        %1411 = vmatprep.mubr.bf16.mxu0 0
        %1412 = vmatmul.mubr.bf16.gmra.mrb[0].mxu0 %v1360
        %v1413 = vpop.f32.mrb[0].mxu0
        %v1414 = vadd.f32 0.0, %v1413
        %v1415 = vpop.f32.mrb[0].mxu0
        %v1416 = vpop.f32.mrb[0].mxu0
        %v1417 = vadd.f32 0.0, %v1416
        %v1418 = vpop.f32.mrb[0].mxu0
        %1419 = vmatprep.mubr.bf16.mxu0 0
        %1420 = vmatmul.mubr.bf16.gmra.mrb[0].mxu0 %v1363
        %v1421 = vpop.f32.mrb[0].mxu0
        %v1422 = vadd.f32 0.0, %v1421
        %v1423 = vpop.f32.mrb[0].mxu0
        %v1424 = vpop.f32.mrb[0].mxu0
        %v1425 = vadd.f32 0.0, %v1424
        %v1426 = vpop.f32.mrb[0].mxu0
        %1427 = vmatprep.mubr.bf16.mxu0 0
        %1428 = vmatmul.mubr.bf16.gmra.mrb[0].mxu0 %v1366
        %v1429 = vpop.f32.mrb[0].mxu0
        %v1430 = vadd.f32 0.0, %v1429
        %v1431 = vpop.f32.mrb[0].mxu0
        %v1432 = vpop.f32.mrb[0].mxu0
        %v1433 = vadd.f32 0.0, %v1432
        %v1434 = vpop.f32.mrb[0].mxu0
        %1435 = vdwg.mxu0
        %v1436 = vadd.f32 %v1317, %v1406
        %v1437 = vadd.f32 %v1318, %v1409
        %v1438 = vadd.f32 %v1319, %v1414
        %v1439 = vadd.f32 %v1320, %v1417
        %v1440 = vadd.f32 %v1321, %v1422
        %v1441 = vadd.f32 %v1322, %v1425
        %v1442 = vadd.f32 %v1323, %v1430
        %v1443 = vadd.f32 %v1324, %v1433
        %v1444 = vld [vmem:[%s1206] sm:$0xf]
        %v1445 = vld [vmem:[%s1206 + $0x4] sm:$0x1]
        %v1446 = vld [vmem:[%s1206 + $0x8] sm:$0xf]
        %v1447 = vld [vmem:[%s1206 + $0xc] sm:$0x1]
        %v1448 = vld [vmem:[%s1206 + $0x10] sm:$0xf]
        %v1449 = vld [vmem:[%s1206 + $0x14] sm:$0x1]
        %v1450 = vld [vmem:[%s1206 + $0x18] sm:$0xf]
        %v1451 = vld [vmem:[%s1206 + $0x1c] sm:$0x1]
        %v1452 = vld [vmem:[%s1206 + $0x20] sm:$0xf]
        %v1453 = vld [vmem:[%s1206 + $0x24] sm:$0x1]
        %v1454 = vld [vmem:[%s1206 + $0x28] sm:$0xf]
        %v1455 = vld [vmem:[%s1206 + $0x2c] sm:$0x1]
        %v1456 = vld [vmem:[%s1206 + $0x30] sm:$0xf]
        %v1457 = vld [vmem:[%s1206 + $0x34] sm:$0x1]
        %v1458 = vld [vmem:[%s1206 + $0x38] sm:$0xf]
        %v1459 = vld [vmem:[%s1206 + $0x3c] sm:$0x1]
        %v1461 = vshrl.u32 %v1444, 16
        %v1463 = vrot.slane %v1461, 4
        %v1464 = vshll.u32 %v1444, 16
        %v1466 = vrot.slane %v1464, 5
        %v1467 = vor.u32 %v1463, %v1466
        %v1468 = vrot.slane %v1467, 4
        %v1470 = vshll.u32 %v1445, 16
        %v1472 = vrot.slane %v1470, 5
        %v1473 = vsel %vm523, %v1468, %v1472
        %v1475 = vshrl.u32 %v1446, 16
        %v1477 = vrot.slane %v1475, 4
        %v1478 = vshll.u32 %v1446, 16
        %v1480 = vrot.slane %v1478, 5
        %v1481 = vor.u32 %v1477, %v1480
        %v1482 = vrot.slane %v1481, 4
        %v1484 = vshll.u32 %v1447, 16
        %v1486 = vrot.slane %v1484, 5
        %v1487 = vsel %vm523, %v1482, %v1486
        %v1489 = vshrl.u32 %v1448, 16
        %v1491 = vrot.slane %v1489, 4
        %v1492 = vshll.u32 %v1448, 16
        %v1494 = vrot.slane %v1492, 5
        %v1495 = vor.u32 %v1491, %v1494
        %v1496 = vrot.slane %v1495, 4
        %v1498 = vshll.u32 %v1449, 16
        %v1500 = vrot.slane %v1498, 5
        %v1501 = vsel %vm523, %v1496, %v1500
        %v1503 = vshrl.u32 %v1450, 16
        %v1505 = vrot.slane %v1503, 4
        %v1506 = vshll.u32 %v1450, 16
        %v1508 = vrot.slane %v1506, 5
        %v1509 = vor.u32 %v1505, %v1508
        %v1510 = vrot.slane %v1509, 4
        %v1512 = vshll.u32 %v1451, 16
        %v1514 = vrot.slane %v1512, 5
        %v1515 = vsel %vm523, %v1510, %v1514
        %v1517 = vshrl.u32 %v1452, 16
        %v1519 = vrot.slane %v1517, 4
        %v1520 = vshll.u32 %v1452, 16
        %v1522 = vrot.slane %v1520, 5
        %v1523 = vor.u32 %v1519, %v1522
        %v1524 = vrot.slane %v1523, 4
        %v1526 = vshll.u32 %v1453, 16
        %v1528 = vrot.slane %v1526, 5
        %v1529 = vsel %vm523, %v1524, %v1528
        %v1531 = vshrl.u32 %v1454, 16
        %v1533 = vrot.slane %v1531, 4
        %v1534 = vshll.u32 %v1454, 16
        %v1536 = vrot.slane %v1534, 5
        %v1537 = vor.u32 %v1533, %v1536
        %v1538 = vrot.slane %v1537, 4
        %v1540 = vshll.u32 %v1455, 16
        %v1542 = vrot.slane %v1540, 5
        %v1543 = vsel %vm523, %v1538, %v1542
        %v1545 = vshrl.u32 %v1456, 16
        %v1547 = vrot.slane %v1545, 4
        %v1548 = vshll.u32 %v1456, 16
        %v1550 = vrot.slane %v1548, 5
        %v1551 = vor.u32 %v1547, %v1550
        %v1552 = vrot.slane %v1551, 4
        %v1554 = vshll.u32 %v1457, 16
        %v1556 = vrot.slane %v1554, 5
        %v1557 = vsel %vm523, %v1552, %v1556
        %v1559 = vshrl.u32 %v1458, 16
        %v1561 = vrot.slane %v1559, 4
        %v1562 = vshll.u32 %v1458, 16
        %v1564 = vrot.slane %v1562, 5
        %v1565 = vor.u32 %v1561, %v1564
        %v1566 = vrot.slane %v1565, 4
        %v1568 = vshll.u32 %v1459, 16
        %v1570 = vrot.slane %v1568, 5
        %v1571 = vsel %vm523, %v1566, %v1570
        %s1572 = scalar_lea.vmem %s1, 16
        %v1573 = vld [vmem:[%s1572] sm:$0x3]
        %v1574 = vunpack.c.l.b16 %v1473
        %v1575 = vunpack.c.l.b16 %v1487
        %v1576 = vunpack.c.l.b16 %v1501
        %v1577 = vunpack.c.l.b16 %v1515
        %v1578 = vunpack.c.l.b16 %v1529
        %v1579 = vunpack.c.l.b16 %v1543
        %v1580 = vunpack.c.l.b16 %v1557
        %v1581 = vunpack.c.l.b16 %v1571
        %v1582 = vpack.c.b16 %v1575, %v1574
        %v1583 = vpack.c.b16 %v1577, %v1576
        %v1584 = vpack.c.b16 %v1579, %v1578
        %v1585 = vpack.c.b16 %v1581, %v1580
        %v1587 = vsel %vm323, %v1582, 0
        %v1590 = vsel %vm323, %v1583, 0
        %v1593 = vsel %vm323, %v1584, 0
        %v1596 = vsel %vm323, %v1585, 0
        %v1599 = vsel %vm336, %v1573, 0
        %1601 = vmatprep.subr.bf16.mxu0 0
        %1602 = vmatpush1.bf16.msra.mxu0 %v1599
        %1603 = vmatprep.subr.bf16.mxu0 0
        %1604 = vmatpush1.bf16.msra.mxu0 0
        %1605 = vmatprep.subr.bf16.mxu0 0
        %1606 = vmatpush1.bf16.msra.mxu0 0
        %1607 = vmatprep.subr.bf16.mxu0 0
        %1608 = vmatpush1.bf16.msra.mxu0 0
        %1609 = vmatprep.subr.bf16.mxu0 0
        %1610 = vmatpush1.bf16.msra.mxu0 0
        %1611 = vmatprep.subr.bf16.mxu0 0
        %1612 = vmatpush1.bf16.msra.mxu0 0
        %1613 = vmatprep.subr.bf16.mxu0 0
        %1614 = vmatpush1.bf16.msra.mxu0 0
        %1615 = vmatprep.subr.bf16.mxu0 0
        %1616 = vmatpush1.bf16.msra.mxu0 0
        %1617 = vmatprep.subr.bf16.mxu0 0
        %1618 = vmatpush1.bf16.msra.mxu0 0
        %1619 = vmatprep.subr.bf16.mxu0 0
        %1620 = vmatpush1.bf16.msra.mxu0 0
        %1621 = vmatprep.subr.bf16.mxu0 0
        %1622 = vmatpush1.bf16.msra.mxu0 0
        %1623 = vmatprep.subr.bf16.mxu0 0
        %1624 = vmatpush1.bf16.msra.mxu0 0
        %1625 = vmatprep.subr.bf16.mxu0 0
        %1626 = vmatpush1.bf16.msra.mxu0 0
        %1627 = vmatprep.subr.bf16.mxu0 0
        %1628 = vmatpush1.bf16.msra.mxu0 0
        %1629 = vmatprep.subr.bf16.mxu0 0
        %1630 = vmatpush1.bf16.msra.mxu0 0
        %1631 = vmatprep.subr.bf16.mxu0 0
        %1632 = vmatpush1.bf16.msra.mxu0 0
        %1633 = vmatprep.mubr.bf16.mxu0 0
        %1634 = vmatmul.mubr.bf16.gmra.mrb[0].mxu0 %v1587
        %v1635 = vpop.f32.mrb[0].mxu0
        %v1636 = vadd.f32 0.0, %v1635
        %v1637 = vpop.f32.mrb[0].mxu0
        %v1638 = vpop.f32.mrb[0].mxu0
        %v1639 = vadd.f32 0.0, %v1638
        %v1640 = vpop.f32.mrb[0].mxu0
        %1641 = vmatprep.mubr.bf16.mxu0 0
        %1642 = vmatmul.mubr.bf16.gmra.mrb[0].mxu0 %v1590
        %v1643 = vpop.f32.mrb[0].mxu0
        %v1644 = vadd.f32 0.0, %v1643
        %v1645 = vpop.f32.mrb[0].mxu0
        %v1646 = vpop.f32.mrb[0].mxu0
        %v1647 = vadd.f32 0.0, %v1646
        %v1648 = vpop.f32.mrb[0].mxu0
        %1649 = vmatprep.mubr.bf16.mxu0 0
        %1650 = vmatmul.mubr.bf16.gmra.mrb[0].mxu0 %v1593
        %v1651 = vpop.f32.mrb[0].mxu0
        %v1652 = vadd.f32 0.0, %v1651
        %v1653 = vpop.f32.mrb[0].mxu0
        %v1654 = vpop.f32.mrb[0].mxu0
        %v1655 = vadd.f32 0.0, %v1654
        %v1656 = vpop.f32.mrb[0].mxu0
        %1657 = vmatprep.mubr.bf16.mxu0 0
        %1658 = vmatmul.mubr.bf16.gmra.mrb[0].mxu0 %v1596
        %v1659 = vpop.f32.mrb[0].mxu0
        %v1660 = vadd.f32 0.0, %v1659
        %v1661 = vpop.f32.mrb[0].mxu0
        %v1662 = vpop.f32.mrb[0].mxu0
        %v1663 = vadd.f32 0.0, %v1662
        %v1664 = vpop.f32.mrb[0].mxu0
        %1665 = vdwg.mxu0
        %v1666 = vadd.f32 %v1436, %v1636
        %v1667 = vadd.f32 %v1437, %v1639
        %v1668 = vadd.f32 %v1438, %v1644
        %v1669 = vadd.f32 %v1439, %v1647
        %v1670 = vadd.f32 %v1440, %v1652
        %v1671 = vadd.f32 %v1441, %v1655
        %v1672 = vadd.f32 %v1442, %v1660
        %v1673 = vadd.f32 %v1443, %v1663
        %v1674 = vld [vmem:[%s2] sm:$0x1]
        %v1676 = vlaneseq
        %v1677 = vshrl.u32 %v1676, 7
        %v1678 = vsub.s32 0, %v1677
        %v1679 = vrot.slane %v1674, %v1678
        %v1681 = vadd.f32 %v1666, %v1679
        %v1682 = vadd.f32 %v1667, %v1679
        %v1683 = vadd.f32 %v1668, %v1679
        %v1684 = vadd.f32 %v1669, %v1679
        %v1685 = vadd.f32 %v1670, %v1679
        %v1686 = vadd.f32 %v1671, %v1679
        %v1687 = vadd.f32 %v1672, %v1679
        %v1688 = vadd.f32 %v1673, %v1679
        %v1689 = vmax.f32 %v1681, 0.0
        %v1690 = vmax.f32 %v1682, 0.0
        %v1691 = vmax.f32 %v1683, 0.0
        %v1692 = vmax.f32 %v1684, 0.0
        %v1693 = vmax.f32 %v1685, 0.0
        %v1694 = vmax.f32 %v1686, 0.0
        %v1695 = vmax.f32 %v1687, 0.0
        %v1696 = vmax.f32 %v1688, 0.0
        %1697 = vst [vmem:[#allocation2] sm:$0xff] 0.0
        %1698 = vst [vmem:[#allocation2 + $0x8] sm:$0x3] 0.0
        %1699 = vst [vmem:[#allocation2 + $0x10] sm:$0xff] 0.0
        %1700 = vst [vmem:[#allocation2 + $0x18] sm:$0x3] 0.0
        %1701 = vst [vmem:[#allocation2 + $0x20] sm:$0xff] 0.0
        %1702 = vst [vmem:[#allocation2 + $0x28] sm:$0x3] 0.0
        %1703 = vst [vmem:[#allocation2 + $0x30] sm:$0xff] 0.0
        %1704 = vst [vmem:[#allocation2 + $0x38] sm:$0x3] 0.0
        %1705 = vst [vmem:[#allocation2 + $0x40] sm:$0xff] 0.0
        %1706 = vst [vmem:[#allocation2 + $0x48] sm:$0x3] 0.0
        %1707 = vst [vmem:[#allocation2 + $0x50] sm:$0xff] 0.0
        %1708 = vst [vmem:[#allocation2 + $0x58] sm:$0x3] 0.0
        %1709 = vst [vmem:[#allocation2 + $0x60] sm:$0xff] 0.0
        %1710 = vst [vmem:[#allocation2 + $0x68] sm:$0x3] 0.0
        %1711 = vst [vmem:[#allocation2 + $0x70] sm:$0xff] 0.0
        %1712 = vst [vmem:[#allocation2 + $0x78] sm:$0x3] 0.0
        %1713 = vst [vmem:[#allocation2 + $0x80] sm:$0xff] 0.0
        %1714 = vst [vmem:[#allocation2 + $0x88] sm:$0x3] 0.0
        %1715 = vst [vmem:[#allocation2 + $0x90] sm:$0xff] 0.0
        %1716 = vst [vmem:[#allocation2 + $0x98] sm:$0x3] 0.0
        %s1717 = scalar_lea.vmem [#allocation2], 16
        %1718 = vst [vmem:[%s1717 + $0x1] sm:$0xff] %v1689
        %1719 = vst [vmem:[%s1717 + $0x11] sm:$0xff] %v1690
        %1720 = vst [vmem:[%s1717 + $0x21] sm:$0xff] %v1691
        %1721 = vst [vmem:[%s1717 + $0x31] sm:$0xff] %v1692
        %1722 = vst [vmem:[%s1717 + $0x41] sm:$0xff] %v1693
        %1723 = vst [vmem:[%s1717 + $0x51] sm:$0xff] %v1694
        %1724 = vst [vmem:[%s1717 + $0x61] sm:$0xff] %v1695
        %1725 = vst [vmem:[%s1717 + $0x71] sm:$0xff] %v1696
        %v1726 = vld [vmem:[#allocation2] sm:$0xff]
        %v1727 = vld [vmem:[#allocation2 + $0x10] sm:$0xff]
        %v1728 = vld [vmem:[#allocation2 + $0x20] sm:$0xff]
        %v1729 = vld [vmem:[#allocation2 + $0x30] sm:$0xff]
        %v1730 = vld [vmem:[#allocation2 + $0x40] sm:$0xff]
        %v1731 = vld [vmem:[#allocation2 + $0x50] sm:$0xff]
        %v1732 = vld [vmem:[#allocation2 + $0x60] sm:$0xff]
        %v1733 = vld [vmem:[#allocation2 + $0x70] sm:$0xff]
        %v1734 = vpack.c.bf16 %v1727, %v1726
        %v1735 = vpack.c.bf16 %v1729, %v1728
        %v1736 = vpack.c.bf16 %v1731, %v1730
        %v1737 = vpack.c.bf16 %v1733, %v1732
        %v1738 = vld [vmem:[%s3] sm:$0xf]
        %v1739 = vld [vmem:[%s3 + $0x4] sm:$0xf]
        %v1740 = vld [vmem:[%s3 + $0x8] sm:$0xf]
        %v1741 = vld [vmem:[%s3 + $0xc] sm:$0xf]
        %v1742 = vld [vmem:[%s3 + $0x10] sm:$0xf]
        %v1743 = vld [vmem:[%s3 + $0x14] sm:$0xf]
        %v1744 = vld [vmem:[%s3 + $0x18] sm:$0xf]
        %v1745 = vld [vmem:[%s3 + $0x1c] sm:$0xf]
        %v1746 = vld [vmem:[%s3 + $0x20] sm:$0xf]
        %v1747 = vld [vmem:[%s3 + $0x24] sm:$0xf]
        %v1748 = vld [vmem:[%s3 + $0x28] sm:$0xf]
        %v1749 = vld [vmem:[%s3 + $0x2c] sm:$0xf]
        %v1750 = vld [vmem:[%s3 + $0x30] sm:$0xf]
        %v1751 = vld [vmem:[%s3 + $0x34] sm:$0xf]
        %v1752 = vld [vmem:[%s3 + $0x38] sm:$0xf]
        %v1753 = vld [vmem:[%s3 + $0x3c] sm:$0xf]
        %v1754 = vld [vmem:[#allocation2 + $0x1] sm:$0xff]
        %v1755 = vld [vmem:[#allocation2 + $0x11] sm:$0xff]
        %v1756 = vld [vmem:[#allocation2 + $0x21] sm:$0xff]
        %v1757 = vld [vmem:[#allocation2 + $0x31] sm:$0xff]
        %v1758 = vld [vmem:[#allocation2 + $0x41] sm:$0xff]
        %v1759 = vld [vmem:[#allocation2 + $0x51] sm:$0xff]
        %v1760 = vld [vmem:[#allocation2 + $0x61] sm:$0xff]
        %v1761 = vld [vmem:[#allocation2 + $0x71] sm:$0xff]
        %v1762 = vpack.c.bf16 %v1755, %v1754
        %v1763 = vpack.c.bf16 %v1757, %v1756
        %v1764 = vpack.c.bf16 %v1759, %v1758
        %v1765 = vpack.c.bf16 %v1761, %v1760
        %s1766 = scalar_lea.vmem %s3, 64
        %v1767 = vld [vmem:[%s1766] sm:$0xf]
        %v1768 = vld [vmem:[%s1766 + $0x4] sm:$0xf]
        %v1769 = vld [vmem:[%s1766 + $0x8] sm:$0xf]
        %v1770 = vld [vmem:[%s1766 + $0xc] sm:$0xf]
        %v1771 = vld [vmem:[%s1766 + $0x10] sm:$0xf]
        %v1772 = vld [vmem:[%s1766 + $0x14] sm:$0xf]
        %v1773 = vld [vmem:[%s1766 + $0x18] sm:$0xf]
        %v1774 = vld [vmem:[%s1766 + $0x1c] sm:$0xf]
        %v1775 = vld [vmem:[%s1766 + $0x20] sm:$0xf]
        %v1776 = vld [vmem:[%s1766 + $0x24] sm:$0xf]
        %v1777 = vld [vmem:[%s1766 + $0x28] sm:$0xf]
        %v1778 = vld [vmem:[%s1766 + $0x2c] sm:$0xf]
        %v1779 = vld [vmem:[%s1766 + $0x30] sm:$0xf]
        %v1780 = vld [vmem:[%s1766 + $0x34] sm:$0xf]
        %v1781 = vld [vmem:[%s1766 + $0x38] sm:$0xf]
        %v1782 = vld [vmem:[%s1766 + $0x3c] sm:$0xf]
        %v1799 = vunpack.c.l.b16 %v1767
        %v1800 = vunpack.c.l.b16 %v1768
        %v1801 = vunpack.c.l.b16 %v1769
        %v1802 = vunpack.c.l.b16 %v1770
        %v1803 = vunpack.c.l.b16 %v1771
        %v1804 = vunpack.c.l.b16 %v1772
        %v1805 = vunpack.c.l.b16 %v1773
        %v1806 = vunpack.c.l.b16 %v1774
        %v1807 = vunpack.c.l.b16 %v1775
        %v1808 = vunpack.c.l.b16 %v1776
        %v1809 = vunpack.c.l.b16 %v1777
        %v1810 = vunpack.c.l.b16 %v1778
        %v1811 = vunpack.c.l.b16 %v1779
        %v1812 = vunpack.c.l.b16 %v1780
        %v1813 = vunpack.c.l.b16 %v1781
        %v1814 = vunpack.c.l.b16 %v1782
        %v1815 = vpack.c.b16 %v1800, %v1799
        %v1816 = vpack.c.b16 %v1802, %v1801
        %v1817 = vpack.c.b16 %v1804, %v1803
        %v1818 = vpack.c.b16 %v1806, %v1805
        %v1819 = vpack.c.b16 %v1808, %v1807
        %v1820 = vpack.c.b16 %v1810, %v1809
        %v1821 = vpack.c.b16 %v1812, %v1811
        %v1822 = vpack.c.b16 %v1814, %v1813
        %1831 = vmatprep.subr.bf16.mxu0 0
        %1832 = vmatpush1.bf16.msra.mxu0 %v1815
        %1833 = vmatprep.subr.bf16.mxu0 0
        %1834 = vmatpush1.bf16.msra.mxu0 %v1816
        %1835 = vmatprep.subr.bf16.mxu0 0
        %1836 = vmatpush1.bf16.msra.mxu0 %v1817
        %1837 = vmatprep.subr.bf16.mxu0 0
        %1838 = vmatpush1.bf16.msra.mxu0 %v1818
        %1839 = vmatprep.subr.bf16.mxu0 0
        %1840 = vmatpush1.bf16.msra.mxu0 %v1819
        %1841 = vmatprep.subr.bf16.mxu0 0
        %1842 = vmatpush1.bf16.msra.mxu0 %v1820
        %1843 = vmatprep.subr.bf16.mxu0 0
        %1844 = vmatpush1.bf16.msra.mxu0 %v1821
        %1845 = vmatprep.subr.bf16.mxu0 0
        %1846 = vmatpush1.bf16.msra.mxu0 %v1822
        %1847 = vmatprep.subr.bf16.mxu0 0
        %1848 = vmatpush1.bf16.msra.mxu0 0
        %1849 = vmatprep.subr.bf16.mxu0 0
        %1850 = vmatpush1.bf16.msra.mxu0 0
        %1851 = vmatprep.subr.bf16.mxu0 0
        %1852 = vmatpush1.bf16.msra.mxu0 0
        %1853 = vmatprep.subr.bf16.mxu0 0
        %1854 = vmatpush1.bf16.msra.mxu0 0
        %1855 = vmatprep.subr.bf16.mxu0 0
        %1856 = vmatpush1.bf16.msra.mxu0 0
        %1857 = vmatprep.subr.bf16.mxu0 0
        %1858 = vmatpush1.bf16.msra.mxu0 0
        %1859 = vmatprep.subr.bf16.mxu0 0
        %1860 = vmatpush1.bf16.msra.mxu0 0
        %1861 = vmatprep.subr.bf16.mxu0 0
        %1862 = vmatpush1.bf16.msra.mxu0 0
        %1863 = vmatprep.mubr.bf16.mxu0 0
        %1864 = vmatmul.mubr.bf16.gmra.mrb[0].mxu0 %v1762
        %v1865 = vpop.f32.mrb[0].mxu0
        %v1866 = vadd.f32 0.0, %v1865
        %v1867 = vpop.f32.mrb[0].mxu0
        %v1868 = vpop.f32.mrb[0].mxu0
        %v1869 = vadd.f32 0.0, %v1868
        %v1870 = vpop.f32.mrb[0].mxu0
        %1871 = vmatprep.mubr.bf16.mxu0 0
        %1872 = vmatmul.mubr.bf16.gmra.mrb[0].mxu0 %v1763
        %v1873 = vpop.f32.mrb[0].mxu0
        %v1874 = vadd.f32 0.0, %v1873
        %v1875 = vpop.f32.mrb[0].mxu0
        %v1876 = vpop.f32.mrb[0].mxu0
        %v1877 = vadd.f32 0.0, %v1876
        %v1878 = vpop.f32.mrb[0].mxu0
        %1879 = vmatprep.mubr.bf16.mxu0 0
        %1880 = vmatmul.mubr.bf16.gmra.mrb[0].mxu0 %v1764
        %v1881 = vpop.f32.mrb[0].mxu0
        %v1882 = vadd.f32 0.0, %v1881
        %v1883 = vpop.f32.mrb[0].mxu0
        %v1884 = vpop.f32.mrb[0].mxu0
        %v1885 = vadd.f32 0.0, %v1884
        %v1886 = vpop.f32.mrb[0].mxu0
        %1887 = vmatprep.mubr.bf16.mxu0 0
        %1888 = vmatmul.mubr.bf16.gmra.mrb[0].mxu0 %v1765
        %v1889 = vpop.f32.mrb[0].mxu0
        %v1890 = vadd.f32 0.0, %v1889
        %v1891 = vpop.f32.mrb[0].mxu0
        %v1892 = vpop.f32.mrb[0].mxu0
        %v1893 = vadd.f32 0.0, %v1892
        %v1894 = vpop.f32.mrb[0].mxu0
        %1895 = vdwg.mxu0
        %v1912 = vunpack.c.l.b16 %v1738
        %v1913 = vunpack.c.l.b16 %v1739
        %v1914 = vunpack.c.l.b16 %v1740
        %v1915 = vunpack.c.l.b16 %v1741
        %v1916 = vunpack.c.l.b16 %v1742
        %v1917 = vunpack.c.l.b16 %v1743
        %v1918 = vunpack.c.l.b16 %v1744
        %v1919 = vunpack.c.l.b16 %v1745
        %v1920 = vunpack.c.l.b16 %v1746
        %v1921 = vunpack.c.l.b16 %v1747
        %v1922 = vunpack.c.l.b16 %v1748
        %v1923 = vunpack.c.l.b16 %v1749
        %v1924 = vunpack.c.l.b16 %v1750
        %v1925 = vunpack.c.l.b16 %v1751
        %v1926 = vunpack.c.l.b16 %v1752
        %v1927 = vunpack.c.l.b16 %v1753
        %v1928 = vpack.c.b16 %v1913, %v1912
        %v1929 = vpack.c.b16 %v1915, %v1914
        %v1930 = vpack.c.b16 %v1917, %v1916
        %v1931 = vpack.c.b16 %v1919, %v1918
        %v1932 = vpack.c.b16 %v1921, %v1920
        %v1933 = vpack.c.b16 %v1923, %v1922
        %v1934 = vpack.c.b16 %v1925, %v1924
        %v1935 = vpack.c.b16 %v1927, %v1926
        %1944 = vmatprep.subr.bf16.mxu0 0
        %1945 = vmatpush1.bf16.msra.mxu0 %v1928
        %1946 = vmatprep.subr.bf16.mxu0 0
        %1947 = vmatpush1.bf16.msra.mxu0 %v1929
        %1948 = vmatprep.subr.bf16.mxu0 0
        %1949 = vmatpush1.bf16.msra.mxu0 %v1930
        %1950 = vmatprep.subr.bf16.mxu0 0
        %1951 = vmatpush1.bf16.msra.mxu0 %v1931
        %1952 = vmatprep.subr.bf16.mxu0 0
        %1953 = vmatpush1.bf16.msra.mxu0 %v1932
        %1954 = vmatprep.subr.bf16.mxu0 0
        %1955 = vmatpush1.bf16.msra.mxu0 %v1933
        %1956 = vmatprep.subr.bf16.mxu0 0
        %1957 = vmatpush1.bf16.msra.mxu0 %v1934
        %1958 = vmatprep.subr.bf16.mxu0 0
        %1959 = vmatpush1.bf16.msra.mxu0 %v1935
        %1960 = vmatprep.subr.bf16.mxu0 0
        %1961 = vmatpush1.bf16.msra.mxu0 0
        %1962 = vmatprep.subr.bf16.mxu0 0
        %1963 = vmatpush1.bf16.msra.mxu0 0
        %1964 = vmatprep.subr.bf16.mxu0 0
        %1965 = vmatpush1.bf16.msra.mxu0 0
        %1966 = vmatprep.subr.bf16.mxu0 0
        %1967 = vmatpush1.bf16.msra.mxu0 0
        %1968 = vmatprep.subr.bf16.mxu0 0
        %1969 = vmatpush1.bf16.msra.mxu0 0
        %1970 = vmatprep.subr.bf16.mxu0 0
        %1971 = vmatpush1.bf16.msra.mxu0 0
        %1972 = vmatprep.subr.bf16.mxu0 0
        %1973 = vmatpush1.bf16.msra.mxu0 0
        %1974 = vmatprep.subr.bf16.mxu0 0
        %1975 = vmatpush1.bf16.msra.mxu0 0
        %1976 = vmatprep.mubr.bf16.mxu0 0
        %1977 = vmatmul.mubr.bf16.gmra.mrb[0].mxu0 %v1734
        %v1978 = vpop.f32.mrb[0].mxu0
        %v1979 = vadd.f32 %v1866, %v1978
        %v1980 = vpop.f32.mrb[0].mxu0
        %v1981 = vpop.f32.mrb[0].mxu0
        %v1982 = vadd.f32 %v1869, %v1981
        %v1983 = vpop.f32.mrb[0].mxu0
        %1984 = vmatprep.mubr.bf16.mxu0 0
        %1985 = vmatmul.mubr.bf16.gmra.mrb[0].mxu0 %v1735
        %v1986 = vpop.f32.mrb[0].mxu0
        %v1987 = vadd.f32 %v1874, %v1986
        %v1988 = vpop.f32.mrb[0].mxu0
        %v1989 = vpop.f32.mrb[0].mxu0
        %v1990 = vadd.f32 %v1877, %v1989
        %v1991 = vpop.f32.mrb[0].mxu0
        %1992 = vmatprep.mubr.bf16.mxu0 0
        %1993 = vmatmul.mubr.bf16.gmra.mrb[0].mxu0 %v1736
        %v1994 = vpop.f32.mrb[0].mxu0
        %v1995 = vadd.f32 %v1882, %v1994
        %v1996 = vpop.f32.mrb[0].mxu0
        %v1997 = vpop.f32.mrb[0].mxu0
        %v1998 = vadd.f32 %v1885, %v1997
        %v1999 = vpop.f32.mrb[0].mxu0
        %2000 = vmatprep.mubr.bf16.mxu0 0
        %2001 = vmatmul.mubr.bf16.gmra.mrb[0].mxu0 %v1737
        %v2002 = vpop.f32.mrb[0].mxu0
        %v2003 = vadd.f32 %v1890, %v2002
        %v2004 = vpop.f32.mrb[0].mxu0
        %v2005 = vpop.f32.mrb[0].mxu0
        %v2006 = vadd.f32 %v1893, %v2005
        %v2007 = vpop.f32.mrb[0].mxu0
        %2008 = vdwg.mxu0
        %v2009 = vld [vmem:[#allocation2 + $0x2] sm:$0xff]
        %v2010 = vld [vmem:[#allocation2 + $0x12] sm:$0xff]
        %v2011 = vld [vmem:[#allocation2 + $0x22] sm:$0xff]
        %v2012 = vld [vmem:[#allocation2 + $0x32] sm:$0xff]
        %v2013 = vld [vmem:[#allocation2 + $0x42] sm:$0xff]
        %v2014 = vld [vmem:[#allocation2 + $0x52] sm:$0xff]
        %v2015 = vld [vmem:[#allocation2 + $0x62] sm:$0xff]
        %v2016 = vld [vmem:[#allocation2 + $0x72] sm:$0xff]
        %v2017 = vpack.c.bf16 %v2010, %v2009
        %v2018 = vpack.c.bf16 %v2012, %v2011
        %v2019 = vpack.c.bf16 %v2014, %v2013
        %v2020 = vpack.c.bf16 %v2016, %v2015
        %s2021 = scalar_lea.vmem %s3, 128
        %v2022 = vld [vmem:[%s2021] sm:$0xf]
        %v2023 = vld [vmem:[%s2021 + $0x4] sm:$0xf]
        %v2024 = vld [vmem:[%s2021 + $0x8] sm:$0xf]
        %v2025 = vld [vmem:[%s2021 + $0xc] sm:$0xf]
        %v2026 = vld [vmem:[%s2021 + $0x10] sm:$0xf]
        %v2027 = vld [vmem:[%s2021 + $0x14] sm:$0xf]
        %v2028 = vld [vmem:[%s2021 + $0x18] sm:$0xf]
        %v2029 = vld [vmem:[%s2021 + $0x1c] sm:$0xf]
        %v2030 = vld [vmem:[%s2021 + $0x20] sm:$0xf]
        %v2031 = vld [vmem:[%s2021 + $0x24] sm:$0xf]
        %v2032 = vld [vmem:[%s2021 + $0x28] sm:$0xf]
        %v2033 = vld [vmem:[%s2021 + $0x2c] sm:$0xf]
        %v2034 = vld [vmem:[%s2021 + $0x30] sm:$0xf]
        %v2035 = vld [vmem:[%s2021 + $0x34] sm:$0xf]
        %v2036 = vld [vmem:[%s2021 + $0x38] sm:$0xf]
        %v2037 = vld [vmem:[%s2021 + $0x3c] sm:$0xf]
        %v2054 = vunpack.c.l.b16 %v2022
        %v2055 = vunpack.c.l.b16 %v2023
        %v2056 = vunpack.c.l.b16 %v2024
        %v2057 = vunpack.c.l.b16 %v2025
        %v2058 = vunpack.c.l.b16 %v2026
        %v2059 = vunpack.c.l.b16 %v2027
        %v2060 = vunpack.c.l.b16 %v2028
        %v2061 = vunpack.c.l.b16 %v2029
        %v2062 = vunpack.c.l.b16 %v2030
        %v2063 = vunpack.c.l.b16 %v2031
        %v2064 = vunpack.c.l.b16 %v2032
        %v2065 = vunpack.c.l.b16 %v2033
        %v2066 = vunpack.c.l.b16 %v2034
        %v2067 = vunpack.c.l.b16 %v2035
        %v2068 = vunpack.c.l.b16 %v2036
        %v2069 = vunpack.c.l.b16 %v2037
        %v2070 = vpack.c.b16 %v2055, %v2054
        %v2071 = vpack.c.b16 %v2057, %v2056
        %v2072 = vpack.c.b16 %v2059, %v2058
        %v2073 = vpack.c.b16 %v2061, %v2060
        %v2074 = vpack.c.b16 %v2063, %v2062
        %v2075 = vpack.c.b16 %v2065, %v2064
        %v2076 = vpack.c.b16 %v2067, %v2066
        %v2077 = vpack.c.b16 %v2069, %v2068
        %2086 = vmatprep.subr.bf16.mxu0 0
        %2087 = vmatpush1.bf16.msra.mxu0 %v2070
        %2088 = vmatprep.subr.bf16.mxu0 0
        %2089 = vmatpush1.bf16.msra.mxu0 %v2071
        %2090 = vmatprep.subr.bf16.mxu0 0
        %2091 = vmatpush1.bf16.msra.mxu0 %v2072
        %2092 = vmatprep.subr.bf16.mxu0 0
        %2093 = vmatpush1.bf16.msra.mxu0 %v2073
        %2094 = vmatprep.subr.bf16.mxu0 0
        %2095 = vmatpush1.bf16.msra.mxu0 %v2074
        %2096 = vmatprep.subr.bf16.mxu0 0
        %2097 = vmatpush1.bf16.msra.mxu0 %v2075
        %2098 = vmatprep.subr.bf16.mxu0 0
        %2099 = vmatpush1.bf16.msra.mxu0 %v2076
        %2100 = vmatprep.subr.bf16.mxu0 0
        %2101 = vmatpush1.bf16.msra.mxu0 %v2077
        %2102 = vmatprep.subr.bf16.mxu0 0
        %2103 = vmatpush1.bf16.msra.mxu0 0
        %2104 = vmatprep.subr.bf16.mxu0 0
        %2105 = vmatpush1.bf16.msra.mxu0 0
        %2106 = vmatprep.subr.bf16.mxu0 0
        %2107 = vmatpush1.bf16.msra.mxu0 0
        %2108 = vmatprep.subr.bf16.mxu0 0
        %2109 = vmatpush1.bf16.msra.mxu0 0
        %2110 = vmatprep.subr.bf16.mxu0 0
        %2111 = vmatpush1.bf16.msra.mxu0 0
        %2112 = vmatprep.subr.bf16.mxu0 0
        %2113 = vmatpush1.bf16.msra.mxu0 0
        %2114 = vmatprep.subr.bf16.mxu0 0
        %2115 = vmatpush1.bf16.msra.mxu0 0
        %2116 = vmatprep.subr.bf16.mxu0 0
        %2117 = vmatpush1.bf16.msra.mxu0 0
        %2118 = vmatprep.mubr.bf16.mxu0 0
        %2119 = vmatmul.mubr.bf16.gmra.mrb[0].mxu0 %v2017
        %v2120 = vpop.f32.mrb[0].mxu0
        %v2121 = vadd.f32 0.0, %v2120
        %v2122 = vpop.f32.mrb[0].mxu0
        %v2123 = vpop.f32.mrb[0].mxu0
        %v2124 = vadd.f32 0.0, %v2123
        %v2125 = vpop.f32.mrb[0].mxu0
        %2126 = vmatprep.mubr.bf16.mxu0 0
        %2127 = vmatmul.mubr.bf16.gmra.mrb[0].mxu0 %v2018
        %v2128 = vpop.f32.mrb[0].mxu0
        %v2129 = vadd.f32 0.0, %v2128
        %v2130 = vpop.f32.mrb[0].mxu0
        %v2131 = vpop.f32.mrb[0].mxu0
        %v2132 = vadd.f32 0.0, %v2131
        %v2133 = vpop.f32.mrb[0].mxu0
        %2134 = vmatprep.mubr.bf16.mxu0 0
        %2135 = vmatmul.mubr.bf16.gmra.mrb[0].mxu0 %v2019
        %v2136 = vpop.f32.mrb[0].mxu0
        %v2137 = vadd.f32 0.0, %v2136
        %v2138 = vpop.f32.mrb[0].mxu0
        %v2139 = vpop.f32.mrb[0].mxu0
        %v2140 = vadd.f32 0.0, %v2139
        %v2141 = vpop.f32.mrb[0].mxu0
        %2142 = vmatprep.mubr.bf16.mxu0 0
        %2143 = vmatmul.mubr.bf16.gmra.mrb[0].mxu0 %v2020
        %v2144 = vpop.f32.mrb[0].mxu0
        %v2145 = vadd.f32 0.0, %v2144
        %v2146 = vpop.f32.mrb[0].mxu0
        %v2147 = vpop.f32.mrb[0].mxu0
        %v2148 = vadd.f32 0.0, %v2147
        %v2149 = vpop.f32.mrb[0].mxu0
        %2150 = vdwg.mxu0
        %v2151 = vadd.f32 %v1979, %v2121
        %v2152 = vadd.f32 %v1982, %v2124
        %v2153 = vadd.f32 %v1987, %v2129
        %v2154 = vadd.f32 %v1990, %v2132
        %v2155 = vadd.f32 %v1995, %v2137
        %v2156 = vadd.f32 %v1998, %v2140
        %v2157 = vadd.f32 %v2003, %v2145
        %v2158 = vadd.f32 %v2006, %v2148
        %v2159 = vld [vmem:[%s1717] sm:$0xff]
        %v2160 = vld [vmem:[%s1717 + $0x10] sm:$0xff]
        %v2161 = vld [vmem:[%s1717 + $0x20] sm:$0xff]
        %v2162 = vld [vmem:[%s1717 + $0x30] sm:$0xff]
        %v2163 = vld [vmem:[%s1717 + $0x40] sm:$0xff]
        %v2164 = vld [vmem:[%s1717 + $0x50] sm:$0xff]
        %v2165 = vld [vmem:[%s1717 + $0x60] sm:$0xff]
        %v2166 = vld [vmem:[%s1717 + $0x70] sm:$0xff]
        %v2167 = vpack.c.bf16 %v2160, %v2159
        %v2168 = vpack.c.bf16 %v2162, %v2161
        %v2169 = vpack.c.bf16 %v2164, %v2163
        %v2170 = vpack.c.bf16 %v2166, %v2165
        %s2171 = scalar_lea.vmem %s3, 192
        %v2172 = vld [vmem:[%s2171] sm:$0xf]
        %v2173 = vld [vmem:[%s2171 + $0x4] sm:$0xf]
        %v2174 = vld [vmem:[%s2171 + $0x8] sm:$0xf]
        %v2175 = vld [vmem:[%s2171 + $0xc] sm:$0xf]
        %v2176 = vld [vmem:[%s2171 + $0x10] sm:$0xf]
        %v2177 = vld [vmem:[%s2171 + $0x14] sm:$0xf]
        %v2178 = vld [vmem:[%s2171 + $0x18] sm:$0xf]
        %v2179 = vld [vmem:[%s2171 + $0x1c] sm:$0xf]
        %v2180 = vld [vmem:[%s2171 + $0x20] sm:$0xf]
        %v2181 = vld [vmem:[%s2171 + $0x24] sm:$0xf]
        %v2182 = vld [vmem:[%s2171 + $0x28] sm:$0xf]
        %v2183 = vld [vmem:[%s2171 + $0x2c] sm:$0xf]
        %v2184 = vld [vmem:[%s2171 + $0x30] sm:$0xf]
        %v2185 = vld [vmem:[%s2171 + $0x34] sm:$0xf]
        %v2186 = vld [vmem:[%s2171 + $0x38] sm:$0xf]
        %v2187 = vld [vmem:[%s2171 + $0x3c] sm:$0xf]
        %v2204 = vunpack.c.l.b16 %v2172
        %v2205 = vunpack.c.l.b16 %v2173
        %v2206 = vunpack.c.l.b16 %v2174
        %v2207 = vunpack.c.l.b16 %v2175
        %v2208 = vunpack.c.l.b16 %v2176
        %v2209 = vunpack.c.l.b16 %v2177
        %v2210 = vunpack.c.l.b16 %v2178
        %v2211 = vunpack.c.l.b16 %v2179
        %v2212 = vunpack.c.l.b16 %v2180
        %v2213 = vunpack.c.l.b16 %v2181
        %v2214 = vunpack.c.l.b16 %v2182
        %v2215 = vunpack.c.l.b16 %v2183
        %v2216 = vunpack.c.l.b16 %v2184
        %v2217 = vunpack.c.l.b16 %v2185
        %v2218 = vunpack.c.l.b16 %v2186
        %v2219 = vunpack.c.l.b16 %v2187
        %v2220 = vpack.c.b16 %v2205, %v2204
        %v2221 = vpack.c.b16 %v2207, %v2206
        %v2222 = vpack.c.b16 %v2209, %v2208
        %v2223 = vpack.c.b16 %v2211, %v2210
        %v2224 = vpack.c.b16 %v2213, %v2212
        %v2225 = vpack.c.b16 %v2215, %v2214
        %v2226 = vpack.c.b16 %v2217, %v2216
        %v2227 = vpack.c.b16 %v2219, %v2218
        %2236 = vmatprep.subr.bf16.mxu0 0
        %2237 = vmatpush1.bf16.msra.mxu0 %v2220
        %2238 = vmatprep.subr.bf16.mxu0 0
        %2239 = vmatpush1.bf16.msra.mxu0 %v2221
        %2240 = vmatprep.subr.bf16.mxu0 0
        %2241 = vmatpush1.bf16.msra.mxu0 %v2222
        %2242 = vmatprep.subr.bf16.mxu0 0
        %2243 = vmatpush1.bf16.msra.mxu0 %v2223
        %2244 = vmatprep.subr.bf16.mxu0 0
        %2245 = vmatpush1.bf16.msra.mxu0 %v2224
        %2246 = vmatprep.subr.bf16.mxu0 0
        %2247 = vmatpush1.bf16.msra.mxu0 %v2225
        %2248 = vmatprep.subr.bf16.mxu0 0
        %2249 = vmatpush1.bf16.msra.mxu0 %v2226
        %2250 = vmatprep.subr.bf16.mxu0 0
        %2251 = vmatpush1.bf16.msra.mxu0 %v2227
        %2252 = vmatprep.subr.bf16.mxu0 0
        %2253 = vmatpush1.bf16.msra.mxu0 0
        %2254 = vmatprep.subr.bf16.mxu0 0
        %2255 = vmatpush1.bf16.msra.mxu0 0
        %2256 = vmatprep.subr.bf16.mxu0 0
        %2257 = vmatpush1.bf16.msra.mxu0 0
        %2258 = vmatprep.subr.bf16.mxu0 0
        %2259 = vmatpush1.bf16.msra.mxu0 0
        %2260 = vmatprep.subr.bf16.mxu0 0
        %2261 = vmatpush1.bf16.msra.mxu0 0
        %2262 = vmatprep.subr.bf16.mxu0 0
        %2263 = vmatpush1.bf16.msra.mxu0 0
        %2264 = vmatprep.subr.bf16.mxu0 0
        %2265 = vmatpush1.bf16.msra.mxu0 0
        %2266 = vmatprep.subr.bf16.mxu0 0
        %2267 = vmatpush1.bf16.msra.mxu0 0
        %2268 = vmatprep.mubr.bf16.mxu0 0
        %2269 = vmatmul.mubr.bf16.gmra.mrb[0].mxu0 %v2167
        %v2270 = vpop.f32.mrb[0].mxu0
        %v2271 = vadd.f32 0.0, %v2270
        %v2272 = vpop.f32.mrb[0].mxu0
        %v2273 = vpop.f32.mrb[0].mxu0
        %v2274 = vadd.f32 0.0, %v2273
        %v2275 = vpop.f32.mrb[0].mxu0
        %2276 = vmatprep.mubr.bf16.mxu0 0
        %2277 = vmatmul.mubr.bf16.gmra.mrb[0].mxu0 %v2168
        %v2278 = vpop.f32.mrb[0].mxu0
        %v2279 = vadd.f32 0.0, %v2278
        %v2280 = vpop.f32.mrb[0].mxu0
        %v2281 = vpop.f32.mrb[0].mxu0
        %v2282 = vadd.f32 0.0, %v2281
        %v2283 = vpop.f32.mrb[0].mxu0
        %2284 = vmatprep.mubr.bf16.mxu0 0
        %2285 = vmatmul.mubr.bf16.gmra.mrb[0].mxu0 %v2169
        %v2286 = vpop.f32.mrb[0].mxu0
        %v2287 = vadd.f32 0.0, %v2286
        %v2288 = vpop.f32.mrb[0].mxu0
        %v2289 = vpop.f32.mrb[0].mxu0
        %v2290 = vadd.f32 0.0, %v2289
        %v2291 = vpop.f32.mrb[0].mxu0
        %2292 = vmatprep.mubr.bf16.mxu0 0
        %2293 = vmatmul.mubr.bf16.gmra.mrb[0].mxu0 %v2170
        %v2294 = vpop.f32.mrb[0].mxu0
        %v2295 = vadd.f32 0.0, %v2294
        %v2296 = vpop.f32.mrb[0].mxu0
        %v2297 = vpop.f32.mrb[0].mxu0
        %v2298 = vadd.f32 0.0, %v2297
        %v2299 = vpop.f32.mrb[0].mxu0
        %2300 = vdwg.mxu0
        %v2301 = vadd.f32 %v2151, %v2271
        %v2302 = vadd.f32 %v2152, %v2274
        %v2303 = vadd.f32 %v2153, %v2279
        %v2304 = vadd.f32 %v2154, %v2282
        %v2305 = vadd.f32 %v2155, %v2287
        %v2306 = vadd.f32 %v2156, %v2290
        %v2307 = vadd.f32 %v2157, %v2295
        %v2308 = vadd.f32 %v2158, %v2298
        %v2309 = vld [vmem:[%s1717 + $0x1] sm:$0xff]
        %v2310 = vld [vmem:[%s1717 + $0x11] sm:$0xff]
        %v2311 = vld [vmem:[%s1717 + $0x21] sm:$0xff]
        %v2312 = vld [vmem:[%s1717 + $0x31] sm:$0xff]
        %v2313 = vld [vmem:[%s1717 + $0x41] sm:$0xff]
        %v2314 = vld [vmem:[%s1717 + $0x51] sm:$0xff]
        %v2315 = vld [vmem:[%s1717 + $0x61] sm:$0xff]
        %v2316 = vld [vmem:[%s1717 + $0x71] sm:$0xff]
        %v2317 = vpack.c.bf16 %v2310, %v2309
        %v2318 = vpack.c.bf16 %v2312, %v2311
        %v2319 = vpack.c.bf16 %v2314, %v2313
        %v2320 = vpack.c.bf16 %v2316, %v2315
        %s2321 = scalar_lea.vmem %s3, 256
        %v2322 = vld [vmem:[%s2321] sm:$0xf]
        %v2323 = vld [vmem:[%s2321 + $0x4] sm:$0xf]
        %v2324 = vld [vmem:[%s2321 + $0x8] sm:$0xf]
        %v2325 = vld [vmem:[%s2321 + $0xc] sm:$0xf]
        %v2326 = vld [vmem:[%s2321 + $0x10] sm:$0xf]
        %v2327 = vld [vmem:[%s2321 + $0x14] sm:$0xf]
        %v2328 = vld [vmem:[%s2321 + $0x18] sm:$0xf]
        %v2329 = vld [vmem:[%s2321 + $0x1c] sm:$0xf]
        %v2330 = vld [vmem:[%s2321 + $0x20] sm:$0xf]
        %v2331 = vld [vmem:[%s2321 + $0x24] sm:$0xf]
        %v2332 = vld [vmem:[%s2321 + $0x28] sm:$0xf]
        %v2333 = vld [vmem:[%s2321 + $0x2c] sm:$0xf]
        %v2334 = vld [vmem:[%s2321 + $0x30] sm:$0xf]
        %v2335 = vld [vmem:[%s2321 + $0x34] sm:$0xf]
        %v2336 = vld [vmem:[%s2321 + $0x38] sm:$0xf]
        %v2337 = vld [vmem:[%s2321 + $0x3c] sm:$0xf]
        %v2354 = vunpack.c.l.b16 %v2322
        %v2355 = vunpack.c.l.b16 %v2323
        %v2356 = vunpack.c.l.b16 %v2324
        %v2357 = vunpack.c.l.b16 %v2325
        %v2358 = vunpack.c.l.b16 %v2326
        %v2359 = vunpack.c.l.b16 %v2327
        %v2360 = vunpack.c.l.b16 %v2328
        %v2361 = vunpack.c.l.b16 %v2329
        %v2362 = vunpack.c.l.b16 %v2330
        %v2363 = vunpack.c.l.b16 %v2331
        %v2364 = vunpack.c.l.b16 %v2332
        %v2365 = vunpack.c.l.b16 %v2333
        %v2366 = vunpack.c.l.b16 %v2334
        %v2367 = vunpack.c.l.b16 %v2335
        %v2368 = vunpack.c.l.b16 %v2336
        %v2369 = vunpack.c.l.b16 %v2337
        %v2370 = vpack.c.b16 %v2355, %v2354
        %v2371 = vpack.c.b16 %v2357, %v2356
        %v2372 = vpack.c.b16 %v2359, %v2358
        %v2373 = vpack.c.b16 %v2361, %v2360
        %v2374 = vpack.c.b16 %v2363, %v2362
        %v2375 = vpack.c.b16 %v2365, %v2364
        %v2376 = vpack.c.b16 %v2367, %v2366
        %v2377 = vpack.c.b16 %v2369, %v2368
        %2386 = vmatprep.subr.bf16.mxu0 0
        %2387 = vmatpush1.bf16.msra.mxu0 %v2370
        %2388 = vmatprep.subr.bf16.mxu0 0
        %2389 = vmatpush1.bf16.msra.mxu0 %v2371
        %2390 = vmatprep.subr.bf16.mxu0 0
        %2391 = vmatpush1.bf16.msra.mxu0 %v2372
        %2392 = vmatprep.subr.bf16.mxu0 0
        %2393 = vmatpush1.bf16.msra.mxu0 %v2373
        %2394 = vmatprep.subr.bf16.mxu0 0
        %2395 = vmatpush1.bf16.msra.mxu0 %v2374
        %2396 = vmatprep.subr.bf16.mxu0 0
        %2397 = vmatpush1.bf16.msra.mxu0 %v2375
        %2398 = vmatprep.subr.bf16.mxu0 0
        %2399 = vmatpush1.bf16.msra.mxu0 %v2376
        %2400 = vmatprep.subr.bf16.mxu0 0
        %2401 = vmatpush1.bf16.msra.mxu0 %v2377
        %2402 = vmatprep.subr.bf16.mxu0 0
        %2403 = vmatpush1.bf16.msra.mxu0 0
        %2404 = vmatprep.subr.bf16.mxu0 0
        %2405 = vmatpush1.bf16.msra.mxu0 0
        %2406 = vmatprep.subr.bf16.mxu0 0
        %2407 = vmatpush1.bf16.msra.mxu0 0
        %2408 = vmatprep.subr.bf16.mxu0 0
        %2409 = vmatpush1.bf16.msra.mxu0 0
        %2410 = vmatprep.subr.bf16.mxu0 0
        %2411 = vmatpush1.bf16.msra.mxu0 0
        %2412 = vmatprep.subr.bf16.mxu0 0
        %2413 = vmatpush1.bf16.msra.mxu0 0
        %2414 = vmatprep.subr.bf16.mxu0 0
        %2415 = vmatpush1.bf16.msra.mxu0 0
        %2416 = vmatprep.subr.bf16.mxu0 0
        %2417 = vmatpush1.bf16.msra.mxu0 0
        %2418 = vmatprep.mubr.bf16.mxu0 0
        %2419 = vmatmul.mubr.bf16.gmra.mrb[0].mxu0 %v2317
        %v2420 = vpop.f32.mrb[0].mxu0
        %v2421 = vadd.f32 0.0, %v2420
        %v2422 = vpop.f32.mrb[0].mxu0
        %v2423 = vpop.f32.mrb[0].mxu0
        %v2424 = vadd.f32 0.0, %v2423
        %v2425 = vpop.f32.mrb[0].mxu0
        %2426 = vmatprep.mubr.bf16.mxu0 0
        %2427 = vmatmul.mubr.bf16.gmra.mrb[0].mxu0 %v2318
        %v2428 = vpop.f32.mrb[0].mxu0
        %v2429 = vadd.f32 0.0, %v2428
        %v2430 = vpop.f32.mrb[0].mxu0
        %v2431 = vpop.f32.mrb[0].mxu0
        %v2432 = vadd.f32 0.0, %v2431
        %v2433 = vpop.f32.mrb[0].mxu0
        %2434 = vmatprep.mubr.bf16.mxu0 0
        %2435 = vmatmul.mubr.bf16.gmra.mrb[0].mxu0 %v2319
        %v2436 = vpop.f32.mrb[0].mxu0
        %v2437 = vadd.f32 0.0, %v2436
        %v2438 = vpop.f32.mrb[0].mxu0
        %v2439 = vpop.f32.mrb[0].mxu0
        %v2440 = vadd.f32 0.0, %v2439
        %v2441 = vpop.f32.mrb[0].mxu0
        %2442 = vmatprep.mubr.bf16.mxu0 0
        %2443 = vmatmul.mubr.bf16.gmra.mrb[0].mxu0 %v2320
        %v2444 = vpop.f32.mrb[0].mxu0
        %v2445 = vadd.f32 0.0, %v2444
        %v2446 = vpop.f32.mrb[0].mxu0
        %v2447 = vpop.f32.mrb[0].mxu0
        %v2448 = vadd.f32 0.0, %v2447
        %v2449 = vpop.f32.mrb[0].mxu0
        %2450 = vdwg.mxu0
        %v2451 = vadd.f32 %v2301, %v2421
        %v2452 = vadd.f32 %v2302, %v2424
        %v2453 = vadd.f32 %v2303, %v2429
        %v2454 = vadd.f32 %v2304, %v2432
        %v2455 = vadd.f32 %v2305, %v2437
        %v2456 = vadd.f32 %v2306, %v2440
        %v2457 = vadd.f32 %v2307, %v2445
        %v2458 = vadd.f32 %v2308, %v2448
        %v2459 = vld [vmem:[%s1717 + $0x2] sm:$0xff]
        %v2460 = vld [vmem:[%s1717 + $0x12] sm:$0xff]
        %v2461 = vld [vmem:[%s1717 + $0x22] sm:$0xff]
        %v2462 = vld [vmem:[%s1717 + $0x32] sm:$0xff]
        %v2463 = vld [vmem:[%s1717 + $0x42] sm:$0xff]
        %v2464 = vld [vmem:[%s1717 + $0x52] sm:$0xff]
        %v2465 = vld [vmem:[%s1717 + $0x62] sm:$0xff]
        %v2466 = vld [vmem:[%s1717 + $0x72] sm:$0xff]
        %v2467 = vpack.c.bf16 %v2460, %v2459
        %v2468 = vpack.c.bf16 %v2462, %v2461
        %v2469 = vpack.c.bf16 %v2464, %v2463
        %v2470 = vpack.c.bf16 %v2466, %v2465
        %s2471 = scalar_lea.vmem %s3, 320
        %v2472 = vld [vmem:[%s2471] sm:$0xf]
        %v2473 = vld [vmem:[%s2471 + $0x4] sm:$0xf]
        %v2474 = vld [vmem:[%s2471 + $0x8] sm:$0xf]
        %v2475 = vld [vmem:[%s2471 + $0xc] sm:$0xf]
        %v2476 = vld [vmem:[%s2471 + $0x10] sm:$0xf]
        %v2477 = vld [vmem:[%s2471 + $0x14] sm:$0xf]
        %v2478 = vld [vmem:[%s2471 + $0x18] sm:$0xf]
        %v2479 = vld [vmem:[%s2471 + $0x1c] sm:$0xf]
        %v2480 = vld [vmem:[%s2471 + $0x20] sm:$0xf]
        %v2481 = vld [vmem:[%s2471 + $0x24] sm:$0xf]
        %v2482 = vld [vmem:[%s2471 + $0x28] sm:$0xf]
        %v2483 = vld [vmem:[%s2471 + $0x2c] sm:$0xf]
        %v2484 = vld [vmem:[%s2471 + $0x30] sm:$0xf]
        %v2485 = vld [vmem:[%s2471 + $0x34] sm:$0xf]
        %v2486 = vld [vmem:[%s2471 + $0x38] sm:$0xf]
        %v2487 = vld [vmem:[%s2471 + $0x3c] sm:$0xf]
        %v2504 = vunpack.c.l.b16 %v2472
        %v2505 = vunpack.c.l.b16 %v2473
        %v2506 = vunpack.c.l.b16 %v2474
        %v2507 = vunpack.c.l.b16 %v2475
        %v2508 = vunpack.c.l.b16 %v2476
        %v2509 = vunpack.c.l.b16 %v2477
        %v2510 = vunpack.c.l.b16 %v2478
        %v2511 = vunpack.c.l.b16 %v2479
        %v2512 = vunpack.c.l.b16 %v2480
        %v2513 = vunpack.c.l.b16 %v2481
        %v2514 = vunpack.c.l.b16 %v2482
        %v2515 = vunpack.c.l.b16 %v2483
        %v2516 = vunpack.c.l.b16 %v2484
        %v2517 = vunpack.c.l.b16 %v2485
        %v2518 = vunpack.c.l.b16 %v2486
        %v2519 = vunpack.c.l.b16 %v2487
        %v2520 = vpack.c.b16 %v2505, %v2504
        %v2521 = vpack.c.b16 %v2507, %v2506
        %v2522 = vpack.c.b16 %v2509, %v2508
        %v2523 = vpack.c.b16 %v2511, %v2510
        %v2524 = vpack.c.b16 %v2513, %v2512
        %v2525 = vpack.c.b16 %v2515, %v2514
        %v2526 = vpack.c.b16 %v2517, %v2516
        %v2527 = vpack.c.b16 %v2519, %v2518
        %2536 = vmatprep.subr.bf16.mxu0 0
        %2537 = vmatpush1.bf16.msra.mxu0 %v2520
        %2538 = vmatprep.subr.bf16.mxu0 0
        %2539 = vmatpush1.bf16.msra.mxu0 %v2521
        %2540 = vmatprep.subr.bf16.mxu0 0
        %2541 = vmatpush1.bf16.msra.mxu0 %v2522
        %2542 = vmatprep.subr.bf16.mxu0 0
        %2543 = vmatpush1.bf16.msra.mxu0 %v2523
        %2544 = vmatprep.subr.bf16.mxu0 0
        %2545 = vmatpush1.bf16.msra.mxu0 %v2524
        %2546 = vmatprep.subr.bf16.mxu0 0
        %2547 = vmatpush1.bf16.msra.mxu0 %v2525
        %2548 = vmatprep.subr.bf16.mxu0 0
        %2549 = vmatpush1.bf16.msra.mxu0 %v2526
        %2550 = vmatprep.subr.bf16.mxu0 0
        %2551 = vmatpush1.bf16.msra.mxu0 %v2527
        %2552 = vmatprep.subr.bf16.mxu0 0
        %2553 = vmatpush1.bf16.msra.mxu0 0
        %2554 = vmatprep.subr.bf16.mxu0 0
        %2555 = vmatpush1.bf16.msra.mxu0 0
        %2556 = vmatprep.subr.bf16.mxu0 0
        %2557 = vmatpush1.bf16.msra.mxu0 0
        %2558 = vmatprep.subr.bf16.mxu0 0
        %2559 = vmatpush1.bf16.msra.mxu0 0
        %2560 = vmatprep.subr.bf16.mxu0 0
        %2561 = vmatpush1.bf16.msra.mxu0 0
        %2562 = vmatprep.subr.bf16.mxu0 0
        %2563 = vmatpush1.bf16.msra.mxu0 0
        %2564 = vmatprep.subr.bf16.mxu0 0
        %2565 = vmatpush1.bf16.msra.mxu0 0
        %2566 = vmatprep.subr.bf16.mxu0 0
        %2567 = vmatpush1.bf16.msra.mxu0 0
        %2568 = vmatprep.mubr.bf16.mxu0 0
        %2569 = vmatmul.mubr.bf16.gmra.mrb[0].mxu0 %v2467
        %v2570 = vpop.f32.mrb[0].mxu0
        %v2571 = vadd.f32 0.0, %v2570
        %v2572 = vpop.f32.mrb[0].mxu0
        %v2573 = vpop.f32.mrb[0].mxu0
        %v2574 = vadd.f32 0.0, %v2573
        %v2575 = vpop.f32.mrb[0].mxu0
        %2576 = vmatprep.mubr.bf16.mxu0 0
        %2577 = vmatmul.mubr.bf16.gmra.mrb[0].mxu0 %v2468
        %v2578 = vpop.f32.mrb[0].mxu0
        %v2579 = vadd.f32 0.0, %v2578
        %v2580 = vpop.f32.mrb[0].mxu0
        %v2581 = vpop.f32.mrb[0].mxu0
        %v2582 = vadd.f32 0.0, %v2581
        %v2583 = vpop.f32.mrb[0].mxu0
        %2584 = vmatprep.mubr.bf16.mxu0 0
        %2585 = vmatmul.mubr.bf16.gmra.mrb[0].mxu0 %v2469
        %v2586 = vpop.f32.mrb[0].mxu0
        %v2587 = vadd.f32 0.0, %v2586
        %v2588 = vpop.f32.mrb[0].mxu0
        %v2589 = vpop.f32.mrb[0].mxu0
        %v2590 = vadd.f32 0.0, %v2589
        %v2591 = vpop.f32.mrb[0].mxu0
        %2592 = vmatprep.mubr.bf16.mxu0 0
        %2593 = vmatmul.mubr.bf16.gmra.mrb[0].mxu0 %v2470
        %v2594 = vpop.f32.mrb[0].mxu0
        %v2595 = vadd.f32 0.0, %v2594
        %v2596 = vpop.f32.mrb[0].mxu0
        %v2597 = vpop.f32.mrb[0].mxu0
        %v2598 = vadd.f32 0.0, %v2597
        %v2599 = vpop.f32.mrb[0].mxu0
        %2600 = vdwg.mxu0
        %v2601 = vadd.f32 %v2451, %v2571
        %v2602 = vadd.f32 %v2452, %v2574
        %v2603 = vadd.f32 %v2453, %v2579
        %v2604 = vadd.f32 %v2454, %v2582
        %v2605 = vadd.f32 %v2455, %v2587
        %v2606 = vadd.f32 %v2456, %v2590
        %v2607 = vadd.f32 %v2457, %v2595
        %v2608 = vadd.f32 %v2458, %v2598
        %s2609 = scalar_lea.vmem [#allocation2], 32
        %v2610 = vld [vmem:[%s2609] sm:$0xff]
        %v2611 = vld [vmem:[%s2609 + $0x10] sm:$0xff]
        %v2612 = vld [vmem:[%s2609 + $0x20] sm:$0xff]
        %v2613 = vld [vmem:[%s2609 + $0x30] sm:$0xff]
        %v2614 = vld [vmem:[%s2609 + $0x40] sm:$0xff]
        %v2615 = vld [vmem:[%s2609 + $0x50] sm:$0xff]
        %v2616 = vld [vmem:[%s2609 + $0x60] sm:$0xff]
        %v2617 = vld [vmem:[%s2609 + $0x70] sm:$0xff]
        %v2618 = vpack.c.bf16 %v2611, %v2610
        %v2619 = vpack.c.bf16 %v2613, %v2612
        %v2620 = vpack.c.bf16 %v2615, %v2614
        %v2621 = vpack.c.bf16 %v2617, %v2616
        %s2622 = scalar_lea.vmem %s3, 384
        %v2623 = vld [vmem:[%s2622] sm:$0xf]
        %v2624 = vld [vmem:[%s2622 + $0x4] sm:$0xf]
        %v2625 = vld [vmem:[%s2622 + $0x8] sm:$0xf]
        %v2626 = vld [vmem:[%s2622 + $0xc] sm:$0xf]
        %v2627 = vld [vmem:[%s2622 + $0x10] sm:$0xf]
        %v2628 = vld [vmem:[%s2622 + $0x14] sm:$0xf]
        %v2629 = vld [vmem:[%s2622 + $0x18] sm:$0xf]
        %v2630 = vld [vmem:[%s2622 + $0x1c] sm:$0xf]
        %v2631 = vld [vmem:[%s2622 + $0x20] sm:$0xf]
        %v2632 = vld [vmem:[%s2622 + $0x24] sm:$0xf]
        %v2633 = vld [vmem:[%s2622 + $0x28] sm:$0xf]
        %v2634 = vld [vmem:[%s2622 + $0x2c] sm:$0xf]
        %v2635 = vld [vmem:[%s2622 + $0x30] sm:$0xf]
        %v2636 = vld [vmem:[%s2622 + $0x34] sm:$0xf]
        %v2637 = vld [vmem:[%s2622 + $0x38] sm:$0xf]
        %v2638 = vld [vmem:[%s2622 + $0x3c] sm:$0xf]
        %v2655 = vunpack.c.l.b16 %v2623
        %v2656 = vunpack.c.l.b16 %v2624
        %v2657 = vunpack.c.l.b16 %v2625
        %v2658 = vunpack.c.l.b16 %v2626
        %v2659 = vunpack.c.l.b16 %v2627
        %v2660 = vunpack.c.l.b16 %v2628
        %v2661 = vunpack.c.l.b16 %v2629
        %v2662 = vunpack.c.l.b16 %v2630
        %v2663 = vunpack.c.l.b16 %v2631
        %v2664 = vunpack.c.l.b16 %v2632
        %v2665 = vunpack.c.l.b16 %v2633
        %v2666 = vunpack.c.l.b16 %v2634
        %v2667 = vunpack.c.l.b16 %v2635
        %v2668 = vunpack.c.l.b16 %v2636
        %v2669 = vunpack.c.l.b16 %v2637
        %v2670 = vunpack.c.l.b16 %v2638
        %v2671 = vpack.c.b16 %v2656, %v2655
        %v2672 = vpack.c.b16 %v2658, %v2657
        %v2673 = vpack.c.b16 %v2660, %v2659
        %v2674 = vpack.c.b16 %v2662, %v2661
        %v2675 = vpack.c.b16 %v2664, %v2663
        %v2676 = vpack.c.b16 %v2666, %v2665
        %v2677 = vpack.c.b16 %v2668, %v2667
        %v2678 = vpack.c.b16 %v2670, %v2669
        %2687 = vmatprep.subr.bf16.mxu0 0
        %2688 = vmatpush1.bf16.msra.mxu0 %v2671
        %2689 = vmatprep.subr.bf16.mxu0 0
        %2690 = vmatpush1.bf16.msra.mxu0 %v2672
        %2691 = vmatprep.subr.bf16.mxu0 0
        %2692 = vmatpush1.bf16.msra.mxu0 %v2673
        %2693 = vmatprep.subr.bf16.mxu0 0
        %2694 = vmatpush1.bf16.msra.mxu0 %v2674
        %2695 = vmatprep.subr.bf16.mxu0 0
        %2696 = vmatpush1.bf16.msra.mxu0 %v2675
        %2697 = vmatprep.subr.bf16.mxu0 0
        %2698 = vmatpush1.bf16.msra.mxu0 %v2676
        %2699 = vmatprep.subr.bf16.mxu0 0
        %2700 = vmatpush1.bf16.msra.mxu0 %v2677
        %2701 = vmatprep.subr.bf16.mxu0 0
        %2702 = vmatpush1.bf16.msra.mxu0 %v2678
        %2703 = vmatprep.subr.bf16.mxu0 0
        %2704 = vmatpush1.bf16.msra.mxu0 0
        %2705 = vmatprep.subr.bf16.mxu0 0
        %2706 = vmatpush1.bf16.msra.mxu0 0
        %2707 = vmatprep.subr.bf16.mxu0 0
        %2708 = vmatpush1.bf16.msra.mxu0 0
        %2709 = vmatprep.subr.bf16.mxu0 0
        %2710 = vmatpush1.bf16.msra.mxu0 0
        %2711 = vmatprep.subr.bf16.mxu0 0
        %2712 = vmatpush1.bf16.msra.mxu0 0
        %2713 = vmatprep.subr.bf16.mxu0 0
        %2714 = vmatpush1.bf16.msra.mxu0 0
        %2715 = vmatprep.subr.bf16.mxu0 0
        %2716 = vmatpush1.bf16.msra.mxu0 0
        %2717 = vmatprep.subr.bf16.mxu0 0
        %2718 = vmatpush1.bf16.msra.mxu0 0
        %2719 = vmatprep.mubr.bf16.mxu0 0
        %2720 = vmatmul.mubr.bf16.gmra.mrb[0].mxu0 %v2618
        %v2721 = vpop.f32.mrb[0].mxu0
        %v2722 = vadd.f32 0.0, %v2721
        %v2723 = vpop.f32.mrb[0].mxu0
        %v2724 = vpop.f32.mrb[0].mxu0
        %v2725 = vadd.f32 0.0, %v2724
        %v2726 = vpop.f32.mrb[0].mxu0
        %2727 = vmatprep.mubr.bf16.mxu0 0
        %2728 = vmatmul.mubr.bf16.gmra.mrb[0].mxu0 %v2619
        %v2729 = vpop.f32.mrb[0].mxu0
        %v2730 = vadd.f32 0.0, %v2729
        %v2731 = vpop.f32.mrb[0].mxu0
        %v2732 = vpop.f32.mrb[0].mxu0
        %v2733 = vadd.f32 0.0, %v2732
        %v2734 = vpop.f32.mrb[0].mxu0
        %2735 = vmatprep.mubr.bf16.mxu0 0
        %2736 = vmatmul.mubr.bf16.gmra.mrb[0].mxu0 %v2620
        %v2737 = vpop.f32.mrb[0].mxu0
        %v2738 = vadd.f32 0.0, %v2737
        %v2739 = vpop.f32.mrb[0].mxu0
        %v2740 = vpop.f32.mrb[0].mxu0
        %v2741 = vadd.f32 0.0, %v2740
        %v2742 = vpop.f32.mrb[0].mxu0
        %2743 = vmatprep.mubr.bf16.mxu0 0
        %2744 = vmatmul.mubr.bf16.gmra.mrb[0].mxu0 %v2621
        %v2745 = vpop.f32.mrb[0].mxu0
        %v2746 = vadd.f32 0.0, %v2745
        %v2747 = vpop.f32.mrb[0].mxu0
        %v2748 = vpop.f32.mrb[0].mxu0
        %v2749 = vadd.f32 0.0, %v2748
        %v2750 = vpop.f32.mrb[0].mxu0
        %2751 = vdwg.mxu0
        %v2752 = vadd.f32 %v2601, %v2722
        %v2753 = vadd.f32 %v2602, %v2725
        %v2754 = vadd.f32 %v2603, %v2730
        %v2755 = vadd.f32 %v2604, %v2733
        %v2756 = vadd.f32 %v2605, %v2738
        %v2757 = vadd.f32 %v2606, %v2741
        %v2758 = vadd.f32 %v2607, %v2746
        %v2759 = vadd.f32 %v2608, %v2749
        %v2760 = vld [vmem:[%s2609 + $0x1] sm:$0xff]
        %v2761 = vld [vmem:[%s2609 + $0x11] sm:$0xff]
        %v2762 = vld [vmem:[%s2609 + $0x21] sm:$0xff]
        %v2763 = vld [vmem:[%s2609 + $0x31] sm:$0xff]
        %v2764 = vld [vmem:[%s2609 + $0x41] sm:$0xff]
        %v2765 = vld [vmem:[%s2609 + $0x51] sm:$0xff]
        %v2766 = vld [vmem:[%s2609 + $0x61] sm:$0xff]
        %v2767 = vld [vmem:[%s2609 + $0x71] sm:$0xff]
        %v2768 = vpack.c.bf16 %v2761, %v2760
        %v2769 = vpack.c.bf16 %v2763, %v2762
        %v2770 = vpack.c.bf16 %v2765, %v2764
        %v2771 = vpack.c.bf16 %v2767, %v2766
        %s2772 = scalar_lea.vmem %s3, 448
        %v2773 = vld [vmem:[%s2772] sm:$0xf]
        %v2774 = vld [vmem:[%s2772 + $0x4] sm:$0xf]
        %v2775 = vld [vmem:[%s2772 + $0x8] sm:$0xf]
        %v2776 = vld [vmem:[%s2772 + $0xc] sm:$0xf]
        %v2777 = vld [vmem:[%s2772 + $0x10] sm:$0xf]
        %v2778 = vld [vmem:[%s2772 + $0x14] sm:$0xf]
        %v2779 = vld [vmem:[%s2772 + $0x18] sm:$0xf]
        %v2780 = vld [vmem:[%s2772 + $0x1c] sm:$0xf]
        %v2781 = vld [vmem:[%s2772 + $0x20] sm:$0xf]
        %v2782 = vld [vmem:[%s2772 + $0x24] sm:$0xf]
        %v2783 = vld [vmem:[%s2772 + $0x28] sm:$0xf]
        %v2784 = vld [vmem:[%s2772 + $0x2c] sm:$0xf]
        %v2785 = vld [vmem:[%s2772 + $0x30] sm:$0xf]
        %v2786 = vld [vmem:[%s2772 + $0x34] sm:$0xf]
        %v2787 = vld [vmem:[%s2772 + $0x38] sm:$0xf]
        %v2788 = vld [vmem:[%s2772 + $0x3c] sm:$0xf]
        %v2805 = vunpack.c.l.b16 %v2773
        %v2806 = vunpack.c.l.b16 %v2774
        %v2807 = vunpack.c.l.b16 %v2775
        %v2808 = vunpack.c.l.b16 %v2776
        %v2809 = vunpack.c.l.b16 %v2777
        %v2810 = vunpack.c.l.b16 %v2778
        %v2811 = vunpack.c.l.b16 %v2779
        %v2812 = vunpack.c.l.b16 %v2780
        %v2813 = vunpack.c.l.b16 %v2781
        %v2814 = vunpack.c.l.b16 %v2782
        %v2815 = vunpack.c.l.b16 %v2783
        %v2816 = vunpack.c.l.b16 %v2784
        %v2817 = vunpack.c.l.b16 %v2785
        %v2818 = vunpack.c.l.b16 %v2786
        %v2819 = vunpack.c.l.b16 %v2787
        %v2820 = vunpack.c.l.b16 %v2788
        %v2821 = vpack.c.b16 %v2806, %v2805
        %v2822 = vpack.c.b16 %v2808, %v2807
        %v2823 = vpack.c.b16 %v2810, %v2809
        %v2824 = vpack.c.b16 %v2812, %v2811
        %v2825 = vpack.c.b16 %v2814, %v2813
        %v2826 = vpack.c.b16 %v2816, %v2815
        %v2827 = vpack.c.b16 %v2818, %v2817
        %v2828 = vpack.c.b16 %v2820, %v2819
        %2837 = vmatprep.subr.bf16.mxu0 0
        %2838 = vmatpush1.bf16.msra.mxu0 %v2821
        %2839 = vmatprep.subr.bf16.mxu0 0
        %2840 = vmatpush1.bf16.msra.mxu0 %v2822
        %2841 = vmatprep.subr.bf16.mxu0 0
        %2842 = vmatpush1.bf16.msra.mxu0 %v2823
        %2843 = vmatprep.subr.bf16.mxu0 0
        %2844 = vmatpush1.bf16.msra.mxu0 %v2824
        %2845 = vmatprep.subr.bf16.mxu0 0
        %2846 = vmatpush1.bf16.msra.mxu0 %v2825
        %2847 = vmatprep.subr.bf16.mxu0 0
        %2848 = vmatpush1.bf16.msra.mxu0 %v2826
        %2849 = vmatprep.subr.bf16.mxu0 0
        %2850 = vmatpush1.bf16.msra.mxu0 %v2827
        %2851 = vmatprep.subr.bf16.mxu0 0
        %2852 = vmatpush1.bf16.msra.mxu0 %v2828
        %2853 = vmatprep.subr.bf16.mxu0 0
        %2854 = vmatpush1.bf16.msra.mxu0 0
        %2855 = vmatprep.subr.bf16.mxu0 0
        %2856 = vmatpush1.bf16.msra.mxu0 0
        %2857 = vmatprep.subr.bf16.mxu0 0
        %2858 = vmatpush1.bf16.msra.mxu0 0
        %2859 = vmatprep.subr.bf16.mxu0 0
        %2860 = vmatpush1.bf16.msra.mxu0 0
        %2861 = vmatprep.subr.bf16.mxu0 0
        %2862 = vmatpush1.bf16.msra.mxu0 0
        %2863 = vmatprep.subr.bf16.mxu0 0
        %2864 = vmatpush1.bf16.msra.mxu0 0
        %2865 = vmatprep.subr.bf16.mxu0 0
        %2866 = vmatpush1.bf16.msra.mxu0 0
        %2867 = vmatprep.subr.bf16.mxu0 0
        %2868 = vmatpush1.bf16.msra.mxu0 0
        %2869 = vmatprep.mubr.bf16.mxu0 0
        %2870 = vmatmul.mubr.bf16.gmra.mrb[0].mxu0 %v2768
        %v2871 = vpop.f32.mrb[0].mxu0
        %v2872 = vadd.f32 0.0, %v2871
        %v2873 = vpop.f32.mrb[0].mxu0
        %v2874 = vpop.f32.mrb[0].mxu0
        %v2875 = vadd.f32 0.0, %v2874
        %v2876 = vpop.f32.mrb[0].mxu0
        %2877 = vmatprep.mubr.bf16.mxu0 0
        %2878 = vmatmul.mubr.bf16.gmra.mrb[0].mxu0 %v2769
        %v2879 = vpop.f32.mrb[0].mxu0
        %v2880 = vadd.f32 0.0, %v2879
        %v2881 = vpop.f32.mrb[0].mxu0
        %v2882 = vpop.f32.mrb[0].mxu0
        %v2883 = vadd.f32 0.0, %v2882
        %v2884 = vpop.f32.mrb[0].mxu0
        %2885 = vmatprep.mubr.bf16.mxu0 0
        %2886 = vmatmul.mubr.bf16.gmra.mrb[0].mxu0 %v2770
        %v2887 = vpop.f32.mrb[0].mxu0
        %v2888 = vadd.f32 0.0, %v2887
        %v2889 = vpop.f32.mrb[0].mxu0
        %v2890 = vpop.f32.mrb[0].mxu0
        %v2891 = vadd.f32 0.0, %v2890
        %v2892 = vpop.f32.mrb[0].mxu0
        %2893 = vmatprep.mubr.bf16.mxu0 0
        %2894 = vmatmul.mubr.bf16.gmra.mrb[0].mxu0 %v2771
        %v2895 = vpop.f32.mrb[0].mxu0
        %v2896 = vadd.f32 0.0, %v2895
        %v2897 = vpop.f32.mrb[0].mxu0
        %v2898 = vpop.f32.mrb[0].mxu0
        %v2899 = vadd.f32 0.0, %v2898
        %v2900 = vpop.f32.mrb[0].mxu0
        %2901 = vdwg.mxu0
        %v2902 = vadd.f32 %v2752, %v2872
        %v2903 = vadd.f32 %v2753, %v2875
        %v2904 = vadd.f32 %v2754, %v2880
        %v2905 = vadd.f32 %v2755, %v2883
        %v2906 = vadd.f32 %v2756, %v2888
        %v2907 = vadd.f32 %v2757, %v2891
        %v2908 = vadd.f32 %v2758, %v2896
        %v2909 = vadd.f32 %v2759, %v2899
        %v2910 = vld [vmem:[%s2609 + $0x2] sm:$0xff]
        %v2911 = vld [vmem:[%s2609 + $0x12] sm:$0xff]
        %v2912 = vld [vmem:[%s2609 + $0x22] sm:$0xff]
        %v2913 = vld [vmem:[%s2609 + $0x32] sm:$0xff]
        %v2914 = vld [vmem:[%s2609 + $0x42] sm:$0xff]
        %v2915 = vld [vmem:[%s2609 + $0x52] sm:$0xff]
        %v2916 = vld [vmem:[%s2609 + $0x62] sm:$0xff]
        %v2917 = vld [vmem:[%s2609 + $0x72] sm:$0xff]
        %v2918 = vpack.c.bf16 %v2911, %v2910
        %v2919 = vpack.c.bf16 %v2913, %v2912
        %v2920 = vpack.c.bf16 %v2915, %v2914
        %v2921 = vpack.c.bf16 %v2917, %v2916
        %s2922 = scalar_lea.vmem %s3, 512
        %v2923 = vld [vmem:[%s2922] sm:$0xf]
        %v2924 = vld [vmem:[%s2922 + $0x4] sm:$0xf]
        %v2925 = vld [vmem:[%s2922 + $0x8] sm:$0xf]
        %v2926 = vld [vmem:[%s2922 + $0xc] sm:$0xf]
        %v2927 = vld [vmem:[%s2922 + $0x10] sm:$0xf]
        %v2928 = vld [vmem:[%s2922 + $0x14] sm:$0xf]
        %v2929 = vld [vmem:[%s2922 + $0x18] sm:$0xf]
        %v2930 = vld [vmem:[%s2922 + $0x1c] sm:$0xf]
        %v2931 = vld [vmem:[%s2922 + $0x20] sm:$0xf]
        %v2932 = vld [vmem:[%s2922 + $0x24] sm:$0xf]
        %v2933 = vld [vmem:[%s2922 + $0x28] sm:$0xf]
        %v2934 = vld [vmem:[%s2922 + $0x2c] sm:$0xf]
        %v2935 = vld [vmem:[%s2922 + $0x30] sm:$0xf]
        %v2936 = vld [vmem:[%s2922 + $0x34] sm:$0xf]
        %v2937 = vld [vmem:[%s2922 + $0x38] sm:$0xf]
        %v2938 = vld [vmem:[%s2922 + $0x3c] sm:$0xf]
        %v2955 = vunpack.c.l.b16 %v2923
        %v2956 = vunpack.c.l.b16 %v2924
        %v2957 = vunpack.c.l.b16 %v2925
        %v2958 = vunpack.c.l.b16 %v2926
        %v2959 = vunpack.c.l.b16 %v2927
        %v2960 = vunpack.c.l.b16 %v2928
        %v2961 = vunpack.c.l.b16 %v2929
        %v2962 = vunpack.c.l.b16 %v2930
        %v2963 = vunpack.c.l.b16 %v2931
        %v2964 = vunpack.c.l.b16 %v2932
        %v2965 = vunpack.c.l.b16 %v2933
        %v2966 = vunpack.c.l.b16 %v2934
        %v2967 = vunpack.c.l.b16 %v2935
        %v2968 = vunpack.c.l.b16 %v2936
        %v2969 = vunpack.c.l.b16 %v2937
        %v2970 = vunpack.c.l.b16 %v2938
        %v2971 = vpack.c.b16 %v2956, %v2955
        %v2972 = vpack.c.b16 %v2958, %v2957
        %v2973 = vpack.c.b16 %v2960, %v2959
        %v2974 = vpack.c.b16 %v2962, %v2961
        %v2975 = vpack.c.b16 %v2964, %v2963
        %v2976 = vpack.c.b16 %v2966, %v2965
        %v2977 = vpack.c.b16 %v2968, %v2967
        %v2978 = vpack.c.b16 %v2970, %v2969
        %2987 = vmatprep.subr.bf16.mxu0 0
        %2988 = vmatpush1.bf16.msra.mxu0 %v2971
        %2989 = vmatprep.subr.bf16.mxu0 0
        %2990 = vmatpush1.bf16.msra.mxu0 %v2972
        %2991 = vmatprep.subr.bf16.mxu0 0
        %2992 = vmatpush1.bf16.msra.mxu0 %v2973
        %2993 = vmatprep.subr.bf16.mxu0 0
        %2994 = vmatpush1.bf16.msra.mxu0 %v2974
        %2995 = vmatprep.subr.bf16.mxu0 0
        %2996 = vmatpush1.bf16.msra.mxu0 %v2975
        %2997 = vmatprep.subr.bf16.mxu0 0
        %2998 = vmatpush1.bf16.msra.mxu0 %v2976
        %2999 = vmatprep.subr.bf16.mxu0 0
        %3000 = vmatpush1.bf16.msra.mxu0 %v2977
        %3001 = vmatprep.subr.bf16.mxu0 0
        %3002 = vmatpush1.bf16.msra.mxu0 %v2978
        %3003 = vmatprep.subr.bf16.mxu0 0
        %3004 = vmatpush1.bf16.msra.mxu0 0
        %3005 = vmatprep.subr.bf16.mxu0 0
        %3006 = vmatpush1.bf16.msra.mxu0 0
        %3007 = vmatprep.subr.bf16.mxu0 0
        %3008 = vmatpush1.bf16.msra.mxu0 0
        %3009 = vmatprep.subr.bf16.mxu0 0
        %3010 = vmatpush1.bf16.msra.mxu0 0
        %3011 = vmatprep.subr.bf16.mxu0 0
        %3012 = vmatpush1.bf16.msra.mxu0 0
        %3013 = vmatprep.subr.bf16.mxu0 0
        %3014 = vmatpush1.bf16.msra.mxu0 0
        %3015 = vmatprep.subr.bf16.mxu0 0
        %3016 = vmatpush1.bf16.msra.mxu0 0
        %3017 = vmatprep.subr.bf16.mxu0 0
        %3018 = vmatpush1.bf16.msra.mxu0 0
        %3019 = vmatprep.mubr.bf16.mxu0 0
        %3020 = vmatmul.mubr.bf16.gmra.mrb[0].mxu0 %v2918
        %v3021 = vpop.f32.mrb[0].mxu0
        %v3022 = vadd.f32 0.0, %v3021
        %v3023 = vpop.f32.mrb[0].mxu0
        %v3024 = vpop.f32.mrb[0].mxu0
        %v3025 = vadd.f32 0.0, %v3024
        %v3026 = vpop.f32.mrb[0].mxu0
        %3027 = vmatprep.mubr.bf16.mxu0 0
        %3028 = vmatmul.mubr.bf16.gmra.mrb[0].mxu0 %v2919
        %v3029 = vpop.f32.mrb[0].mxu0
        %v3030 = vadd.f32 0.0, %v3029
        %v3031 = vpop.f32.mrb[0].mxu0
        %v3032 = vpop.f32.mrb[0].mxu0
        %v3033 = vadd.f32 0.0, %v3032
        %v3034 = vpop.f32.mrb[0].mxu0
        %3035 = vmatprep.mubr.bf16.mxu0 0
        %3036 = vmatmul.mubr.bf16.gmra.mrb[0].mxu0 %v2920
        %v3037 = vpop.f32.mrb[0].mxu0
        %v3038 = vadd.f32 0.0, %v3037
        %v3039 = vpop.f32.mrb[0].mxu0
        %v3040 = vpop.f32.mrb[0].mxu0
        %v3041 = vadd.f32 0.0, %v3040
        %v3042 = vpop.f32.mrb[0].mxu0
        %3043 = vmatprep.mubr.bf16.mxu0 0
        %3044 = vmatmul.mubr.bf16.gmra.mrb[0].mxu0 %v2921
        %v3045 = vpop.f32.mrb[0].mxu0
        %v3046 = vadd.f32 0.0, %v3045
        %v3047 = vpop.f32.mrb[0].mxu0
        %v3048 = vpop.f32.mrb[0].mxu0
        %v3049 = vadd.f32 0.0, %v3048
        %v3050 = vpop.f32.mrb[0].mxu0
        %3051 = vdwg.mxu0
        %v3052 = vadd.f32 %v2902, %v3022
        %v3053 = vadd.f32 %v2903, %v3025
        %v3054 = vadd.f32 %v2904, %v3030
        %v3055 = vadd.f32 %v2905, %v3033
        %v3056 = vadd.f32 %v2906, %v3038
        %v3057 = vadd.f32 %v2907, %v3041
        %v3058 = vadd.f32 %v2908, %v3046
        %v3059 = vadd.f32 %v2909, %v3049
        %v3060 = vld [vmem:[%s4] sm:$0x1]
        %v3062 = vlaneseq
        %v3063 = vshrl.u32 %v3062, 7
        %v3064 = vsub.s32 0, %v3063
        %v3065 = vrot.slane %v3060, %v3064
        %v3067 = vadd.f32 %v3052, %v3065
        %v3068 = vadd.f32 %v3053, %v3065
        %v3069 = vadd.f32 %v3054, %v3065
        %v3070 = vadd.f32 %v3055, %v3065
        %v3071 = vadd.f32 %v3056, %v3065
        %v3072 = vadd.f32 %v3057, %v3065
        %v3073 = vadd.f32 %v3058, %v3065
        %v3074 = vadd.f32 %v3059, %v3065
        %v3075 = vld [vmem:[%s857] sm:$0xf]
        %v3076 = vld [vmem:[%s857 + $0x8] sm:$0xf]
        %v3077 = vld [vmem:[%s857 + $0x10] sm:$0xf]
        %v3078 = vld [vmem:[%s857 + $0x18] sm:$0xf]
        %v3079 = vld [vmem:[%s857 + $0x20] sm:$0xf]
        %v3080 = vld [vmem:[%s857 + $0x28] sm:$0xf]
        %v3081 = vld [vmem:[%s857 + $0x30] sm:$0xf]
        %v3082 = vld [vmem:[%s857 + $0x38] sm:$0xf]
        %v3083 = vld [vmem:[%s5] sm:$0x3]
        %v3084 = vld [vmem:[%s6] sm:$0x1]
        %v3086 = vlaneseq
        %v3087 = vshrl.u32 %v3086, 7
        %v3088 = vsub.s32 0, %v3087
        %v3089 = vrot.slane %v3084, %v3088
        %v3099 = vunpack.c.l.b16 %v3075
        %v3100 = vunpack.c.l.b16 %v3076
        %v3101 = vunpack.c.l.b16 %v3077
        %v3102 = vunpack.c.l.b16 %v3078
        %v3103 = vunpack.c.l.b16 %v3079
        %v3104 = vunpack.c.l.b16 %v3080
        %v3105 = vunpack.c.l.b16 %v3081
        %v3106 = vunpack.c.l.b16 %v3082
        %v3107 = vpack.c.b16 %v3100, %v3099
        %v3108 = vpack.c.b16 %v3102, %v3101
        %v3109 = vpack.c.b16 %v3104, %v3103
        %v3110 = vpack.c.b16 %v3106, %v3105
        %v3112 = vsel %vm323, %v3107, 0
        %v3115 = vsel %vm323, %v3108, 0
        %v3118 = vsel %vm323, %v3109, 0
        %v3121 = vsel %vm323, %v3110, 0
        %v3124 = vsel %vm336, %v3083, 0
        %3126 = vmatprep.subr.bf16.mxu0 0
        %3127 = vmatpush1.bf16.msra.mxu0 %v3124
        %3128 = vmatprep.subr.bf16.mxu0 0
        %3129 = vmatpush1.bf16.msra.mxu0 0
        %3130 = vmatprep.subr.bf16.mxu0 0
        %3131 = vmatpush1.bf16.msra.mxu0 0
        %3132 = vmatprep.subr.bf16.mxu0 0
        %3133 = vmatpush1.bf16.msra.mxu0 0
        %3134 = vmatprep.subr.bf16.mxu0 0
        %3135 = vmatpush1.bf16.msra.mxu0 0
        %3136 = vmatprep.subr.bf16.mxu0 0
        %3137 = vmatpush1.bf16.msra.mxu0 0
        %3138 = vmatprep.subr.bf16.mxu0 0
        %3139 = vmatpush1.bf16.msra.mxu0 0
        %3140 = vmatprep.subr.bf16.mxu0 0
        %3141 = vmatpush1.bf16.msra.mxu0 0
        %3142 = vmatprep.subr.bf16.mxu0 0
        %3143 = vmatpush1.bf16.msra.mxu0 0
        %3144 = vmatprep.subr.bf16.mxu0 0
        %3145 = vmatpush1.bf16.msra.mxu0 0
        %3146 = vmatprep.subr.bf16.mxu0 0
        %3147 = vmatpush1.bf16.msra.mxu0 0
        %3148 = vmatprep.subr.bf16.mxu0 0
        %3149 = vmatpush1.bf16.msra.mxu0 0
        %3150 = vmatprep.subr.bf16.mxu0 0
        %3151 = vmatpush1.bf16.msra.mxu0 0
        %3152 = vmatprep.subr.bf16.mxu0 0
        %3153 = vmatpush1.bf16.msra.mxu0 0
        %3154 = vmatprep.subr.bf16.mxu0 0
        %3155 = vmatpush1.bf16.msra.mxu0 0
        %3156 = vmatprep.subr.bf16.mxu0 0
        %3157 = vmatpush1.bf16.msra.mxu0 0
        %3158 = vmatprep.mubr.bf16.mxu0 0
        %3159 = vmatmul.mubr.bf16.gmra.mrb[0].mxu0 %v3112
        %v3160 = vpop.f32.mrb[0].mxu0
        %v3161 = vadd.f32 %v3089, %v3160
        %v3162 = vpop.f32.mrb[0].mxu0
        %v3163 = vpop.f32.mrb[0].mxu0
        %v3164 = vadd.f32 %v3089, %v3163
        %v3165 = vpop.f32.mrb[0].mxu0
        %3166 = vmatprep.mubr.bf16.mxu0 0
        %3167 = vmatmul.mubr.bf16.gmra.mrb[0].mxu0 %v3115
        %v3168 = vpop.f32.mrb[0].mxu0
        %v3169 = vadd.f32 %v3089, %v3168
        %v3170 = vpop.f32.mrb[0].mxu0
        %v3171 = vpop.f32.mrb[0].mxu0
        %v3172 = vadd.f32 %v3089, %v3171
        %v3173 = vpop.f32.mrb[0].mxu0
        %3174 = vmatprep.mubr.bf16.mxu0 0
        %3175 = vmatmul.mubr.bf16.gmra.mrb[0].mxu0 %v3118
        %v3176 = vpop.f32.mrb[0].mxu0
        %v3177 = vadd.f32 %v3089, %v3176
        %v3178 = vpop.f32.mrb[0].mxu0
        %v3179 = vpop.f32.mrb[0].mxu0
        %v3180 = vadd.f32 %v3089, %v3179
        %v3181 = vpop.f32.mrb[0].mxu0
        %3182 = vmatprep.mubr.bf16.mxu0 0
        %3183 = vmatmul.mubr.bf16.gmra.mrb[0].mxu0 %v3121
        %v3184 = vpop.f32.mrb[0].mxu0
        %v3185 = vadd.f32 %v3089, %v3184
        %v3186 = vpop.f32.mrb[0].mxu0
        %v3187 = vpop.f32.mrb[0].mxu0
        %v3188 = vadd.f32 %v3089, %v3187
        %v3189 = vpop.f32.mrb[0].mxu0
        %3190 = vdwg.mxu0
        %v3191 = vadd.f32 %v3067, %v3161
        %v3192 = vadd.f32 %v3068, %v3164
        %v3193 = vadd.f32 %v3069, %v3169
        %v3194 = vadd.f32 %v3070, %v3172
        %v3195 = vadd.f32 %v3071, %v3177
        %v3196 = vadd.f32 %v3072, %v3180
        %v3197 = vadd.f32 %v3073, %v3185
        %v3198 = vadd.f32 %v3074, %v3188
        %v3199 = vmax.f32 %v3191, 0.0
        %v3200 = vmax.f32 %v3192, 0.0
        %v3201 = vmax.f32 %v3193, 0.0
        %v3202 = vmax.f32 %v3194, 0.0
        %v3203 = vmax.f32 %v3195, 0.0
        %v3204 = vmax.f32 %v3196, 0.0
        %v3205 = vmax.f32 %v3197, 0.0
        %v3206 = vmax.f32 %v3198, 0.0
        %3207 = vst [vmem:[%s274] sm:$0xff] %v3199
        %3208 = vst [vmem:[%s274 + $0x8] sm:$0xff] %v3200
        %3209 = vst [vmem:[%s274 + $0x10] sm:$0xff] %v3201
        %3210 = vst [vmem:[%s274 + $0x18] sm:$0xff] %v3202
        %3211 = vst [vmem:[%s274 + $0x20] sm:$0xff] %v3203
        %3212 = vst [vmem:[%s274 + $0x28] sm:$0xff] %v3204
        %3213 = vst [vmem:[%s274 + $0x30] sm:$0xff] %v3205
        %3214 = vst [vmem:[%s274 + $0x38] sm:$0xff] %v3206
        %s3215 = sand.u32 %s181, 1
        %s3216 = scalar_lea.sflag [#allocation4], %s3215
        %s3217 = sand.u32 %s181, 1
        %s3218 = smul.addr %s3217, 64
        %s3219 = scalar_lea.vmem [#allocation3], %s3218
        // Predicated region
        $region49: #{tpu_custom_call.1} parent=47 // pred_check
          %p3220 = pneg %p191
        $region50: #{tpu_custom_call.1} parent=47 // pred_check_branch
          %3222 = sbr.rel (%p3220) target = $region52
        $region51: #{tpu_custom_call.1} parent=47 // pred_region
          %s3224 = ssub.s32 1024, 1024
          %3225 = vsyncadd %s3216, %s3224
          %s3226 = smul.addr %s21, 8
          %s3227 = smul.addr %s3226, 128
          %s3228 = scalar_lea.hbm %s7, %s3227
          %s3229 = sshll.u32 %s3219, 4
          %s3230 = int_to_ptr.vmem [resolvable:$true] %s3229
          %3235 = dma.vmem_to_hbm [thread:$0]  %s3230, 1024, %s3228, %s3216, 128, 128, 8
        $region52: #{tpu_custom_call.1} parent=47 // pred_fallthru
          _
      $region48: #{tpu_custom_call.1} parent=5 // pred_fallthru
        _
      %p3236 = scmp.le.s32.totalorder 2, %s16
      // Predicated region
      $region53: #{tpu_custom_call.1} parent=5 // pred_check
        %p3237 = pneg %p3236
      $region54: #{tpu_custom_call.1} parent=5 // pred_check_branch
        %3239 = sbr.rel (%p3237) target = $region56
      $region55: #{tpu_custom_call.1} parent=5 // pred_region
        %s3240 = ssub.s32 %s16, 2
        // Predicated region
        $region57: #{tpu_custom_call.1} parent=55 // pred_check
          %p3241 = pneg %p197
        $region58: #{tpu_custom_call.1} parent=55 // pred_check_branch
          %3243 = sbr.rel (%p3241) target = $region60
        $region59: #{tpu_custom_call.1} parent=55 // pred_region
          %s3244 = sand.u32 %s182, 1
          %s3245 = scalar_lea.sflag [#allocation4], %s3244
          %s3246 = sand.u32 %s182, 1
          %s3247 = smul.addr %s3246, 64
          %s3248 = scalar_lea.vmem [#allocation3], %s3247
          %3249 = dma.done %s3245, 1024
        $region60: #{tpu_custom_call.1} parent=55 // pred_fallthru
          _
      $region56: #{tpu_custom_call.1} parent=5 // pred_fallthru
        _
    $region6: #{tpu_custom_call.1} parent=1 // loop_footer
      %s20 = sadd.s32 1, %s16
    $region7: #{tpu_custom_call.1} parent=1 // loop_footer_branch
      %15 = sbr.rel target = $region3
    $region8: #{tpu_custom_call.1} parent=1 // loop_exit
      _
    %3250 = vsyncpa [#allocation4], 1
    %s3251 = scalar_lea.sflag [#allocation4], 1
    %3252 = vsyncpa %s3251, 1

</llo_original>
